<compile_context>
chip_gen: v5e
topology: v5e:2x2
jax: 0.10.0
libtpu: 0.0.40
codegen_flags: <defaults>
</compile_context>

<pallas_src>
import jax
import jax.numpy as jnp
from jax.experimental import pallas as pl
from jax.experimental.pallas import tpu as pltpu

NEG_INF = -1e30
_VMEM_LIMIT = 48 * 1024 * 1024   # safe on v5e/v6e (128 MiB) and v7x (64 MiB)


def _round_up(x, m):
    return ((x + m - 1) // m) * m


def _tile_m(m, cap=512):
    """Row-tile size: biggest multiple of 8 up to `cap`."""
    if m >= cap:
        return cap
    return max(8, _round_up(m, 8))


def _pad_rows(x, mp):
    if x.shape[0] == mp:
        return x
    return jnp.pad(x, ((0, mp - x.shape[0]), (0, 0)))


def _cparams(sem):
    return pltpu.CompilerParams(dimension_semantics=sem,
                                vmem_limit_bytes=_VMEM_LIMIT)


# --------------------------------------------------------------------------
# Tiled linear (used for the LSTM input projections; fwd+bwd weights packed)
# --------------------------------------------------------------------------

def _linear_kernel(x_ref, w_ref, b_ref, o_ref):
    o_ref[...] = (jnp.dot(x_ref[...], w_ref[...],
                          preferred_element_type=jnp.float32) + b_ref[...])


def linear_pallas(x, w, b):
    """x: [M, K] (bf16), w: [K, N] (bf16), b: [N] f32 -> [M, N] f32."""
    M, K = x.shape
    N = w.shape[1]
    tm = _tile_m(M)
    Mp = _round_up(M, tm)
    xp = _pad_rows(x, Mp)
    # TODO(synk): no K-axis tiling; K <= 8*hidden fits VMEM comfortably here.
    out = pl.pallas_call(
        _linear_kernel,
        out_shape=jax.ShapeDtypeStruct((Mp, N), jnp.float32),
        grid=(Mp // tm,),
        in_specs=[
            pl.BlockSpec((tm, K), lambda i: (i, 0)),
            pl.BlockSpec((K, N), lambda i: (0, 0)),
            pl.BlockSpec((1, N), lambda i: (0, 0)),
        ],
        out_specs=pl.BlockSpec((tm, N), lambda i: (i, 0)),
        compiler_params=_cparams(("parallel",)),
    )(xp, w, b.reshape(1, N).astype(jnp.float32))
    return out[:M]


# --------------------------------------------------------------------------
# Fused embed_fc (no bias) + 2 Highway layers, M-tiled
# --------------------------------------------------------------------------

def _embed_highway_kernel(x_ref, w0_ref,
                          wt1_ref, bt1_ref, wg1_ref, bg1_ref,
                          wt2_ref, bt2_ref, wg2_ref, bg2_ref, o_ref):
    h = jnp.dot(x_ref[...], w0_ref[...], preferred_element_type=jnp.float32)
    for wt_ref, bt_ref, wg_ref, bg_ref in (
            (wt1_ref, bt1_ref, wg1_ref, bg1_ref),
            (wt2_ref, bt2_ref, wg2_ref, bg2_ref)):
        xb = h.astype(jnp.bfloat16)
        hh = jnp.maximum(
            jnp.dot(xb, wt_ref[...], preferred_element_type=jnp.float32)
            + bt_ref[...], 0.0)
        tt = jax.nn.sigmoid(
            jnp.dot(xb, wg_ref[...], preferred_element_type=jnp.float32)
            + bg_ref[...])
        h = hh * tt + h * (1.0 - tt)
    o_ref[...] = h.astype(o_ref.dtype)


def embed_highway_pallas(x, w0, highway_params):
    """x: [M, E] -> [M, H] bf16 (embed_fc + 2 highway layers fused)."""
    M, E = x.shape
    H = w0.shape[1]
    tm = _tile_m(M)
    Mp = _round_up(M, tm)
    xb = _pad_rows(x.astype(jnp.bfloat16), Mp)
    (wt1, bt1, wg1, bg1), (wt2, bt2, wg2, bg2) = highway_params
    w_args = (w0.astype(jnp.bfloat16),
              wt1.astype(jnp.bfloat16), bt1.reshape(1, H),
              wg1.astype(jnp.bfloat16), bg1.reshape(1, H),
              wt2.astype(jnp.bfloat16), bt2.reshape(1, H),
              wg2.astype(jnp.bfloat16), bg2.reshape(1, H))
    in_specs = [pl.BlockSpec((tm, E), lambda i: (i, 0)),
                pl.BlockSpec((E, H), lambda i: (0, 0))]
    for _ in range(2):
        in_specs += [pl.BlockSpec((H, H), lambda i: (0, 0)),
                     pl.BlockSpec((1, H), lambda i: (0, 0)),
                     pl.BlockSpec((H, H), lambda i: (0, 0)),
                     pl.BlockSpec((1, H), lambda i: (0, 0))]
    out = pl.pallas_call(
        _embed_highway_kernel,
        out_shape=jax.ShapeDtypeStruct((Mp, H), jnp.bfloat16),
        grid=(Mp // tm,),
        in_specs=in_specs,
        out_specs=pl.BlockSpec((tm, H), lambda i: (i, 0)),
        compiler_params=_cparams(("parallel",)),
    )(xb, *w_args)
    return out[:M]


# --------------------------------------------------------------------------
# LSTM recurrence kernel: both directions as a size-2 parallel grid axis,
# W_hh resident in VMEM, time loop inside the kernel.
# --------------------------------------------------------------------------

def _lstm_dir_kernel(xp_ref, whh_ref, o_ref):
    T, B, H4 = xp_ref.shape
    H = H4 // 4
    reverse = pl.program_id(0) == 1   # grid axis 0: 0 = forward, 1 = backward

    def step(t, carry):
        h, c = carry
        tt = jnp.where(reverse, T - 1 - t, t)
        gates = xp_ref[tt] + jnp.dot(h, whh_ref[...],
                                     preferred_element_type=jnp.float32)
        i_g = jax.nn.sigmoid(gates[:, 0:H])
        f_g = jax.nn.sigmoid(gates[:, H:2 * H])
        g_g = jnp.tanh(gates[:, 2 * H:3 * H])
        o_g = jax.nn.sigmoid(gates[:, 3 * H:4 * H])
        c = f_g * c + i_g * g_g
        h = o_g * jnp.tanh(c)
        o_ref[tt] = h
        return (h, c)

    h0 = jnp.zeros((B, H), jnp.float32)
    c0 = jnp.zeros((B, H), jnp.float32)
    jax.lax.fori_loop(0, T, step, (h0, c0))


def lstm_recurrence_pallas(xp_stacked, whh_stacked):
    """xp_stacked: [2, T, B, 4H] f32 (gates pre-activation = x@W_ih + b_ih + b_hh),
       whh_stacked: [2, H, 4H] f32  ->  [2, T, B, H] f32 hidden states."""
    _, T, B, H4 = xp_stacked.shape
    H = H4 // 4
    # TODO(synk): for very long sequences, stream per-timestep xp slabs from HBM
    # with pltpu.make_async_copy double-buffering instead of a whole-T VMEM block.
    return pl.pallas_call(
        _lstm_dir_kernel,
        out_shape=jax.ShapeDtypeStruct((2, T, B, H), jnp.float32),
        grid=(2,),
        in_specs=[
            pl.BlockSpec((None, T, B, H4), lambda d: (d, 0, 0, 0)),
            pl.BlockSpec((None, H, H4), lambda d: (d, 0, 0)),
        ],
        out_specs=pl.BlockSpec((None, T, B, H), lambda d: (d, 0, 0, 0)),
        compiler_params=_cparams(("parallel",)),
    )(xp_stacked, whh_stacked)


def _bilstm_layer(x, layer_params):
    """One bidirectional LSTM layer (PyTorch nn.LSTM semantics, batch_first)."""
    B, T, In = x.shape
    wih_f, whh_f, bih_f, bhh_f = layer_params["fwd"]
    wih_b, whh_b, bih_b, bhh_b = layer_params["bwd"]
    H = whh_f.shape[0]

    # Input projections for all timesteps / both directions in one tiled matmul.
    w_pack = jnp.concatenate([wih_f, wih_b], axis=1).astype(jnp.bfloat16)  # [In, 8H]
    b_pack = jnp.concatenate([bih_f + bhh_f, bih_b + bhh_b])               # [8H]
    xp = linear_pallas(x.reshape(B * T, In).astype(jnp.bfloat16), w_pack, b_pack)
    xp = xp.reshape(B, T, 2, 4 * H)
    xp = jnp.transpose(xp, (2, 1, 0, 3))                                   # [2,T,B,4H]

    whh = jnp.stack([whh_f, whh_b], axis=0)                                # [2,H,4H]
    ys = lstm_recurrence_pallas(xp, whh)                                   # [2,T,B,H]
    out = jnp.concatenate([ys[0], ys[1]], axis=-1)                         # [T,B,2H]
    return jnp.transpose(out, (1, 0, 2))                                   # [B,T,2H]


def bilstm(x, layers):
    out = x
    for layer in layers:
        out = _bilstm_layer(out, layer)
        # inter-layer dropout is identity (eval mode)
    return out


# --------------------------------------------------------------------------
# Attention flow (one batch element per grid step)
# --------------------------------------------------------------------------

def _attn_flow_kernel(c_ref, q_ref, mc_ref, mq_ref,
                      wc_ref, wq_ref, wcq_ref, b_ref, g_ref):
    D = c_ref.shape[-1]
    cf = c_ref[0].astype(jnp.float32)     # [Lc, D]
    qb = q_ref[0]                         # [Lq, D] bf16
    mc = mc_ref[0]                        # [Lc, 1]
    mq = mq_ref[0]                        # [1, Lq]

    # --- similarity: S = (c*W_cq + W_q_row) @ q^T + (c . W_c) + b ---
    #  * S_q folded into the S_cq matmul (W_q_row broadcasts over rows),
    #  * S_c computed on the VPU (mul + lane reduce) — no rank-1 MXU matmuls.
    s_c = jnp.sum(cf * wc_ref[...], axis=-1, keepdims=True)               # [Lc, 1]
    cw = (cf * wcq_ref[...] + wq_ref[...]).astype(jnp.bfloat16)           # [Lc, D]
    s = jax.lax.dot_general(cw, qb, (((1,), (1,)), ((), ())),
                            preferred_element_type=jnp.float32)           # [Lc, Lq]
    s = s + s_c + b_ref[...]

    # --- masked softmax over question axis (dim=2) ---
    s1 = mq * s + (1.0 - mq) * NEG_INF
    s1 = s1 - jnp.max(s1, axis=1, keepdims=True)
    e1 = jnp.exp(s1)
    s1 = e1 * pl.reciprocal(jnp.sum(e1, axis=1, keepdims=True), approx=True)

    # --- masked softmax over context axis (dim=1) ---
    s2 = mc * s + (1.0 - mc) * NEG_INF
    s2 = s2 - jnp.max(s2, axis=0, keepdims=True)
    e2 = jnp.exp(s2)
    s2 = e2 * pl.reciprocal(jnp.sum(e2, axis=0, keepdims=True), approx=True)

    s1b = s1.astype(jnp.bfloat16)
    a = jnp.dot(s1b, qb, preferred_element_type=jnp.float32)              # [Lc, D]
    # Reassociated q2c attention: B = S1 @ (S2^T @ C)  (no [Lc, Lc] intermediate)
    qc = jax.lax.dot_general(s2.astype(jnp.bfloat16), c_ref[0],
                             (((0,), (0,)), ((), ())),
                             preferred_element_type=jnp.float32)          # [Lq, D]
    bvec = jnp.dot(s1b, qc.astype(jnp.bfloat16),
                   preferred_element_type=jnp.float32)                    # [Lc, D]

    g_ref[0, :, 0:D] = cf.astype(g_ref.dtype)
    g_ref[0, :, D:2 * D] = a.astype(g_ref.dtype)
    g_ref[0, :, 2 * D:3 * D] = (cf * a).astype(g_ref.dtype)
    g_ref[0, :, 3 * D:4 * D] = (cf * bvec).astype(g_ref.dtype)


def attn_flow_pallas(c, q, mask_c, mask_q, wc_row, wq_row, wcq_row, b11):
    """c [B,Lc,D], q [B,Lq,D], masks float [B,Lc]/[B,Lq] -> G [B,Lc,4D] bf16."""
    B, Lc, D = c.shape
    Lq = q.shape[1]
    mc = mask_c.reshape(B, Lc, 1).astype(jnp.float32)
    mq = mask_q.reshape(B, 1, Lq).astype(jnp.float32)
    return pl.pallas_call(
        _attn_flow_kernel,
        out_shape=jax.ShapeDtypeStruct((B, Lc, 4 * D), jnp.bfloat16),
        grid=(B,),
        in_specs=[
            pl.BlockSpec((1, Lc, D), lambda i: (i, 0, 0)),
            pl.BlockSpec((1, Lq, D), lambda i: (i, 0, 0)),
            pl.BlockSpec((1, Lc, 1), lambda i: (i, 0, 0)),
            pl.BlockSpec((1, 1, Lq), lambda i: (i, 0, 0)),
            pl.BlockSpec((1, D), lambda i: (0, 0)),
            pl.BlockSpec((1, D), lambda i: (0, 0)),
            pl.BlockSpec((1, D), lambda i: (0, 0)),
            pl.BlockSpec((1, 1), lambda i: (0, 0)),
        ],
        out_specs=pl.BlockSpec((1, Lc, 4 * D), lambda i: (i, 0, 0)),
        compiler_params=_cparams(("parallel",)),
    )(c.astype(jnp.bfloat16), q.astype(jnp.bfloat16), mc, mq,
      wc_row, wq_row, wcq_row, b11)


# --------------------------------------------------------------------------
# Fused output projections (attn_fc1/mod_fc1/attn_fc2/mod_fc2) — VPU reductions
# --------------------------------------------------------------------------

def _out_proj_kernel(g_ref, m_ref, mn_ref,
                     wa1_ref, wm1_ref, wa2_ref, wm2_ref, b_ref, o_ref):
    g = g_ref[...].astype(jnp.float32)
    m = m_ref[...].astype(jnp.float32)
    mn = mn_ref[...].astype(jnp.float32)
    l1 = (jnp.sum(g * wa1_ref[...], axis=-1, keepdims=True)
          + jnp.sum(m * wm1_ref[...], axis=-1, keepdims=True))
    l2 = (jnp.sum(g * wa2_ref[...], axis=-1, keepdims=True)
          + jnp.sum(mn * wm2_ref[...], axis=-1, keepdims=True))
    o_ref[...] = jnp.concatenate([l1, l2], axis=-1) + b_ref[...]


def out_proj_pallas(G2, M2, Mn2, wa1, wm1, wa2, wm2, b2):
    """G2 [M,8H], M2/Mn2 [M,2H] -> [M, 2] (logits_1, logits_2)."""
    M = G2.shape[0]
    K1 = G2.shape[1]
    K2 = M2.shape[1]
    tm = _tile_m(M)
    Mp = _round_up(M, tm)
    out = pl.pallas_call(
        _out_proj_kernel,
        out_shape=jax.ShapeDtypeStruct((Mp, 2), jnp.float32),
        grid=(Mp // tm,),
        in_specs=[
            pl.BlockSpec((tm, K1), lambda i: (i, 0)),
            pl.BlockSpec((tm, K2), lambda i: (i, 0)),
            pl.BlockSpec((tm, K2), lambda i: (i, 0)),
            pl.BlockSpec((1, K1), lambda i: (0, 0)),
            pl.BlockSpec((1, K2), lambda i: (0, 0)),
            pl.BlockSpec((1, K1), lambda i: (0, 0)),
            pl.BlockSpec((1, K2), lambda i: (0, 0)),
            pl.BlockSpec((1, 2), lambda i: (0, 0)),
        ],
        out_specs=pl.BlockSpec((tm, 2), lambda i: (i, 0)),
        compiler_params=_cparams(("parallel",)),
    )(_pad_rows(G2, Mp), _pad_rows(M2, Mp), _pad_rows(Mn2, Mp),
      wa1, wm1, wa2, wm2, b2)
    return out[:M]


# --------------------------------------------------------------------------
# Parameter initialization (deterministic, in-script)
# --------------------------------------------------------------------------

def _uniform(key, shape, scale):
    return jax.random.uniform(key, shape, jnp.float32, -scale, scale)


def init_linear(key, fan_in, fan_out, bias=True):
    k1, k2 = jax.random.split(key)
    s = 1.0 / float(fan_in) ** 0.5
    w = _uniform(k1, (fan_in, fan_out), s)
    b = _uniform(k2, (fan_out,), s) if bias else None
    return w, b


def init_lstm(key, input_size, hidden, num_layers):
    layers = []
    s = 1.0 / float(hidden) ** 0.5
    for l in range(num_layers):
        in_sz = input_size if l == 0 else 2 * hidden
        layer = {}
        for d in ("fwd", "bwd"):
            key, k1, k2, k3, k4 = jax.random.split(key, 5)
            layer[d] = (
                _uniform(k1, (in_sz, 4 * hidden), s),   # W_ih^T
                _uniform(k2, (hidden, 4 * hidden), s),  # W_hh^T
                _uniform(k3, (4 * hidden,), s),         # b_ih
                _uniform(k4, (4 * hidden,), s),         # b_hh
            )
        layers.append(layer)
    return layers


def init_bidaf_params(key, vocab_size, embed_dim, hidden_dim, num_layers, pad_idx):
    keys = jax.random.split(key, 16)
    H = hidden_dim
    emb = jax.random.normal(keys[0], (vocab_size, embed_dim), jnp.float32) * 0.1
    emb = emb.at[pad_idx].set(0.0)

    embed_fc_w, _ = init_linear(keys[1], embed_dim, H, bias=False)

    highway = []
    for i in range(2):
        wt, bt = init_linear(keys[2 + 2 * i], H, H)
        wg, bg = init_linear(keys[3 + 2 * i], H, H)
        highway.append((wt, bt, wg, bg))

    enc = init_lstm(keys[6], H, H, num_layers)

    # AttnFlow over 2H features; weights stored as row vectors [1, D]
    D = 2 * H
    s = (6.0 / D) ** 0.5
    attn = {
        "wc": _uniform(keys[7], (1, D), s),
        "wq": _uniform(keys[8], (1, D), s),
        "wcq": _uniform(keys[9], (1, D), s),
        "b": jnp.zeros((1, 1), jnp.float32),
    }

    mod = init_lstm(keys[10], 8 * H, H, 2)
    enc_M = init_lstm(keys[11], 2 * H, H, 1)

    attn_fc1 = init_linear(keys[12], 8 * H, 1)
    mod_fc1 = init_linear(keys[13], 2 * H, 1)
    attn_fc2 = init_linear(keys[14], 8 * H, 1)
    mod_fc2 = init_linear(keys[15], 2 * H, 1)

    return {
        "embedding": emb,
        "embed_fc_w": embed_fc_w,
        "highway": highway,
        "enc": enc,
        "attn": attn,
        "mod": mod,
        "enc_M": enc_M,
        "attn_fc1": attn_fc1,
        "mod_fc1": mod_fc1,
        "attn_fc2": attn_fc2,
        "mod_fc2": mod_fc2,
    }


# --------------------------------------------------------------------------
# Forward pass
# --------------------------------------------------------------------------

def _masked_softmax_jax(x, m):
    xm = m * x + (1.0 - m) * NEG_INF
    return jax.nn.softmax(xm, axis=-1)


def _cross_entropy(logits, targets, ignore_index):
    logp = jax.nn.log_softmax(logits, axis=-1)
    valid = (targets != ignore_index).astype(jnp.float32)
    tgt = jnp.clip(targets, 0, logits.shape[1] - 1)
    nll = -jnp.take_along_axis(logp, tgt[:, None], axis=1)[:, 0]
    cnt = jnp.maximum(jnp.sum(valid), 1.0)
    return jnp.sum(nll * valid) / cnt


def bidaf_forward(params, idx_c, idx_q, y1s, y2s):
    B, Lc = idx_c.shape
    Lq = idx_q.shape[1]
    H = params["enc"][0]["fwd"][1].shape[0]   # hidden_dim

    mask_c = (idx_c != 0).astype(jnp.float32)
    mask_q = (idx_q != 0).astype(jnp.float32)

    # embedding lookup — plain JAX gather
    # TODO(synk): table gather has no clean rectangular-BlockSpec Pallas form here.
    embed_c = params["embedding"][idx_c]                 # [B, Lc, E]
    embed_q = params["embedding"][idx_q]                 # [B, Lq, E]
    E = embed_c.shape[-1]

    # fused embed_fc + 2 highway layers; c and q rows concatenated into one call
    x_all = jnp.concatenate([embed_c.reshape(B * Lc, E),
                             embed_q.reshape(B * Lq, E)], axis=0)
    h_all = embed_highway_pallas(x_all, params["embed_fc_w"], params["highway"])
    x_c = h_all[:B * Lc].reshape(B, Lc, H)
    x_q = h_all[B * Lc:].reshape(B, Lq, H)

    # contextual encoder (bi-LSTM); dropout = identity
    enc_c = bilstm(x_c, params["enc"])   # [B, Lc, 2H]
    enc_q = bilstm(x_q, params["enc"])   # [B, Lq, 2H]

    # attention flow — fused kernel (similarity + 2 masked softmaxes + bmms)
    a = params["attn"]
    G = attn_flow_pallas(enc_c, enc_q, mask_c, mask_q,
                         a["wc"], a["wq"], a["wcq"], a["b"])   # [B, Lc, 8H] bf16

    # modeling layers
    M = bilstm(G, params["mod"])            # [B, Lc, 2H]
    M_new = bilstm(M, params["enc_M"])      # [B, Lc, 2H]

    # fused output projections -> both logit vectors in one kernel
    wa1 = params["attn_fc1"][0].reshape(1, 8 * H)
    wm1 = params["mod_fc1"][0].reshape(1, 2 * H)
    wa2 = params["attn_fc2"][0].reshape(1, 8 * H)
    wm2 = params["mod_fc2"][0].reshape(1, 2 * H)
    b2 = jnp.concatenate([params["attn_fc1"][1] + params["mod_fc1"][1],
                          params["attn_fc2"][1] + params["mod_fc2"][1]]).reshape(1, 2)
    logits = out_proj_pallas(
        G.reshape(B * Lc, 8 * H),
        M.reshape(B * Lc, 2 * H).astype(jnp.bfloat16),
        M_new.reshape(B * Lc, 2 * H).astype(jnp.bfloat16),
        wa1, wm1, wa2, wm2, b2).reshape(B, Lc, 2)
    logits_1 = logits[..., 0]
    logits_2 = logits[..., 1]

    # tiny [B, Lc] masked softmax + loss stay in plain JAX (launch would cost more)
    p1 = _masked_softmax_jax(logits_1, mask_c)
    p2 = _masked_softmax_jax(logits_2, mask_c)

    ignored_idx = Lc
    y1c = jnp.clip(y1s, 0, ignored_idx)
    y2c = jnp.clip(y2s, 0, ignored_idx)
    loss = (_cross_entropy(logits_1, y1c, ignored_idx) +
            _cross_entropy(logits_2, y2c, ignored_idx)) / 2.0
    return loss, p1, p2


# --------------------------------------------------------------------------

if __name__ == "__main__":
    key = jax.random.PRNGKey(0)
    vocab_size, embed_dim, hidden_dim, num_layers = 50, 16, 16, 1
    dropout, pad_idx = 0.1, 0
    B, Lc, Lq = 2, 12, 8

    pkey, dkey = jax.random.split(key)
    params = init_bidaf_params(pkey, vocab_size, embed_dim, hidden_dim,
                               num_layers, pad_idx)

    k1, k2, k3, k4 = jax.random.split(dkey, 4)
    idx_c = jax.random.randint(k1, (B, Lc), 1, vocab_size)
    idx_q = jax.random.randint(k2, (B, Lq), 1, vocab_size)
    idx_c = idx_c.at[1, -3:].set(0)   # some padding in second example
    idx_q = idx_q.at[1, -2:].set(0)
    y1s = jax.random.randint(k3, (B,), 0, Lc)
    y2s = jax.random.randint(k4, (B,), 0, Lc)

    loss, p1, p2 = jax.jit(bidaf_forward)(params, idx_c, idx_q, y1s, y2s)
    jax.block_until_ready((loss, p1, p2))

    assert p1.shape == (B, Lc) and p2.shape == (B, Lc)
    assert bool(jnp.isfinite(loss))
    print("KERNEL_OK")
</pallas_src>

<mosaic_0001>
module attributes {stable_mosaic.version = 11 : i64} {
  func.func @_embed_highway_kernel(%arg0: i32, %arg1: memref<40x16xbf16, #tpu.memory_space<vmem>>, %arg2: memref<16x16xbf16, #tpu.memory_space<vmem>>, %arg3: memref<16x16xbf16, #tpu.memory_space<vmem>>, %arg4: memref<1x16xf32, #tpu.memory_space<vmem>>, %arg5: memref<16x16xbf16, #tpu.memory_space<vmem>>, %arg6: memref<1x16xf32, #tpu.memory_space<vmem>>, %arg7: memref<16x16xbf16, #tpu.memory_space<vmem>>, %arg8: memref<1x16xf32, #tpu.memory_space<vmem>>, %arg9: memref<16x16xbf16, #tpu.memory_space<vmem>>, %arg10: memref<1x16xf32, #tpu.memory_space<vmem>>, %arg11: memref<40x16xbf16, #tpu.memory_space<vmem>>) attributes {dimension_semantics = [#tpu.dimension_semantics<parallel>], iteration_bounds = array<i64: 1>, scalar_prefetch = 0 : i64, scratch_operands = 0 : i64, tpu.core_type = #tpu.core_type<tc>, window_params = [{transform_indices = @transform_0, window_bounds = array<i64: 40, 16>}, {pipeline_mode = #tpu.pipeline_mode<synchronous>, transform_indices = @transform_1, window_bounds = array<i64: 16, 16>}, {pipeline_mode = #tpu.pipeline_mode<synchronous>, transform_indices = @transform_2, window_bounds = array<i64: 16, 16>}, {pipeline_mode = #tpu.pipeline_mode<synchronous>, transform_indices = @transform_3, window_bounds = array<i64: 1, 16>}, {pipeline_mode = #tpu.pipeline_mode<synchronous>, transform_indices = @transform_4, window_bounds = array<i64: 16, 16>}, {pipeline_mode = #tpu.pipeline_mode<synchronous>, transform_indices = @transform_5, window_bounds = array<i64: 1, 16>}, {pipeline_mode = #tpu.pipeline_mode<synchronous>, transform_indices = @transform_6, window_bounds = array<i64: 16, 16>}, {pipeline_mode = #tpu.pipeline_mode<synchronous>, transform_indices = @transform_7, window_bounds = array<i64: 1, 16>}, {pipeline_mode = #tpu.pipeline_mode<synchronous>, transform_indices = @transform_8, window_bounds = array<i64: 16, 16>}, {pipeline_mode = #tpu.pipeline_mode<synchronous>, transform_indices = @transform_9, window_bounds = array<i64: 1, 16>}, {transform_indices = @transform_10, window_bounds = array<i64: 40, 16>}]} {
    %c0 = arith.constant 0 : index
    %c0_0 = arith.constant 0 : index
    %0 = vector.load %arg1[%c0, %c0_0] : memref<40x16xbf16, #tpu.memory_space<vmem>>, vector<40x16xbf16>
    %c0_1 = arith.constant 0 : index
    %c0_2 = arith.constant 0 : index
    %1 = vector.load %arg2[%c0_1, %c0_2] : memref<16x16xbf16, #tpu.memory_space<vmem>>, vector<16x16xbf16>
    %cst = arith.constant dense<0.000000e+00> : vector<40x16xf32>
    %2 = tpu.matmul %0, %1, %cst {dimension_numbers = #tpu.dot_dimension_numbers<[1], [0], [0], [1], [0, 0, 1, 1], [], []>} : vector<40x16xbf16>, vector<16x16xbf16>, vector<40x16xf32> -> vector<40x16xf32>
    %3 = arith.truncf %2 : vector<40x16xf32> to vector<40x16xbf16>
    %c0_3 = arith.constant 0 : index
    %c0_4 = arith.constant 0 : index
    %4 = vector.load %arg3[%c0_3, %c0_4] : memref<16x16xbf16, #tpu.memory_space<vmem>>, vector<16x16xbf16>
    %cst_5 = arith.constant dense<0.000000e+00> : vector<40x16xf32>
    %5 = tpu.matmul %3, %4, %cst_5 {dimension_numbers = #tpu.dot_dimension_numbers<[1], [0], [0], [1], [0, 0, 1, 1], [], []>} : vector<40x16xbf16>, vector<16x16xbf16>, vector<40x16xf32> -> vector<40x16xf32>
    %c0_6 = arith.constant 0 : index
    %c0_7 = arith.constant 0 : index
    %6 = vector.load %arg4[%c0_6, %c0_7] : memref<1x16xf32, #tpu.memory_space<vmem>>, vector<1x16xf32>
    %7 = vector.broadcast %6 : vector<1x16xf32> to vector<40x16xf32>
    %8 = arith.addf %5, %7 : vector<40x16xf32>
    %cst_8 = arith.constant 0.000000e+00 : f32
    %9 = vector.broadcast %cst_8 : f32 to vector<40x16xf32>
    %10 = arith.maximumf %8, %9 : vector<40x16xf32>
    %c0_9 = arith.constant 0 : index
    %c0_10 = arith.constant 0 : index
    %11 = vector.load %arg5[%c0_9, %c0_10] : memref<16x16xbf16, #tpu.memory_space<vmem>>, vector<16x16xbf16>
    %cst_11 = arith.constant dense<0.000000e+00> : vector<40x16xf32>
    %12 = tpu.matmul %3, %11, %cst_11 {dimension_numbers = #tpu.dot_dimension_numbers<[1], [0], [0], [1], [0, 0, 1, 1], [], []>} : vector<40x16xbf16>, vector<16x16xbf16>, vector<40x16xf32> -> vector<40x16xf32>
    %c0_12 = arith.constant 0 : index
    %c0_13 = arith.constant 0 : index
    %13 = vector.load %arg6[%c0_12, %c0_13] : memref<1x16xf32, #tpu.memory_space<vmem>>, vector<1x16xf32>
    %14 = vector.broadcast %13 : vector<1x16xf32> to vector<40x16xf32>
    %15 = arith.addf %12, %14 : vector<40x16xf32>
    %16 = arith.negf %15 : vector<40x16xf32>
    %17 = math.exp %16 : vector<40x16xf32>
    %cst_14 = arith.constant 1.000000e+00 : f32
    %18 = vector.broadcast %cst_14 : f32 to vector<40x16xf32>
    %19 = arith.addf %18, %17 : vector<40x16xf32>
    %20 = arith.divf %18, %19 : vector<40x16xf32>
    %21 = arith.mulf %10, %20 : vector<40x16xf32>
    %cst_15 = arith.constant 1.000000e+00 : f32
    %22 = vector.broadcast %cst_15 : f32 to vector<40x16xf32>
    %23 = arith.subf %22, %20 : vector<40x16xf32>
    %24 = arith.mulf %2, %23 : vector<40x16xf32>
    %25 = arith.addf %21, %24 : vector<40x16xf32>
    %26 = arith.truncf %25 : vector<40x16xf32> to vector<40x16xbf16>
    %c0_16 = arith.constant 0 : index
    %c0_17 = arith.constant 0 : index
    %27 = vector.load %arg7[%c0_16, %c0_17] : memref<16x16xbf16, #tpu.memory_space<vmem>>, vector<16x16xbf16>
    %cst_18 = arith.constant dense<0.000000e+00> : vector<40x16xf32>
    %28 = tpu.matmul %26, %27, %cst_18 {dimension_numbers = #tpu.dot_dimension_numbers<[1], [0], [0], [1], [0, 0, 1, 1], [], []>} : vector<40x16xbf16>, vector<16x16xbf16>, vector<40x16xf32> -> vector<40x16xf32>
    %c0_19 = arith.constant 0 : index
    %c0_20 = arith.constant 0 : index
    %29 = vector.load %arg8[%c0_19, %c0_20] : memref<1x16xf32, #tpu.memory_space<vmem>>, vector<1x16xf32>
    %30 = vector.broadcast %29 : vector<1x16xf32> to vector<40x16xf32>
    %31 = arith.addf %28, %30 : vector<40x16xf32>
    %cst_21 = arith.constant 0.000000e+00 : f32
    %32 = vector.broadcast %cst_21 : f32 to vector<40x16xf32>
    %33 = arith.maximumf %31, %32 : vector<40x16xf32>
    %c0_22 = arith.constant 0 : index
    %c0_23 = arith.constant 0 : index
    %34 = vector.load %arg9[%c0_22, %c0_23] : memref<16x16xbf16, #tpu.memory_space<vmem>>, vector<16x16xbf16>
    %cst_24 = arith.constant dense<0.000000e+00> : vector<40x16xf32>
    %35 = tpu.matmul %26, %34, %cst_24 {dimension_numbers = #tpu.dot_dimension_numbers<[1], [0], [0], [1], [0, 0, 1, 1], [], []>} : vector<40x16xbf16>, vector<16x16xbf16>, vector<40x16xf32> -> vector<40x16xf32>
    %c0_25 = arith.constant 0 : index
    %c0_26 = arith.constant 0 : index
    %36 = vector.load %arg10[%c0_25, %c0_26] : memref<1x16xf32, #tpu.memory_space<vmem>>, vector<1x16xf32>
    %37 = vector.broadcast %36 : vector<1x16xf32> to vector<40x16xf32>
    %38 = arith.addf %35, %37 : vector<40x16xf32>
    %39 = arith.negf %38 : vector<40x16xf32>
    %40 = math.exp %39 : vector<40x16xf32>
    %cst_27 = arith.constant 1.000000e+00 : f32
    %41 = vector.broadcast %cst_27 : f32 to vector<40x16xf32>
    %42 = arith.addf %41, %40 : vector<40x16xf32>
    %43 = arith.divf %41, %42 : vector<40x16xf32>
    %44 = arith.mulf %33, %43 : vector<40x16xf32>
    %cst_28 = arith.constant 1.000000e+00 : f32
    %45 = vector.broadcast %cst_28 : f32 to vector<40x16xf32>
    %46 = arith.subf %45, %43 : vector<40x16xf32>
    %47 = arith.mulf %25, %46 : vector<40x16xf32>
    %48 = arith.addf %44, %47 : vector<40x16xf32>
    %49 = arith.truncf %48 : vector<40x16xf32> to vector<40x16xbf16>
    %c0_29 = arith.constant 0 : index
    %c0_30 = arith.constant 0 : index
    %50 = vector.load %arg11[%c0_29, %c0_30] : memref<40x16xbf16, #tpu.memory_space<vmem>>, vector<40x16xbf16>
    tpu.vector_store %arg11[%c0_29, %c0_30], %49 {strides = array<i32>} : memref<40x16xbf16, #tpu.memory_space<vmem>>, vector<40x16xbf16>,
    return
  }
  func.func @transform_0(%arg0: i32) -> (i32, i32) {
    %c0_i32 = arith.constant 0 : i32
    %c0_i32_0 = arith.constant 0 : i32
    return %arg0, %c0_i32 : i32, i32
  }
  func.func @transform_1(%arg0: i32) -> (i32, i32) {
    %c0_i32 = arith.constant 0 : i32
    %c0_i32_0 = arith.constant 0 : i32
    %c0_i32_1 = arith.constant 0 : i32
    return %c0_i32, %c0_i32_0 : i32, i32
  }
  func.func @transform_2(%arg0: i32) -> (i32, i32) {
    %c0_i32 = arith.constant 0 : i32
    %c0_i32_0 = arith.constant 0 : i32
    %c0_i32_1 = arith.constant 0 : i32
    return %c0_i32, %c0_i32_0 : i32, i32
  }
  func.func @transform_3(%arg0: i32) -> (i32, i32) {
    %c0_i32 = arith.constant 0 : i32
    %c0_i32_0 = arith.constant 0 : i32
    %c0_i32_1 = arith.constant 0 : i32
    return %c0_i32, %c0_i32_0 : i32, i32
  }
  func.func @transform_4(%arg0: i32) -> (i32, i32) {
    %c0_i32 = arith.constant 0 : i32
    %c0_i32_0 = arith.constant 0 : i32
    %c0_i32_1 = arith.constant 0 : i32
    return %c0_i32, %c0_i32_0 : i32, i32
  }
  func.func @transform_5(%arg0: i32) -> (i32, i32) {
    %c0_i32 = arith.constant 0 : i32
    %c0_i32_0 = arith.constant 0 : i32
    %c0_i32_1 = arith.constant 0 : i32
    return %c0_i32, %c0_i32_0 : i32, i32
  }
  func.func @transform_6(%arg0: i32) -> (i32, i32) {
    %c0_i32 = arith.constant 0 : i32
    %c0_i32_0 = arith.constant 0 : i32
    %c0_i32_1 = arith.constant 0 : i32
    return %c0_i32, %c0_i32_0 : i32, i32
  }
  func.func @transform_7(%arg0: i32) -> (i32, i32) {
    %c0_i32 = arith.constant 0 : i32
    %c0_i32_0 = arith.constant 0 : i32
    %c0_i32_1 = arith.constant 0 : i32
    return %c0_i32, %c0_i32_0 : i32, i32
  }
  func.func @transform_8(%arg0: i32) -> (i32, i32) {
    %c0_i32 = arith.constant 0 : i32
    %c0_i32_0 = arith.constant 0 : i32
    %c0_i32_1 = arith.constant 0 : i32
    return %c0_i32, %c0_i32_0 : i32, i32
  }
  func.func @transform_9(%arg0: i32) -> (i32, i32) {
    %c0_i32 = arith.constant 0 : i32
    %c0_i32_0 = arith.constant 0 : i32
    %c0_i32_1 = arith.constant 0 : i32
    return %c0_i32, %c0_i32_0 : i32, i32
  }
  func.func @transform_10(%arg0: i32) -> (i32, i32) {
    %c0_i32 = arith.constant 0 : i32
    %c0_i32_0 = arith.constant 0 : i32
    return %arg0, %c0_i32 : i32, i32
  }
}

module attributes {stable_mosaic.version = 11 : i64} {
  func.func @_linear_kernel(%arg0: i32, %arg1: memref<24x16xbf16, #tpu.memory_space<vmem>>, %arg2: memref<16x128xbf16, #tpu.memory_space<vmem>>, %arg3: memref<1x128xf32, #tpu.memory_space<vmem>>, %arg4: memref<24x128xf32, #tpu.memory_space<vmem>>) attributes {dimension_semantics = [#tpu.dimension_semantics<parallel>], iteration_bounds = array<i64: 1>, scalar_prefetch = 0 : i64, scratch_operands = 0 : i64, tpu.core_type = #tpu.core_type<tc>, window_params = [{transform_indices = @transform_0, window_bounds = array<i64: 24, 16>}, {pipeline_mode = #tpu.pipeline_mode<synchronous>, transform_indices = @transform_1, window_bounds = array<i64: 16, 128>}, {pipeline_mode = #tpu.pipeline_mode<synchronous>, transform_indices = @transform_2, window_bounds = array<i64: 1, 128>}, {transform_indices = @transform_3, window_bounds = array<i64: 24, 128>}]} {
    %c0 = arith.constant 0 : index
    %c0_0 = arith.constant 0 : index
    %0 = vector.load %arg1[%c0, %c0_0] : memref<24x16xbf16, #tpu.memory_space<vmem>>, vector<24x16xbf16>
    %c0_1 = arith.constant 0 : index
    %c0_2 = arith.constant 0 : index
    %1 = vector.load %arg2[%c0_1, %c0_2] : memref<16x128xbf16, #tpu.memory_space<vmem>>, vector<16x128xbf16>
    %cst = arith.constant dense<0.000000e+00> : vector<24x128xf32>
    %2 = tpu.matmul %0, %1, %cst {dimension_numbers = #tpu.dot_dimension_numbers<[1], [0], [0], [1], [0, 0, 1, 1], [], []>} : vector<24x16xbf16>, vector<16x128xbf16>, vector<24x128xf32> -> vector<24x128xf32>
    %c0_3 = arith.constant 0 : index
    %c0_4 = arith.constant 0 : index
    %3 = vector.load %arg3[%c0_3, %c0_4] : memref<1x128xf32, #tpu.memory_space<vmem>>, vector<1x128xf32>
    %4 = vector.broadcast %3 : vector<1x128xf32> to vector<24x128xf32>
    %5 = arith.addf %2, %4 : vector<24x128xf32>
    %c0_5 = arith.constant 0 : index
    %c0_6 = arith.constant 0 : index
    %6 = vector.load %arg4[%c0_5, %c0_6] : memref<24x128xf32, #tpu.memory_space<vmem>>, vector<24x128xf32>
    tpu.vector_store %arg4[%c0_5, %c0_6], %5 {strides = array<i32>} : memref<24x128xf32, #tpu.memory_space<vmem>>, vector<24x128xf32>,
    return
  }
  func.func @transform_0(%arg0: i32) -> (i32, i32) {
    %c0_i32 = arith.constant 0 : i32
    %c0_i32_0 = arith.constant 0 : i32
    return %arg0, %c0_i32 : i32, i32
  }
  func.func @transform_1(%arg0: i32) -> (i32, i32) {
    %c0_i32 = arith.constant 0 : i32
    %c0_i32_0 = arith.constant 0 : i32
    %c0_i32_1 = arith.constant 0 : i32
    return %c0_i32, %c0_i32_0 : i32, i32
  }
  func.func @transform_2(%arg0: i32) -> (i32, i32) {
    %c0_i32 = arith.constant 0 : i32
    %c0_i32_0 = arith.constant 0 : i32
    %c0_i32_1 = arith.constant 0 : i32
    return %c0_i32, %c0_i32_0 : i32, i32
  }
  func.func @transform_3(%arg0: i32) -> (i32, i32) {
    %c0_i32 = arith.constant 0 : i32
    %c0_i32_0 = arith.constant 0 : i32
    return %arg0, %c0_i32 : i32, i32
  }
}

module attributes {stable_mosaic.version = 11 : i64} {
  func.func @_lstm_dir_kernel(%arg0: i32, %arg1: memref<1x12x2x64xf32, #tpu.memory_space<vmem>>, %arg2: memref<1x16x64xf32, #tpu.memory_space<vmem>>, %arg3: memref<1x12x2x16xf32, #tpu.memory_space<vmem>>) attributes {dimension_semantics = [#tpu.dimension_semantics<parallel>], iteration_bounds = array<i64: 2>, scalar_prefetch = 0 : i64, scratch_operands = 0 : i64, tpu.core_type = #tpu.core_type<tc>, window_params = [{transform_indices = @transform_0, window_bounds = array<i64: 1, 12, 2, 64>}, {transform_indices = @transform_1, window_bounds = array<i64: 1, 16, 64>}, {transform_indices = @transform_2, window_bounds = array<i64: 1, 12, 2, 16>}]} {
    %c1_i32 = arith.constant 1 : i32
    %0 = arith.cmpi eq, %arg0, %c1_i32 : i32
    %cst = arith.constant 0.000000e+00 : f32
    %1 = vector.broadcast %cst : f32 to vector<2x16xf32>
    %cst_0 = arith.constant 0.000000e+00 : f32
    %2 = vector.broadcast %cst_0 : f32 to vector<2x16xf32>
    %c0_i32 = arith.constant 0 : i32
    %c12_i32 = arith.constant 12 : i32
    %3 = arith.addi %c0_i32, %c12_i32 : i32
    %c1_i32_1 = arith.constant 1 : i32
    %4:2 = scf.for %arg4 = %c0_i32 to %3 step %c1_i32_1 iter_args(%arg5 = %1, %arg6 = %2) -> (vector<2x16xf32>, vector<2x16xf32>)  : i32 {
      %c11_i32 = arith.constant 11 : i32
      %5 = arith.subi %c11_i32, %arg4 : i32
      %6 = arith.select %0, %5, %arg4 : i32
      %c0 = arith.constant 0 : index
      %7 = arith.index_cast %6 : i32 to index
      %c0_3 = arith.constant 0 : index
      %c0_4 = arith.constant 0 : index
      %8 = vector.load %arg1[%c0, %7, %c0_3, %c0_4] : memref<1x12x2x64xf32, #tpu.memory_space<vmem>>, vector<1x1x2x64xf32>
      %9 = vector.shape_cast %8 : vector<1x1x2x64xf32> to vector<2x64xf32>
      %c0_5 = arith.constant 0 : index
      %c0_6 = arith.constant 0 : index
      %c0_7 = arith.constant 0 : index
      %10 = vector.load %arg2[%c0_5, %c0_6, %c0_7] : memref<1x16x64xf32, #tpu.memory_space<vmem>>, vector<1x16x64xf32>
      %11 = vector.shape_cast %10 : vector<1x16x64xf32> to vector<16x64xf32>
      %cst_8 = arith.constant dense<0.000000e+00> : vector<2x64xf32>
      %12 = tpu.matmul %arg5, %11, %cst_8 {dimension_numbers = #tpu.dot_dimension_numbers<[1], [0], [0], [1], [0, 0, 1, 1], [], []>} : vector<2x16xf32>, vector<16x64xf32>, vector<2x64xf32> -> vector<2x64xf32>
      %13 = arith.addf %9, %12 : vector<2x64xf32>
      %14 = vector.extract_strided_slice %13 {offsets = [0, 0], sizes = [2, 16], strides = [1, 1]} : vector<2x64xf32> to vector<2x16xf32>
      %15 = arith.negf %14 : vector<2x16xf32>
      %16 = math.exp %15 : vector<2x16xf32>
      %cst_9 = arith.constant 1.000000e+00 : f32
      %17 = vector.broadcast %cst_9 : f32 to vector<2x16xf32>
      %18 = arith.addf %17, %16 : vector<2x16xf32>
      %19 = arith.divf %17, %18 : vector<2x16xf32>
      %20 = vector.extract_strided_slice %13 {offsets = [0, 16], sizes = [2, 16], strides = [1, 1]} : vector<2x64xf32> to vector<2x16xf32>
      %21 = arith.negf %20 : vector<2x16xf32>
      %22 = math.exp %21 : vector<2x16xf32>
      %cst_10 = arith.constant 1.000000e+00 : f32
      %23 = vector.broadcast %cst_10 : f32 to vector<2x16xf32>
      %24 = arith.addf %23, %22 : vector<2x16xf32>
      %25 = arith.divf %23, %24 : vector<2x16xf32>
      %26 = vector.extract_strided_slice %13 {offsets = [0, 32], sizes = [2, 16], strides = [1, 1]} : vector<2x64xf32> to vector<2x16xf32>
      %27 = math.tanh %26 : vector<2x16xf32>
      %28 = vector.extract_strided_slice %13 {offsets = [0, 48], sizes = [2, 16], strides = [1, 1]} : vector<2x64xf32> to vector<2x16xf32>
      %29 = arith.negf %28 : vector<2x16xf32>
      %30 = math.exp %29 : vector<2x16xf32>
      %cst_11 = arith.constant 1.000000e+00 : f32
      %31 = vector.broadcast %cst_11 : f32 to vector<2x16xf32>
      %32 = arith.addf %31, %30 : vector<2x16xf32>
      %33 = arith.divf %31, %32 : vector<2x16xf32>
      %34 = arith.mulf %25, %arg6 : vector<2x16xf32>
      %35 = arith.mulf %19, %27 : vector<2x16xf32>
      %36 = arith.addf %34, %35 : vector<2x16xf32>
      %37 = math.tanh %36 : vector<2x16xf32>
      %38 = arith.mulf %33, %37 : vector<2x16xf32>
      %c0_12 = arith.constant 0 : index
      %39 = arith.index_cast %6 : i32 to index
      %c0_13 = arith.constant 0 : index
      %c0_14 = arith.constant 0 : index
      %40 = vector.load %arg3[%c0_12, %39, %c0_13, %c0_14] : memref<1x12x2x16xf32, #tpu.memory_space<vmem>>, vector<1x1x2x16xf32>
      %41 = vector.shape_cast %40 : vector<1x1x2x16xf32> to vector<2x16xf32>
      %42 = vector.shape_cast %38 : vector<2x16xf32> to vector<1x1x2x16xf32>
      tpu.vector_store %arg3[%c0_12, %39, %c0_13, %c0_14], %42 {strides = array<i32>} : memref<1x12x2x16xf32, #tpu.memory_space<vmem>>, vector<1x1x2x16xf32>,
      scf.yield %38, %36 : vector<2x16xf32>, vector<2x16xf32>
    }
    %c12_i32_2 = arith.constant 12 : i32
    return
  }
  func.func @transform_0(%arg0: i32) -> (i32, i32, i32, i32) {
    %c0_i32 = arith.constant 0 : i32
    %c0_i32_0 = arith.constant 0 : i32
    %c0_i32_1 = arith.constant 0 : i32
    %c0_i32_2 = arith.constant 0 : i32
    return %arg0, %c0_i32, %c0_i32_0, %c0_i32_1 : i32, i32, i32, i32
  }
  func.func @transform_1(%arg0: i32) -> (i32, i32, i32) {
    %c0_i32 = arith.constant 0 : i32
    %c0_i32_0 = arith.constant 0 : i32
    %c0_i32_1 = arith.constant 0 : i32
    return %arg0, %c0_i32, %c0_i32_0 : i32, i32, i32
  }
  func.func @transform_2(%arg0: i32) -> (i32, i32, i32, i32) {
    %c0_i32 = arith.constant 0 : i32
    %c0_i32_0 = arith.constant 0 : i32
    %c0_i32_1 = arith.constant 0 : i32
    %c0_i32_2 = arith.constant 0 : i32
    return %arg0, %c0_i32, %c0_i32_0, %c0_i32_1 : i32, i32, i32, i32
  }
}

module attributes {stable_mosaic.version = 11 : i64} {
  func.func @_linear_kernel(%arg0: i32, %arg1: memref<16x16xbf16, #tpu.memory_space<vmem>>, %arg2: memref<16x128xbf16, #tpu.memory_space<vmem>>, %arg3: memref<1x128xf32, #tpu.memory_space<vmem>>, %arg4: memref<16x128xf32, #tpu.memory_space<vmem>>) attributes {dimension_semantics = [#tpu.dimension_semantics<parallel>], iteration_bounds = array<i64: 1>, scalar_prefetch = 0 : i64, scratch_operands = 0 : i64, tpu.core_type = #tpu.core_type<tc>, window_params = [{transform_indices = @transform_0, window_bounds = array<i64: 16, 16>}, {pipeline_mode = #tpu.pipeline_mode<synchronous>, transform_indices = @transform_1, window_bounds = array<i64: 16, 128>}, {pipeline_mode = #tpu.pipeline_mode<synchronous>, transform_indices = @transform_2, window_bounds = array<i64: 1, 128>}, {transform_indices = @transform_3, window_bounds = array<i64: 16, 128>}]} {
    %c0 = arith.constant 0 : index
    %c0_0 = arith.constant 0 : index
    %0 = vector.load %arg1[%c0, %c0_0] : memref<16x16xbf16, #tpu.memory_space<vmem>>, vector<16x16xbf16>
    %c0_1 = arith.constant 0 : index
    %c0_2 = arith.constant 0 : index
    %1 = vector.load %arg2[%c0_1, %c0_2] : memref<16x128xbf16, #tpu.memory_space<vmem>>, vector<16x128xbf16>
    %cst = arith.constant dense<0.000000e+00> : vector<16x128xf32>
    %2 = tpu.matmul %0, %1, %cst {dimension_numbers = #tpu.dot_dimension_numbers<[1], [0], [0], [1], [0, 0, 1, 1], [], []>} : vector<16x16xbf16>, vector<16x128xbf16>, vector<16x128xf32> -> vector<16x128xf32>
    %c0_3 = arith.constant 0 : index
    %c0_4 = arith.constant 0 : index
    %3 = vector.load %arg3[%c0_3, %c0_4] : memref<1x128xf32, #tpu.memory_space<vmem>>, vector<1x128xf32>
    %4 = vector.broadcast %3 : vector<1x128xf32> to vector<16x128xf32>
    %5 = arith.addf %2, %4 : vector<16x128xf32>
    %c0_5 = arith.constant 0 : index
    %c0_6 = arith.constant 0 : index
    %6 = vector.load %arg4[%c0_5, %c0_6] : memref<16x128xf32, #tpu.memory_space<vmem>>, vector<16x128xf32>
    tpu.vector_store %arg4[%c0_5, %c0_6], %5 {strides = array<i32>} : memref<16x128xf32, #tpu.memory_space<vmem>>, vector<16x128xf32>,
    return
  }
  func.func @transform_0(%arg0: i32) -> (i32, i32) {
    %c0_i32 = arith.constant 0 : i32
    %c0_i32_0 = arith.constant 0 : i32
    return %arg0, %c0_i32 : i32, i32
  }
  func.func @transform_1(%arg0: i32) -> (i32, i32) {
    %c0_i32 = arith.constant 0 : i32
    %c0_i32_0 = arith.constant 0 : i32
    %c0_i32_1 = arith.constant 0 : i32
    return %c0_i32, %c0_i32_0 : i32, i32
  }
  func.func @transform_2(%arg0: i32) -> (i32, i32) {
    %c0_i32 = arith.constant 0 : i32
    %c0_i32_0 = arith.constant 0 : i32
    %c0_i32_1 = arith.constant 0 : i32
    return %c0_i32, %c0_i32_0 : i32, i32
  }
  func.func @transform_3(%arg0: i32) -> (i32, i32) {
    %c0_i32 = arith.constant 0 : i32
    %c0_i32_0 = arith.constant 0 : i32
    return %arg0, %c0_i32 : i32, i32
  }
}

module attributes {stable_mosaic.version = 11 : i64} {
  func.func @_lstm_dir_kernel(%arg0: i32, %arg1: memref<1x8x2x64xf32, #tpu.memory_space<vmem>>, %arg2: memref<1x16x64xf32, #tpu.memory_space<vmem>>, %arg3: memref<1x8x2x16xf32, #tpu.memory_space<vmem>>) attributes {dimension_semantics = [#tpu.dimension_semantics<parallel>], iteration_bounds = array<i64: 2>, scalar_prefetch = 0 : i64, scratch_operands = 0 : i64, tpu.core_type = #tpu.core_type<tc>, window_params = [{transform_indices = @transform_0, window_bounds = array<i64: 1, 8, 2, 64>}, {transform_indices = @transform_1, window_bounds = array<i64: 1, 16, 64>}, {transform_indices = @transform_2, window_bounds = array<i64: 1, 8, 2, 16>}]} {
    %c1_i32 = arith.constant 1 : i32
    %0 = arith.cmpi eq, %arg0, %c1_i32 : i32
    %cst = arith.constant 0.000000e+00 : f32
    %1 = vector.broadcast %cst : f32 to vector<2x16xf32>
    %cst_0 = arith.constant 0.000000e+00 : f32
    %2 = vector.broadcast %cst_0 : f32 to vector<2x16xf32>
    %c0_i32 = arith.constant 0 : i32
    %c8_i32 = arith.constant 8 : i32
    %3 = arith.addi %c0_i32, %c8_i32 : i32
    %c1_i32_1 = arith.constant 1 : i32
    %4:2 = scf.for %arg4 = %c0_i32 to %3 step %c1_i32_1 iter_args(%arg5 = %1, %arg6 = %2) -> (vector<2x16xf32>, vector<2x16xf32>)  : i32 {
      %c7_i32 = arith.constant 7 : i32
      %5 = arith.subi %c7_i32, %arg4 : i32
      %6 = arith.select %0, %5, %arg4 : i32
      %c0 = arith.constant 0 : index
      %7 = arith.index_cast %6 : i32 to index
      %c0_3 = arith.constant 0 : index
      %c0_4 = arith.constant 0 : index
      %8 = vector.load %arg1[%c0, %7, %c0_3, %c0_4] : memref<1x8x2x64xf32, #tpu.memory_space<vmem>>, vector<1x1x2x64xf32>
      %9 = vector.shape_cast %8 : vector<1x1x2x64xf32> to vector<2x64xf32>
      %c0_5 = arith.constant 0 : index
      %c0_6 = arith.constant 0 : index
      %c0_7 = arith.constant 0 : index
      %10 = vector.load %arg2[%c0_5, %c0_6, %c0_7] : memref<1x16x64xf32, #tpu.memory_space<vmem>>, vector<1x16x64xf32>
      %11 = vector.shape_cast %10 : vector<1x16x64xf32> to vector<16x64xf32>
      %cst_8 = arith.constant dense<0.000000e+00> : vector<2x64xf32>
      %12 = tpu.matmul %arg5, %11, %cst_8 {dimension_numbers = #tpu.dot_dimension_numbers<[1], [0], [0], [1], [0, 0, 1, 1], [], []>} : vector<2x16xf32>, vector<16x64xf32>, vector<2x64xf32> -> vector<2x64xf32>
      %13 = arith.addf %9, %12 : vector<2x64xf32>
      %14 = vector.extract_strided_slice %13 {offsets = [0, 0], sizes = [2, 16], strides = [1, 1]} : vector<2x64xf32> to vector<2x16xf32>
      %15 = arith.negf %14 : vector<2x16xf32>
      %16 = math.exp %15 : vector<2x16xf32>
      %cst_9 = arith.constant 1.000000e+00 : f32
      %17 = vector.broadcast %cst_9 : f32 to vector<2x16xf32>
      %18 = arith.addf %17, %16 : vector<2x16xf32>
      %19 = arith.divf %17, %18 : vector<2x16xf32>
      %20 = vector.extract_strided_slice %13 {offsets = [0, 16], sizes = [2, 16], strides = [1, 1]} : vector<2x64xf32> to vector<2x16xf32>
      %21 = arith.negf %20 : vector<2x16xf32>
      %22 = math.exp %21 : vector<2x16xf32>
      %cst_10 = arith.constant 1.000000e+00 : f32
      %23 = vector.broadcast %cst_10 : f32 to vector<2x16xf32>
      %24 = arith.addf %23, %22 : vector<2x16xf32>
      %25 = arith.divf %23, %24 : vector<2x16xf32>
      %26 = vector.extract_strided_slice %13 {offsets = [0, 32], sizes = [2, 16], strides = [1, 1]} : vector<2x64xf32> to vector<2x16xf32>
      %27 = math.tanh %26 : vector<2x16xf32>
      %28 = vector.extract_strided_slice %13 {offsets = [0, 48], sizes = [2, 16], strides = [1, 1]} : vector<2x64xf32> to vector<2x16xf32>
      %29 = arith.negf %28 : vector<2x16xf32>
      %30 = math.exp %29 : vector<2x16xf32>
      %cst_11 = arith.constant 1.000000e+00 : f32
      %31 = vector.broadcast %cst_11 : f32 to vector<2x16xf32>
      %32 = arith.addf %31, %30 : vector<2x16xf32>
      %33 = arith.divf %31, %32 : vector<2x16xf32>
      %34 = arith.mulf %25, %arg6 : vector<2x16xf32>
      %35 = arith.mulf %19, %27 : vector<2x16xf32>
      %36 = arith.addf %34, %35 : vector<2x16xf32>
      %37 = math.tanh %36 : vector<2x16xf32>
      %38 = arith.mulf %33, %37 : vector<2x16xf32>
      %c0_12 = arith.constant 0 : index
      %39 = arith.index_cast %6 : i32 to index
      %c0_13 = arith.constant 0 : index
      %c0_14 = arith.constant 0 : index
      %40 = vector.load %arg3[%c0_12, %39, %c0_13, %c0_14] : memref<1x8x2x16xf32, #tpu.memory_space<vmem>>, vector<1x1x2x16xf32>
      %41 = vector.shape_cast %40 : vector<1x1x2x16xf32> to vector<2x16xf32>
      %42 = vector.shape_cast %38 : vector<2x16xf32> to vector<1x1x2x16xf32>
      tpu.vector_store %arg3[%c0_12, %39, %c0_13, %c0_14], %42 {strides = array<i32>} : memref<1x8x2x16xf32, #tpu.memory_space<vmem>>, vector<1x1x2x16xf32>,
      scf.yield %38, %36 : vector<2x16xf32>, vector<2x16xf32>
    }
    %c8_i32_2 = arith.constant 8 : i32
    return
  }
  func.func @transform_0(%arg0: i32) -> (i32, i32, i32, i32) {
    %c0_i32 = arith.constant 0 : i32
    %c0_i32_0 = arith.constant 0 : i32
    %c0_i32_1 = arith.constant 0 : i32
    %c0_i32_2 = arith.constant 0 : i32
    return %arg0, %c0_i32, %c0_i32_0, %c0_i32_1 : i32, i32, i32, i32
  }
  func.func @transform_1(%arg0: i32) -> (i32, i32, i32) {
    %c0_i32 = arith.constant 0 : i32
    %c0_i32_0 = arith.constant 0 : i32
    %c0_i32_1 = arith.constant 0 : i32
    return %arg0, %c0_i32, %c0_i32_0 : i32, i32, i32
  }
  func.func @transform_2(%arg0: i32) -> (i32, i32, i32, i32) {
    %c0_i32 = arith.constant 0 : i32
    %c0_i32_0 = arith.constant 0 : i32
    %c0_i32_1 = arith.constant 0 : i32
    %c0_i32_2 = arith.constant 0 : i32
    return %arg0, %c0_i32, %c0_i32_0, %c0_i32_1 : i32, i32, i32, i32
  }
}

module attributes {stable_mosaic.version = 11 : i64} {
  func.func @_attn_flow_kernel(%arg0: i32, %arg1: memref<1x12x32xbf16, #tpu.memory_space<vmem>>, %arg2: memref<1x8x32xbf16, #tpu.memory_space<vmem>>, %arg3: memref<1x12x1xf32, #tpu.memory_space<vmem>>, %arg4: memref<1x1x8xf32, #tpu.memory_space<vmem>>, %arg5: memref<1x32xf32, #tpu.memory_space<vmem>>, %arg6: memref<1x32xf32, #tpu.memory_space<vmem>>, %arg7: memref<1x32xf32, #tpu.memory_space<vmem>>, %arg8: memref<1x1xf32, #tpu.memory_space<vmem>>, %arg9: memref<1x12x128xbf16, #tpu.memory_space<vmem>>) attributes {dimension_semantics = [#tpu.dimension_semantics<parallel>], iteration_bounds = array<i64: 2>, scalar_prefetch = 0 : i64, scratch_operands = 0 : i64, tpu.core_type = #tpu.core_type<tc>, window_params = [{transform_indices = @transform_0, window_bounds = array<i64: 1, 12, 32>}, {transform_indices = @transform_1, window_bounds = array<i64: 1, 8, 32>}, {transform_indices = @transform_2, window_bounds = array<i64: 1, 12, 1>}, {transform_indices = @transform_3, window_bounds = array<i64: 1, 1, 8>}, {pipeline_mode = #tpu.pipeline_mode<synchronous>, transform_indices = @transform_4, window_bounds = array<i64: 1, 32>}, {pipeline_mode = #tpu.pipeline_mode<synchronous>, transform_indices = @transform_5, window_bounds = array<i64: 1, 32>}, {pipeline_mode = #tpu.pipeline_mode<synchronous>, transform_indices = @transform_6, window_bounds = array<i64: 1, 32>}, {pipeline_mode = #tpu.pipeline_mode<synchronous>, transform_indices = @transform_7, window_bounds = array<i64: 1, 1>}, {transform_indices = @transform_8, window_bounds = array<i64: 1, 12, 128>}]} {
    %c0 = arith.constant 0 : index
    %c0_0 = arith.constant 0 : index
    %c0_1 = arith.constant 0 : index
    %0 = vector.load %arg1[%c0, %c0_0, %c0_1] : memref<1x12x32xbf16, #tpu.memory_space<vmem>>, vector<1x12x32xbf16>
    %1 = vector.shape_cast %0 : vector<1x12x32xbf16> to vector<12x32xbf16>
    %2 = arith.extf %1 : vector<12x32xbf16> to vector<12x32xf32>
    %c0_2 = arith.constant 0 : index
    %c0_3 = arith.constant 0 : index
    %c0_4 = arith.constant 0 : index
    %3 = vector.load %arg2[%c0_2, %c0_3, %c0_4] : memref<1x8x32xbf16, #tpu.memory_space<vmem>>, vector<1x8x32xbf16>
    %4 = vector.shape_cast %3 : vector<1x8x32xbf16> to vector<8x32xbf16>
    %c0_5 = arith.constant 0 : index
    %c0_6 = arith.constant 0 : index
    %c0_7 = arith.constant 0 : index
    %5 = vector.load %arg3[%c0_5, %c0_6, %c0_7] : memref<1x12x1xf32, #tpu.memory_space<vmem>>, vector<1x12x1xf32>
    %6 = vector.shape_cast %5 : vector<1x12x1xf32> to vector<12x1xf32>
    %c0_8 = arith.constant 0 : index
    %c0_9 = arith.constant 0 : index
    %c0_10 = arith.constant 0 : index
    %7 = vector.load %arg4[%c0_8, %c0_9, %c0_10] : memref<1x1x8xf32, #tpu.memory_space<vmem>>, vector<1x1x8xf32>
    %8 = vector.shape_cast %7 : vector<1x1x8xf32> to vector<1x8xf32>
    %c0_11 = arith.constant 0 : index
    %c0_12 = arith.constant 0 : index
    %9 = vector.load %arg5[%c0_11, %c0_12] : memref<1x32xf32, #tpu.memory_space<vmem>>, vector<1x32xf32>
    %10 = vector.broadcast %9 : vector<1x32xf32> to vector<12x32xf32>
    %11 = arith.mulf %2, %10 : vector<12x32xf32>
    %cst = arith.constant dense<0.000000e+00> : vector<12xf32>
    %12 = vector.multi_reduction <add>, %11, %cst [1] : vector<12x32xf32> to vector<12xf32>
    %13 = vector.shape_cast %12 : vector<12xf32> to vector<12x1xf32>
    %c0_13 = arith.constant 0 : index
    %c0_14 = arith.constant 0 : index
    %14 = vector.load %arg7[%c0_13, %c0_14] : memref<1x32xf32, #tpu.memory_space<vmem>>, vector<1x32xf32>
    %15 = vector.broadcast %14 : vector<1x32xf32> to vector<12x32xf32>
    %16 = arith.mulf %2, %15 : vector<12x32xf32>
    %c0_15 = arith.constant 0 : index
    %c0_16 = arith.constant 0 : index
    %17 = vector.load %arg6[%c0_15, %c0_16] : memref<1x32xf32, #tpu.memory_space<vmem>>, vector<1x32xf32>
    %18 = vector.broadcast %17 : vector<1x32xf32> to vector<12x32xf32>
    %19 = arith.addf %16, %18 : vector<12x32xf32>
    %20 = arith.truncf %19 : vector<12x32xf32> to vector<12x32xbf16>
    %cst_17 = arith.constant dense<0.000000e+00> : vector<12x8xf32>
    %21 = tpu.matmul %20, %4, %cst_17 {dimension_numbers = #tpu.dot_dimension_numbers<[1], [1], [0], [0], [0, 0, 1, 0], [], []>} : vector<12x32xbf16>, vector<8x32xbf16>, vector<12x8xf32> -> vector<12x8xf32>
    %22 = vector.broadcast %13 : vector<12x1xf32> to vector<12x8xf32>
    %23 = arith.addf %21, %22 : vector<12x8xf32>
    %c0_18 = arith.constant 0 : index
    %c0_19 = arith.constant 0 : index
    %24 = vector.load %arg8[%c0_18, %c0_19] : memref<1x1xf32, #tpu.memory_space<vmem>>, vector<1x1xf32>
    %25 = vector.broadcast %24 : vector<1x1xf32> to vector<12x8xf32>
    %26 = arith.addf %23, %25 : vector<12x8xf32>
    %27 = vector.broadcast %8 : vector<1x8xf32> to vector<12x8xf32>
    %28 = arith.mulf %27, %26 : vector<12x8xf32>
    %cst_20 = arith.constant 1.000000e+00 : f32
    %29 = vector.broadcast %cst_20 : f32 to vector<1x8xf32>
    %30 = arith.subf %29, %8 : vector<1x8xf32>
    %cst_21 = arith.constant -1.000000e+30 : f32
    %31 = vector.broadcast %cst_21 : f32 to vector<1x8xf32>
    %32 = arith.mulf %30, %31 : vector<1x8xf32>
    %33 = vector.broadcast %32 : vector<1x8xf32> to vector<12x8xf32>
    %34 = arith.addf %28, %33 : vector<12x8xf32>
    %cst_22 = arith.constant dense<0xFF800000> : vector<12xf32>
    %35 = vector.multi_reduction <maximumf>, %34, %cst_22 [1] : vector<12x8xf32> to vector<12xf32>
    %36 = vector.shape_cast %35 : vector<12xf32> to vector<12x1xf32>
    %37 = vector.broadcast %36 : vector<12x1xf32> to vector<12x8xf32>
    %38 = arith.subf %34, %37 : vector<12x8xf32>
    %39 = math.exp %38 : vector<12x8xf32>
    %cst_23 = arith.constant dense<0.000000e+00> : vector<12xf32>
    %40 = vector.multi_reduction <add>, %39, %cst_23 [1] : vector<12x8xf32> to vector<12xf32>
    %41 = vector.shape_cast %40 : vector<12xf32> to vector<12x1xf32>
    %42 = tpu.reciprocal %41 {approx = true} : vector<12x1xf32> -> vector<12x1xf32>
    %43 = vector.broadcast %42 : vector<12x1xf32> to vector<12x8xf32>
    %44 = arith.mulf %39, %43 : vector<12x8xf32>
    %45 = vector.broadcast %6 : vector<12x1xf32> to vector<12x8xf32>
    %46 = arith.mulf %45, %26 : vector<12x8xf32>
    %cst_24 = arith.constant 1.000000e+00 : f32
    %47 = vector.broadcast %cst_24 : f32 to vector<12x1xf32>
    %48 = arith.subf %47, %6 : vector<12x1xf32>
    %cst_25 = arith.constant -1.000000e+30 : f32
    %49 = vector.broadcast %cst_25 : f32 to vector<12x1xf32>
    %50 = arith.mulf %48, %49 : vector<12x1xf32>
    %51 = vector.broadcast %50 : vector<12x1xf32> to vector<12x8xf32>
    %52 = arith.addf %46, %51 : vector<12x8xf32>
    %cst_26 = arith.constant dense<0xFF800000> : vector<8xf32>
    %53 = vector.multi_reduction <maximumf>, %52, %cst_26 [0] : vector<12x8xf32> to vector<8xf32>
    %54 = vector.shape_cast %53 : vector<8xf32> to vector<1x8xf32>
    %55 = vector.broadcast %54 : vector<1x8xf32> to vector<12x8xf32>
    %56 = arith.subf %52, %55 : vector<12x8xf32>
    %57 = math.exp %56 : vector<12x8xf32>
    %cst_27 = arith.constant dense<0.000000e+00> : vector<8xf32>
    %58 = vector.multi_reduction <add>, %57, %cst_27 [0] : vector<12x8xf32> to vector<8xf32>
    %59 = vector.shape_cast %58 : vector<8xf32> to vector<1x8xf32>
    %60 = tpu.reciprocal %59 {approx = true} : vector<1x8xf32> -> vector<1x8xf32>
    %61 = vector.broadcast %60 : vector<1x8xf32> to vector<12x8xf32>
    %62 = arith.mulf %57, %61 : vector<12x8xf32>
    %63 = arith.truncf %44 : vector<12x8xf32> to vector<12x8xbf16>
    %cst_28 = arith.constant dense<0.000000e+00> : vector<12x32xf32>
    %64 = tpu.matmul %63, %4, %cst_28 {dimension_numbers = #tpu.dot_dimension_numbers<[1], [0], [0], [1], [0, 0, 1, 1], [], []>} : vector<12x8xbf16>, vector<8x32xbf16>, vector<12x32xf32> -> vector<12x32xf32>
    %65 = arith.truncf %62 : vector<12x8xf32> to vector<12x8xbf16>
    %c0_29 = arith.constant 0 : index
    %c0_30 = arith.constant 0 : index
    %c0_31 = arith.constant 0 : index
    %66 = vector.load %arg1[%c0_29, %c0_30, %c0_31] : memref<1x12x32xbf16, #tpu.memory_space<vmem>>, vector<1x12x32xbf16>
    %67 = vector.shape_cast %66 : vector<1x12x32xbf16> to vector<12x32xbf16>
    %cst_32 = arith.constant dense<0.000000e+00> : vector<8x32xf32>
    %68 = tpu.matmul %65, %67, %cst_32 {dimension_numbers = #tpu.dot_dimension_numbers<[0], [0], [1], [1], [0, 1, 1, 1], [], []>} : vector<12x8xbf16>, vector<12x32xbf16>, vector<8x32xf32> -> vector<8x32xf32>
    %69 = arith.truncf %68 : vector<8x32xf32> to vector<8x32xbf16>
    %cst_33 = arith.constant dense<0.000000e+00> : vector<12x32xf32>
    %70 = tpu.matmul %63, %69, %cst_33 {dimension_numbers = #tpu.dot_dimension_numbers<[1], [0], [0], [1], [0, 0, 1, 1], [], []>} : vector<12x8xbf16>, vector<8x32xbf16>, vector<12x32xf32> -> vector<12x32xf32>
    %71 = arith.truncf %2 : vector<12x32xf32> to vector<12x32xbf16>
    %c0_34 = arith.constant 0 : index
    %c0_35 = arith.constant 0 : index
    %c0_36 = arith.constant 0 : index
    %72 = vector.load %arg9[%c0_34, %c0_35, %c0_36] : memref<1x12x128xbf16, #tpu.memory_space<vmem>>, vector<1x12x32xbf16>
    %73 = vector.shape_cast %72 : vector<1x12x32xbf16> to vector<12x32xbf16>
    %74 = vector.shape_cast %71 : vector<12x32xbf16> to vector<1x12x32xbf16>
    tpu.vector_store %arg9[%c0_34, %c0_35, %c0_36], %74 {strides = array<i32>} : memref<1x12x128xbf16, #tpu.memory_space<vmem>>, vector<1x12x32xbf16>,
    %75 = arith.truncf %64 : vector<12x32xf32> to vector<12x32xbf16>
    %c0_37 = arith.constant 0 : index
    %c0_38 = arith.constant 0 : index
    %c32 = arith.constant 32 : index
    %76 = vector.load %arg9[%c0_37, %c0_38, %c32] : memref<1x12x128xbf16, #tpu.memory_space<vmem>>, vector<1x12x32xbf16>
    %77 = vector.shape_cast %76 : vector<1x12x32xbf16> to vector<12x32xbf16>
    %78 = vector.shape_cast %75 : vector<12x32xbf16> to vector<1x12x32xbf16>
    tpu.vector_store %arg9[%c0_37, %c0_38, %c32], %78 {strides = array<i32>} : memref<1x12x128xbf16, #tpu.memory_space<vmem>>, vector<1x12x32xbf16>,
    %79 = arith.mulf %2, %64 : vector<12x32xf32>
    %80 = arith.truncf %79 : vector<12x32xf32> to vector<12x32xbf16>
    %c0_39 = arith.constant 0 : index
    %c0_40 = arith.constant 0 : index
    %c64 = arith.constant 64 : index
    %81 = vector.load %arg9[%c0_39, %c0_40, %c64] : memref<1x12x128xbf16, #tpu.memory_space<vmem>>, vector<1x12x32xbf16>
    %82 = vector.shape_cast %81 : vector<1x12x32xbf16> to vector<12x32xbf16>
    %83 = vector.shape_cast %80 : vector<12x32xbf16> to vector<1x12x32xbf16>
    tpu.vector_store %arg9[%c0_39, %c0_40, %c64], %83 {strides = array<i32>} : memref<1x12x128xbf16, #tpu.memory_space<vmem>>, vector<1x12x32xbf16>,
    %84 = arith.mulf %2, %70 : vector<12x32xf32>
    %85 = arith.truncf %84 : vector<12x32xf32> to vector<12x32xbf16>
    %c0_41 = arith.constant 0 : index
    %c0_42 = arith.constant 0 : index
    %c96 = arith.constant 96 : index
    %86 = vector.load %arg9[%c0_41, %c0_42, %c96] : memref<1x12x128xbf16, #tpu.memory_space<vmem>>, vector<1x12x32xbf16>
    %87 = vector.shape_cast %86 : vector<1x12x32xbf16> to vector<12x32xbf16>
    %88 = vector.shape_cast %85 : vector<12x32xbf16> to vector<1x12x32xbf16>
    tpu.vector_store %arg9[%c0_41, %c0_42, %c96], %88 {strides = array<i32>} : memref<1x12x128xbf16, #tpu.memory_space<vmem>>, vector<1x12x32xbf16>,
    return
  }
  func.func @transform_0(%arg0: i32) -> (i32, i32, i32) {
    %c0_i32 = arith.constant 0 : i32
    %c0_i32_0 = arith.constant 0 : i32
    %c0_i32_1 = arith.constant 0 : i32
    return %arg0, %c0_i32, %c0_i32_0 : i32, i32, i32
  }
  func.func @transform_1(%arg0: i32) -> (i32, i32, i32) {
    %c0_i32 = arith.constant 0 : i32
    %c0_i32_0 = arith.constant 0 : i32
    %c0_i32_1 = arith.constant 0 : i32
    return %arg0, %c0_i32, %c0_i32_0 : i32, i32, i32
  }
  func.func @transform_2(%arg0: i32) -> (i32, i32, i32) {
    %c0_i32 = arith.constant 0 : i32
    %c0_i32_0 = arith.constant 0 : i32
    %c0_i32_1 = arith.constant 0 : i32
    return %arg0, %c0_i32, %c0_i32_0 : i32, i32, i32
  }
  func.func @transform_3(%arg0: i32) -> (i32, i32, i32) {
    %c0_i32 = arith.constant 0 : i32
    %c0_i32_0 = arith.constant 0 : i32
    %c0_i32_1 = arith.constant 0 : i32
    return %arg0, %c0_i32, %c0_i32_0 : i32, i32, i32
  }
  func.func @transform_4(%arg0: i32) -> (i32, i32) {
    %c0_i32 = arith.constant 0 : i32
    %c0_i32_0 = arith.constant 0 : i32
    %c0_i32_1 = arith.constant 0 : i32
    return %c0_i32, %c0_i32_0 : i32, i32
  }
  func.func @transform_5(%arg0: i32) -> (i32, i32) {
    %c0_i32 = arith.constant 0 : i32
    %c0_i32_0 = arith.constant 0 : i32
    %c0_i32_1 = arith.constant 0 : i32
    return %c0_i32, %c0_i32_0 : i32, i32
  }
  func.func @transform_6(%arg0: i32) -> (i32, i32) {
    %c0_i32 = arith.constant 0 : i32
    %c0_i32_0 = arith.constant 0 : i32
    %c0_i32_1 = arith.constant 0 : i32
    return %c0_i32, %c0_i32_0 : i32, i32
  }
  func.func @transform_7(%arg0: i32) -> (i32, i32) {
    %c0_i32 = arith.constant 0 : i32
    %c0_i32_0 = arith.constant 0 : i32
    %c0_i32_1 = arith.constant 0 : i32
    return %c0_i32, %c0_i32_0 : i32, i32
  }
  func.func @transform_8(%arg0: i32) -> (i32, i32, i32) {
    %c0_i32 = arith.constant 0 : i32
    %c0_i32_0 = arith.constant 0 : i32
    %c0_i32_1 = arith.constant 0 : i32
    return %arg0, %c0_i32, %c0_i32_0 : i32, i32, i32
  }
}

module attributes {stable_mosaic.version = 11 : i64} {
  func.func @_linear_kernel(%arg0: i32, %arg1: memref<24x128xbf16, #tpu.memory_space<vmem>>, %arg2: memref<128x128xbf16, #tpu.memory_space<vmem>>, %arg3: memref<1x128xf32, #tpu.memory_space<vmem>>, %arg4: memref<24x128xf32, #tpu.memory_space<vmem>>) attributes {dimension_semantics = [#tpu.dimension_semantics<parallel>], iteration_bounds = array<i64: 1>, scalar_prefetch = 0 : i64, scratch_operands = 0 : i64, tpu.core_type = #tpu.core_type<tc>, window_params = [{transform_indices = @transform_0, window_bounds = array<i64: 24, 128>}, {pipeline_mode = #tpu.pipeline_mode<synchronous>, transform_indices = @transform_1, window_bounds = array<i64: 128, 128>}, {pipeline_mode = #tpu.pipeline_mode<synchronous>, transform_indices = @transform_2, window_bounds = array<i64: 1, 128>}, {transform_indices = @transform_3, window_bounds = array<i64: 24, 128>}]} {
    %c0 = arith.constant 0 : index
    %c0_0 = arith.constant 0 : index
    %0 = vector.load %arg1[%c0, %c0_0] : memref<24x128xbf16, #tpu.memory_space<vmem>>, vector<24x128xbf16>
    %c0_1 = arith.constant 0 : index
    %c0_2 = arith.constant 0 : index
    %1 = vector.load %arg2[%c0_1, %c0_2] : memref<128x128xbf16, #tpu.memory_space<vmem>>, vector<128x128xbf16>
    %cst = arith.constant dense<0.000000e+00> : vector<24x128xf32>
    %2 = tpu.matmul %0, %1, %cst {dimension_numbers = #tpu.dot_dimension_numbers<[1], [0], [0], [1], [0, 0, 1, 1], [], []>} : vector<24x128xbf16>, vector<128x128xbf16>, vector<24x128xf32> -> vector<24x128xf32>
    %c0_3 = arith.constant 0 : index
    %c0_4 = arith.constant 0 : index
    %3 = vector.load %arg3[%c0_3, %c0_4] : memref<1x128xf32, #tpu.memory_space<vmem>>, vector<1x128xf32>
    %4 = vector.broadcast %3 : vector<1x128xf32> to vector<24x128xf32>
    %5 = arith.addf %2, %4 : vector<24x128xf32>
    %c0_5 = arith.constant 0 : index
    %c0_6 = arith.constant 0 : index
    %6 = vector.load %arg4[%c0_5, %c0_6] : memref<24x128xf32, #tpu.memory_space<vmem>>, vector<24x128xf32>
    tpu.vector_store %arg4[%c0_5, %c0_6], %5 {strides = array<i32>} : memref<24x128xf32, #tpu.memory_space<vmem>>, vector<24x128xf32>,
    return
  }
  func.func @transform_0(%arg0: i32) -> (i32, i32) {
    %c0_i32 = arith.constant 0 : i32
    %c0_i32_0 = arith.constant 0 : i32
    return %arg0, %c0_i32 : i32, i32
  }
  func.func @transform_1(%arg0: i32) -> (i32, i32) {
    %c0_i32 = arith.constant 0 : i32
    %c0_i32_0 = arith.constant 0 : i32
    %c0_i32_1 = arith.constant 0 : i32
    return %c0_i32, %c0_i32_0 : i32, i32
  }
  func.func @transform_2(%arg0: i32) -> (i32, i32) {
    %c0_i32 = arith.constant 0 : i32
    %c0_i32_0 = arith.constant 0 : i32
    %c0_i32_1 = arith.constant 0 : i32
    return %c0_i32, %c0_i32_0 : i32, i32
  }
  func.func @transform_3(%arg0: i32) -> (i32, i32) {
    %c0_i32 = arith.constant 0 : i32
    %c0_i32_0 = arith.constant 0 : i32
    return %arg0, %c0_i32 : i32, i32
  }
}

module attributes {stable_mosaic.version = 11 : i64} {
  func.func @_linear_kernel(%arg0: i32, %arg1: memref<24x32xbf16, #tpu.memory_space<vmem>>, %arg2: memref<32x128xbf16, #tpu.memory_space<vmem>>, %arg3: memref<1x128xf32, #tpu.memory_space<vmem>>, %arg4: memref<24x128xf32, #tpu.memory_space<vmem>>) attributes {dimension_semantics = [#tpu.dimension_semantics<parallel>], iteration_bounds = array<i64: 1>, scalar_prefetch = 0 : i64, scratch_operands = 0 : i64, tpu.core_type = #tpu.core_type<tc>, window_params = [{transform_indices = @transform_0, window_bounds = array<i64: 24, 32>}, {pipeline_mode = #tpu.pipeline_mode<synchronous>, transform_indices = @transform_1, window_bounds = array<i64: 32, 128>}, {pipeline_mode = #tpu.pipeline_mode<synchronous>, transform_indices = @transform_2, window_bounds = array<i64: 1, 128>}, {transform_indices = @transform_3, window_bounds = array<i64: 24, 128>}]} {
    %c0 = arith.constant 0 : index
    %c0_0 = arith.constant 0 : index
    %0 = vector.load %arg1[%c0, %c0_0] : memref<24x32xbf16, #tpu.memory_space<vmem>>, vector<24x32xbf16>
    %c0_1 = arith.constant 0 : index
    %c0_2 = arith.constant 0 : index
    %1 = vector.load %arg2[%c0_1, %c0_2] : memref<32x128xbf16, #tpu.memory_space<vmem>>, vector<32x128xbf16>
    %cst = arith.constant dense<0.000000e+00> : vector<24x128xf32>
    %2 = tpu.matmul %0, %1, %cst {dimension_numbers = #tpu.dot_dimension_numbers<[1], [0], [0], [1], [0, 0, 1, 1], [], []>} : vector<24x32xbf16>, vector<32x128xbf16>, vector<24x128xf32> -> vector<24x128xf32>
    %c0_3 = arith.constant 0 : index
    %c0_4 = arith.constant 0 : index
    %3 = vector.load %arg3[%c0_3, %c0_4] : memref<1x128xf32, #tpu.memory_space<vmem>>, vector<1x128xf32>
    %4 = vector.broadcast %3 : vector<1x128xf32> to vector<24x128xf32>
    %5 = arith.addf %2, %4 : vector<24x128xf32>
    %c0_5 = arith.constant 0 : index
    %c0_6 = arith.constant 0 : index
    %6 = vector.load %arg4[%c0_5, %c0_6] : memref<24x128xf32, #tpu.memory_space<vmem>>, vector<24x128xf32>
    tpu.vector_store %arg4[%c0_5, %c0_6], %5 {strides = array<i32>} : memref<24x128xf32, #tpu.memory_space<vmem>>, vector<24x128xf32>,
    return
  }
  func.func @transform_0(%arg0: i32) -> (i32, i32) {
    %c0_i32 = arith.constant 0 : i32
    %c0_i32_0 = arith.constant 0 : i32
    return %arg0, %c0_i32 : i32, i32
  }
  func.func @transform_1(%arg0: i32) -> (i32, i32) {
    %c0_i32 = arith.constant 0 : i32
    %c0_i32_0 = arith.constant 0 : i32
    %c0_i32_1 = arith.constant 0 : i32
    return %c0_i32, %c0_i32_0 : i32, i32
  }
  func.func @transform_2(%arg0: i32) -> (i32, i32) {
    %c0_i32 = arith.constant 0 : i32
    %c0_i32_0 = arith.constant 0 : i32
    %c0_i32_1 = arith.constant 0 : i32
    return %c0_i32, %c0_i32_0 : i32, i32
  }
  func.func @transform_3(%arg0: i32) -> (i32, i32) {
    %c0_i32 = arith.constant 0 : i32
    %c0_i32_0 = arith.constant 0 : i32
    return %arg0, %c0_i32 : i32, i32
  }
}

module attributes {stable_mosaic.version = 11 : i64} {
  func.func @_out_proj_kernel(%arg0: i32, %arg1: memref<24x128xbf16, #tpu.memory_space<vmem>>, %arg2: memref<24x32xbf16, #tpu.memory_space<vmem>>, %arg3: memref<24x32xbf16, #tpu.memory_space<vmem>>, %arg4: memref<1x128xf32, #tpu.memory_space<vmem>>, %arg5: memref<1x32xf32, #tpu.memory_space<vmem>>, %arg6: memref<1x128xf32, #tpu.memory_space<vmem>>, %arg7: memref<1x32xf32, #tpu.memory_space<vmem>>, %arg8: memref<1x2xf32, #tpu.memory_space<vmem>>, %arg9: memref<24x2xf32, #tpu.memory_space<vmem>>) attributes {dimension_semantics = [#tpu.dimension_semantics<parallel>], iteration_bounds = array<i64: 1>, scalar_prefetch = 0 : i64, scratch_operands = 0 : i64, tpu.core_type = #tpu.core_type<tc>, window_params = [{transform_indices = @transform_0, window_bounds = array<i64: 24, 128>}, {transform_indices = @transform_1, window_bounds = array<i64: 24, 32>}, {transform_indices = @transform_2, window_bounds = array<i64: 24, 32>}, {pipeline_mode = #tpu.pipeline_mode<synchronous>, transform_indices = @transform_3, window_bounds = array<i64: 1, 128>}, {pipeline_mode = #tpu.pipeline_mode<synchronous>, transform_indices = @transform_4, window_bounds = array<i64: 1, 32>}, {pipeline_mode = #tpu.pipeline_mode<synchronous>, transform_indices = @transform_5, window_bounds = array<i64: 1, 128>}, {pipeline_mode = #tpu.pipeline_mode<synchronous>, transform_indices = @transform_6, window_bounds = array<i64: 1, 32>}, {pipeline_mode = #tpu.pipeline_mode<synchronous>, transform_indices = @transform_7, window_bounds = array<i64: 1, 2>}, {transform_indices = @transform_8, window_bounds = array<i64: 24, 2>}]} {
    %c0 = arith.constant 0 : index
    %c0_0 = arith.constant 0 : index
    %0 = vector.load %arg1[%c0, %c0_0] : memref<24x128xbf16, #tpu.memory_space<vmem>>, vector<24x128xbf16>
    %1 = arith.extf %0 : vector<24x128xbf16> to vector<24x128xf32>
    %c0_1 = arith.constant 0 : index
    %c0_2 = arith.constant 0 : index
    %2 = vector.load %arg2[%c0_1, %c0_2] : memref<24x32xbf16, #tpu.memory_space<vmem>>, vector<24x32xbf16>
    %3 = arith.extf %2 : vector<24x32xbf16> to vector<24x32xf32>
    %c0_3 = arith.constant 0 : index
    %c0_4 = arith.constant 0 : index
    %4 = vector.load %arg3[%c0_3, %c0_4] : memref<24x32xbf16, #tpu.memory_space<vmem>>, vector<24x32xbf16>
    %5 = arith.extf %4 : vector<24x32xbf16> to vector<24x32xf32>
    %c0_5 = arith.constant 0 : index
    %c0_6 = arith.constant 0 : index
    %6 = vector.load %arg4[%c0_5, %c0_6] : memref<1x128xf32, #tpu.memory_space<vmem>>, vector<1x128xf32>
    %7 = vector.broadcast %6 : vector<1x128xf32> to vector<24x128xf32>
    %8 = arith.mulf %1, %7 : vector<24x128xf32>
    %cst = arith.constant dense<0.000000e+00> : vector<24xf32>
    %9 = vector.multi_reduction <add>, %8, %cst [1] : vector<24x128xf32> to vector<24xf32>
    %10 = vector.shape_cast %9 : vector<24xf32> to vector<24x1xf32>
    %c0_7 = arith.constant 0 : index
    %c0_8 = arith.constant 0 : index
    %11 = vector.load %arg5[%c0_7, %c0_8] : memref<1x32xf32, #tpu.memory_space<vmem>>, vector<1x32xf32>
    %12 = vector.broadcast %11 : vector<1x32xf32> to vector<24x32xf32>
    %13 = arith.mulf %3, %12 : vector<24x32xf32>
    %cst_9 = arith.constant dense<0.000000e+00> : vector<24xf32>
    %14 = vector.multi_reduction <add>, %13, %cst_9 [1] : vector<24x32xf32> to vector<24xf32>
    %15 = vector.shape_cast %14 : vector<24xf32> to vector<24x1xf32>
    %16 = arith.addf %10, %15 : vector<24x1xf32>
    %c0_10 = arith.constant 0 : index
    %c0_11 = arith.constant 0 : index
    %17 = vector.load %arg6[%c0_10, %c0_11] : memref<1x128xf32, #tpu.memory_space<vmem>>, vector<1x128xf32>
    %18 = vector.broadcast %17 : vector<1x128xf32> to vector<24x128xf32>
    %19 = arith.mulf %1, %18 : vector<24x128xf32>
    %cst_12 = arith.constant dense<0.000000e+00> : vector<24xf32>
    %20 = vector.multi_reduction <add>, %19, %cst_12 [1] : vector<24x128xf32> to vector<24xf32>
    %21 = vector.shape_cast %20 : vector<24xf32> to vector<24x1xf32>
    %c0_13 = arith.constant 0 : index
    %c0_14 = arith.constant 0 : index
    %22 = vector.load %arg7[%c0_13, %c0_14] : memref<1x32xf32, #tpu.memory_space<vmem>>, vector<1x32xf32>
    %23 = vector.broadcast %22 : vector<1x32xf32> to vector<24x32xf32>
    %24 = arith.mulf %5, %23 : vector<24x32xf32>
    %cst_15 = arith.constant dense<0.000000e+00> : vector<24xf32>
    %25 = vector.multi_reduction <add>, %24, %cst_15 [1] : vector<24x32xf32> to vector<24xf32>
    %26 = vector.shape_cast %25 : vector<24xf32> to vector<24x1xf32>
    %27 = arith.addf %21, %26 : vector<24x1xf32>
    %28 = tpu.concatenate %16, %27 in 1 : vector<24x1xf32>, vector<24x1xf32> -> vector<24x2xf32>
    %c0_16 = arith.constant 0 : index
    %c0_17 = arith.constant 0 : index
    %29 = vector.load %arg8[%c0_16, %c0_17] : memref<1x2xf32, #tpu.memory_space<vmem>>, vector<1x2xf32>
    %30 = vector.broadcast %29 : vector<1x2xf32> to vector<24x2xf32>
    %31 = arith.addf %28, %30 : vector<24x2xf32>
    %c0_18 = arith.constant 0 : index
    %c0_19 = arith.constant 0 : index
    %32 = vector.load %arg9[%c0_18, %c0_19] : memref<24x2xf32, #tpu.memory_space<vmem>>, vector<24x2xf32>
    tpu.vector_store %arg9[%c0_18, %c0_19], %31 {strides = array<i32>} : memref<24x2xf32, #tpu.memory_space<vmem>>, vector<24x2xf32>,
    return
  }
  func.func @transform_0(%arg0: i32) -> (i32, i32) {
    %c0_i32 = arith.constant 0 : i32
    %c0_i32_0 = arith.constant 0 : i32
    return %arg0, %c0_i32 : i32, i32
  }
  func.func @transform_1(%arg0: i32) -> (i32, i32) {
    %c0_i32 = arith.constant 0 : i32
    %c0_i32_0 = arith.constant 0 : i32
    return %arg0, %c0_i32 : i32, i32
  }
  func.func @transform_2(%arg0: i32) -> (i32, i32) {
    %c0_i32 = arith.constant 0 : i32
    %c0_i32_0 = arith.constant 0 : i32
    return %arg0, %c0_i32 : i32, i32
  }
  func.func @transform_3(%arg0: i32) -> (i32, i32) {
    %c0_i32 = arith.constant 0 : i32
    %c0_i32_0 = arith.constant 0 : i32
    %c0_i32_1 = arith.constant 0 : i32
    return %c0_i32, %c0_i32_0 : i32, i32
  }
  func.func @transform_4(%arg0: i32) -> (i32, i32) {
    %c0_i32 = arith.constant 0 : i32
    %c0_i32_0 = arith.constant 0 : i32
    %c0_i32_1 = arith.constant 0 : i32
    return %c0_i32, %c0_i32_0 : i32, i32
  }
  func.func @transform_5(%arg0: i32) -> (i32, i32) {
    %c0_i32 = arith.constant 0 : i32
    %c0_i32_0 = arith.constant 0 : i32
    %c0_i32_1 = arith.constant 0 : i32
    return %c0_i32, %c0_i32_0 : i32, i32
  }
  func.func @transform_6(%arg0: i32) -> (i32, i32) {
    %c0_i32 = arith.constant 0 : i32
    %c0_i32_0 = arith.constant 0 : i32
    %c0_i32_1 = arith.constant 0 : i32
    return %c0_i32, %c0_i32_0 : i32, i32
  }
  func.func @transform_7(%arg0: i32) -> (i32, i32) {
    %c0_i32 = arith.constant 0 : i32
    %c0_i32_0 = arith.constant 0 : i32
    %c0_i32_1 = arith.constant 0 : i32
    return %c0_i32, %c0_i32_0 : i32, i32
  }
  func.func @transform_8(%arg0: i32) -> (i32, i32) {
    %c0_i32 = arith.constant 0 : i32
    %c0_i32_0 = arith.constant 0 : i32
    return %arg0, %c0_i32 : i32, i32
  }
}

</mosaic_0001>

<llo_original>
// kernel: bidaf_forward.14
$region0: #{bidaf_forward.14}
  #allocation0 [shape = 'u32[]', space=smem, size = 0x4, offset = 0x4, fixed_abs, tag = 'smem constant byte address 0x4 - core index']
  #allocation1 [shape = 'u32[72,128]{1,0:T(1,128)}', space=vmem, size = 0x9000, scoped, tag = 'internal scratch']
  %s0 = inlined_call_operand.vmem [shape: bf16[24,16], index: 0, kind: input, shape index: {}]
  %s1 = inlined_call_operand.vmem [shape: bf16[16,128], index: 1, kind: input, shape index: {}]
  %s2 = inlined_call_operand.vmem [shape: f32[1,128], index: 2, kind: input, shape index: {}]
  %s3 = inlined_call_operand.vmem [shape: f32[24,128], index: 3, kind: output, shape index: {}]
  %s4 = sld [smem:[#allocation0]]
  $region22: #{bidaf_forward.14} parent=0
    _
  %s6 = ssub.s32 1, %s4
  %s7 = scalar_select 0, %s6, %s4
  // Predicated region
  $region2: #{bidaf_forward.14} parent=0 // pred_check
    _
  $region3: #{bidaf_forward.14} parent=0 // pred_check_branch
    %9 = sbr.rel (0) target = $region5
  $region4: #{bidaf_forward.14} parent=0 // pred_region
    _
  $region5: #{bidaf_forward.14} parent=0 // pred_fallthru
    _
  // Predicated region
  $region6: #{bidaf_forward.14} parent=0 // pred_check
    _
  $region7: #{bidaf_forward.14} parent=0 // pred_check_branch
    %11 = sbr.rel (0) target = $region9
  $region8: #{bidaf_forward.14} parent=0 // pred_region
    _
  $region9: #{bidaf_forward.14} parent=0 // pred_fallthru
    _
  // Predicated region
  $region10: #{bidaf_forward.14} parent=0 // pred_check
    _
  $region11: #{bidaf_forward.14} parent=0 // pred_check_branch
    %13 = sbr.rel (0) target = $region13
  $region12: #{bidaf_forward.14} parent=0 // pred_region
    _
  $region13: #{bidaf_forward.14} parent=0 // pred_fallthru
    _
  %v15 = vld [vmem:[%s0] sm:$0xf]
  %v16 = vld [vmem:[%s0 + $0x4] sm:$0xf]
  %v17 = vld [vmem:[%s0 + $0x8] sm:$0xf]
  %v18 = vld [vmem:[%s1] sm:$0xf]
  %v19 = vld [vmem:[%s1 + $0x4] sm:$0xf]
  %v20 = vld [vmem:[%s2] sm:$0x1]
  %v22 = vperm.slane %v20, 0
  %v27 = vunpack.c.l.b16 %v15
  %v28 = vunpack.c.l.b16 %v16
  %v29 = vunpack.c.l.b16 %v17
  %v30 = vpack.c.b16 %v28, %v27
  %v31 = vpack.c.b16 %v29, %v29
  %v34 = vunpack.c.l.b16 %v18
  %v35 = vunpack.c.l.b16 %v19
  %v36 = vpack.c.b16 %v35, %v34
  %vm38 = vcmask 130048
  %v40 = vsel %vm38, %v30, 0
  %v43 = vsel %vm38, %v31, 0
  %45 = vmatpush.bf16.msra.mxu0 0
  %46 = vmatpush.bf16.msra.mxu0 0
  %47 = vmatpush.bf16.msra.mxu0 0
  %48 = vmatpush.bf16.msra.mxu0 0
  %49 = vmatpush.bf16.msra.mxu0 0
  %50 = vmatpush.bf16.msra.mxu0 0
  %51 = vmatpush.bf16.msra.mxu0 0
  %52 = vmatpush.bf16.msra.mxu0 %v36
  %53 = vmatmul.bf16.gmra.mxu0 %v40
  %v54 = vpop.f32.mrf.mxu0
  %v55 = vadd.f32 %v22, %v54
  %v56 = vpop.f32.mrf.mxu0
  %v57 = vadd.f32 %v22, %v56
  %58 = vmatmul.bf16.gmra.mxu0 %v43
  %v59 = vpop.f32.mrf.mxu0
  %v60 = vadd.f32 %v22, %v59
  %v61 = vpop.f32.mrf.mxu0
  %62 = vdwg.mxu0
  %63 = vst [vmem:[%s3] sm:$0xff] %v55
  %64 = vst [vmem:[%s3 + $0x8] sm:$0xff] %v57
  %65 = vst [vmem:[%s3 + $0x10] sm:$0xff] %v60
  // Predicated region
  $region14: #{bidaf_forward.14} parent=0 // pred_check
    _
  $region15: #{bidaf_forward.14} parent=0 // pred_check_branch
    %67 = sbr.rel (0) target = $region17
  $region16: #{bidaf_forward.14} parent=0 // pred_region
    _
  $region17: #{bidaf_forward.14} parent=0 // pred_fallthru
    _
  // Predicated region
  $region18: #{bidaf_forward.14} parent=0 // pred_check
    _
  $region19: #{bidaf_forward.14} parent=0 // pred_check_branch
    %69 = sbr.rel (0) target = $region21
  $region20: #{bidaf_forward.14} parent=0 // pred_region
    _
  $region21: #{bidaf_forward.14} parent=0 // pred_fallthru
    _

// kernel: bidaf_forward.15
$region0: #{bidaf_forward.15}
  #allocation0 [shape = 'u32[]', space=smem, size = 0x4, offset = 0x4, fixed_abs, tag = 'smem constant byte address 0x4 - core index']
  #allocation1 [shape = 'u32[72,128]{1,0:T(1,128)}', space=vmem, size = 0x9000, scoped, tag = 'internal scratch']
  %s0 = inlined_call_operand.vmem [shape: f32[2,12,2,64], index: 0, kind: input, shape index: {}]
  %s1 = inlined_call_operand.vmem [shape: f32[2,16,64], index: 1, kind: input, shape index: {}]
  %s2 = inlined_call_operand.vmem [shape: f32[2,12,2,16], index: 2, kind: output, shape index: {}]
  %s3 = sld [smem:[#allocation0]]
  $region48: #{bidaf_forward.15} parent=0
    _
  %s5 = ssub.s32 1, %s3
  %s6 = scalar_select 0, %s5, %s3
  loop: start=0, step=1, limit=4
  $region2: #{bidaf_forward.15} parent=0 // loop_pre_header
    _
  $region3: #{bidaf_forward.15} parent=0 // loop_header
    %s8 = sphi 0, %s12
    %p9 = scmp.ge.s32.totalorder %s8, 4
    %s18 = sphi 0, %s20
    %s21 = sphi 0, %s18
    %s22 = sphi 0, %s21
    %s38 = sphi 0, %s22
    %s44 = sphi 0, %s46
    %s47 = sphi 0, %s44
    %s48 = sphi 0, %s47
    %s64 = sphi 0, %s48
    %s70 = sphi 0, %s72
    %s73 = sphi 0, %s70
    %s74 = sphi 0, %s73
    %s90 = sphi 0, %s74
  $region4: #{bidaf_forward.15} parent=0 // loop_header_branch
    %11 = sbr.rel (%p9) target = $region8
  $region5: #{bidaf_forward.15} parent=0 // loop_body
    %s13 = ssub.s32 %s8, 1
    %s14 = ssub.s32 %s8, 2
    %s15 = sadd.s32 %s8, 1
    %s16 = ssub.s32 %s8, %s15
    %p17 = scmp.eq.s32.totalorder %s16, 0
    %s19 = sadd.s32 %s18, 1
    %s20 = scalar_select %p17, %s18, %s19
    %p23 = pneg %p17
    %p24 = scmp.eq.s32.totalorder %s8, 1
    %p25 = por %p23, %p24
    %p26 = scmp.ne.s32.totalorder %s18, %s21
    %p27 = scmp.eq.s32.totalorder %s8, 0
    %p28 = por %p26, %p27
    %p29 = scmp.ne.s32.totalorder %s18, %s21
    %p30 = scmp.eq.s32.totalorder %s13, 1
    %p31 = por %p29, %p30
    %p32 = scmp.ne.s32.totalorder %s21, %s22
    %p33 = scmp.eq.s32.totalorder %s13, 0
    %p34 = por %p32, %p33
    %p35 = scmp.ne.s32.totalorder %s21, %s22
    %p36 = scmp.eq.s32.totalorder %s14, 1
    %p37 = por %p35, %p36
    %p39 = scmp.ne.s32.totalorder %s22, %s38
    %p40 = scmp.eq.s32.totalorder %s14, 0
    %p41 = por %p39, %p40
    %s42 = ssub.s32 %s8, %s15
    %p43 = scmp.eq.s32.totalorder %s42, 0
    %s45 = sadd.s32 %s44, 1
    %s46 = scalar_select %p43, %s44, %s45
    %p49 = pneg %p43
    %p50 = scmp.eq.s32.totalorder %s8, 1
    %p51 = por %p49, %p50
    %p52 = scmp.ne.s32.totalorder %s44, %s47
    %p53 = scmp.eq.s32.totalorder %s8, 0
    %p54 = por %p52, %p53
    %p55 = scmp.ne.s32.totalorder %s44, %s47
    %p56 = scmp.eq.s32.totalorder %s13, 1
    %p57 = por %p55, %p56
    %p58 = scmp.ne.s32.totalorder %s47, %s48
    %p59 = scmp.eq.s32.totalorder %s13, 0
    %p60 = por %p58, %p59
    %p61 = scmp.ne.s32.totalorder %s47, %s48
    %p62 = scmp.eq.s32.totalorder %s14, 1
    %p63 = por %p61, %p62
    %p65 = scmp.ne.s32.totalorder %s48, %s64
    %p66 = scmp.eq.s32.totalorder %s14, 0
    %p67 = por %p65, %p66
    %s68 = ssub.s32 %s8, %s15
    %p69 = scmp.eq.s32.totalorder %s68, 0
    %s71 = sadd.s32 %s70, 1
    %s72 = scalar_select %p69, %s70, %s71
    %p75 = pneg %p69
    %p76 = scmp.eq.s32.totalorder %s8, 1
    %p77 = por %p75, %p76
    %p78 = scmp.ne.s32.totalorder %s70, %s73
    %p79 = scmp.eq.s32.totalorder %s8, 0
    %p80 = por %p78, %p79
    %p81 = scmp.ne.s32.totalorder %s70, %s73
    %p82 = scmp.eq.s32.totalorder %s13, 1
    %p83 = por %p81, %p82
    %p84 = scmp.ne.s32.totalorder %s73, %s74
    %p85 = scmp.eq.s32.totalorder %s13, 0
    %p86 = por %p84, %p85
    %p87 = scmp.ne.s32.totalorder %s73, %s74
    %p88 = scmp.eq.s32.totalorder %s14, 1
    %p89 = por %p87, %p88
    %p91 = scmp.ne.s32.totalorder %s74, %s90
    %p92 = scmp.eq.s32.totalorder %s14, 0
    %p93 = por %p91, %p92
    %p94 = scmp.le.s32.totalorder 1, %s8
    %p95 = scmp.lt.s32.totalorder %s8, 3
    %p96 = pnand %p94, %p95
    %p97 = pneg %p96
    // Predicated region
    $region9: #{bidaf_forward.15} parent=5 // pred_check
      _
    $region10: #{bidaf_forward.15} parent=5 // pred_check_branch
      %99 = sbr.rel (%p96) target = $region12
    $region11: #{bidaf_forward.15} parent=5 // pred_region
      %s100 = ssub.s32 %s8, 1
    $region12: #{bidaf_forward.15} parent=5 // pred_fallthru
      _
    %p101 = scmp.lt.s32.totalorder %s8, 2
    // Predicated region
    $region13: #{bidaf_forward.15} parent=5 // pred_check
      %p102 = pneg %p101
    $region14: #{bidaf_forward.15} parent=5 // pred_check_branch
      %104 = sbr.rel (%p102) target = $region16
    $region15: #{bidaf_forward.15} parent=5 // pred_region
      // Predicated region
      $region17: #{bidaf_forward.15} parent=15 // pred_check
        %p105 = pneg %p28
      $region18: #{bidaf_forward.15} parent=15 // pred_check_branch
        %107 = sbr.rel (%p105) target = $region20
      $region19: #{bidaf_forward.15} parent=15 // pred_region
        %p108 = scmp.lt.s32.totalorder %s8, 1
        %s109 = scalar_select %p108, %s8, 1
        %s110 = smul.addr %s109, 12
        %s111 = smul.addr %s110, 2
        %s112 = scalar_lea.vmem %s0, %s111
      $region20: #{bidaf_forward.15} parent=15 // pred_fallthru
        _
      // Predicated region
      $region21: #{bidaf_forward.15} parent=15 // pred_check
        %p113 = pneg %p54
      $region22: #{bidaf_forward.15} parent=15 // pred_check_branch
        %115 = sbr.rel (%p113) target = $region24
      $region23: #{bidaf_forward.15} parent=15 // pred_region
        %p116 = scmp.lt.s32.totalorder %s8, 1
        %s117 = scalar_select %p116, %s8, 1
        %s118 = smul.addr %s117, 2
        %s119 = smul.addr %s118, 8
        %s120 = scalar_lea.vmem %s1, %s119
      $region24: #{bidaf_forward.15} parent=15 // pred_fallthru
        _
    $region16: #{bidaf_forward.15} parent=5 // pred_fallthru
      _
    %p121 = scmp.le.s32.totalorder 1, %s8
    %p122 = scmp.lt.s32.totalorder %s8, 3
    %p123 = pnand %p121, %p122
    %p124 = pneg %p123
    // Predicated region
    $region25: #{bidaf_forward.15} parent=5 // pred_check
      _
    $region26: #{bidaf_forward.15} parent=5 // pred_check_branch
      %126 = sbr.rel (%p123) target = $region28
    $region27: #{bidaf_forward.15} parent=5 // pred_region
      %s127 = ssub.s32 %s8, 1
      %p128 = scmp.lt.s32.totalorder %s13, 1
      %s129 = scalar_select %p128, %s13, 1
      %s130 = smul.addr %s129, 12
      %s131 = smul.addr %s130, 2
      %s132 = scalar_lea.vmem %s0, %s131
      %p133 = pneg %p34
      %p134 = pneg %p31
      %p135 = scmp.lt.s32.totalorder %s13, 1
      %s136 = scalar_select %p135, %s13, 1
      %s137 = smul.addr %s136, 2
      %s138 = smul.addr %s137, 8
      %s139 = scalar_lea.vmem %s1, %s138
      %p140 = pneg %p60
      %p141 = pneg %p57
      %p142 = pneg %p86
      %p143 = pneg %p83
      %p144 = scmp.lt.s32.totalorder %s13, 1
      %s145 = scalar_select %p144, %s13, 1
      %s146 = smul.addr %s145, 12
      %s147 = smul.addr %s146, 2
      %s148 = scalar_lea.vmem %s2, %s147
      %p149 = scmp.lt.s32.totalorder %s13, 1
      %s150 = scalar_select %p149, %s13, 1
      %s151 = smul.addr %s150, 12
      %s152 = smul.addr %s151, 2
      %s153 = scalar_lea.vmem %s0, %s152
      %p154 = scmp.lt.s32.totalorder %s13, 1
      %s155 = scalar_select %p154, %s13, 1
      %s156 = smul.addr %s155, 2
      %s157 = smul.addr %s156, 8
      %s158 = scalar_lea.vmem %s1, %s157
      %p159 = scmp.lt.s32.totalorder %s13, 1
      %s160 = scalar_select %p159, %s13, 1
      %s161 = smul.addr %s160, 12
      %s162 = smul.addr %s161, 2
      %s163 = scalar_lea.vmem %s2, %s162
      %p164 = scmp.eq.s32.totalorder %s13, 1
      loop: start=0, step=1, limit=12
      $region29: #{bidaf_forward.15} parent=27 // loop_pre_header
        _
      $region30: #{bidaf_forward.15} parent=27 // loop_header
        %s166 = sphi 0, %s170
        %p167 = scmp.ge.s32.totalorder %s166, 12
        %v171 = vphi 0.0, %v243
        %v172 = vphi 0.0, %v237
      $region31: #{bidaf_forward.15} parent=27 // loop_header_branch
        %169 = sbr.rel (%p167) target = $region35
      $region32: #{bidaf_forward.15} parent=27 // loop_body
        %s173 = ssub.s32 11, %s166
        %s174 = scalar_select %p164, %s173, %s166
        %s175 = smul.u32 %s174, 2
        %s176 = scalar_lea.vmem %s153, %s175
        %v177 = vld [vmem:[%s176] sm:$0x3]
        %v178 = vld [vmem:[%s158] sm:$0xff]
        %v179 = vld [vmem:[%s158 + $0x8] sm:$0xff]
        %181 = vrot.lane.b32.xlu0 %v171, 80
        %v182 = vpop.permute.xlu0 %181
        %vm183 = vcmask 130048
        %v184 = vsel %vm183, %v182, 0
        %186 = vmatpush.msra.mxu0 0.0
        %187 = vmatpush.msra.mxu0 0.0
        %188 = vmatpush.msra.mxu0 0.0
        %189 = vmatpush.msra.mxu0 0.0
        %190 = vmatpush.msra.mxu0 0.0
        %191 = vmatpush.msra.mxu0 0.0
        %192 = vmatpush.msra.mxu0 0.0
        %193 = vmatpush.msra.mxu0 0.0
        %194 = vmatpush.msra.mxu0 0.0
        %195 = vmatpush.msra.mxu0 0.0
        %196 = vmatpush.msra.mxu0 0.0
        %197 = vmatpush.msra.mxu0 0.0
        %198 = vmatpush.msra.mxu0 0.0
        %199 = vmatpush.msra.mxu0 0.0
        %200 = vmatpush.msra.mxu0 %v179
        %201 = vmatpush.msra.mxu0 %v178
        %202 = vmatmul.f32.gmra.mxu0 %v184
        %v203 = vpop.f32.mrf.mxu0
        %v204 = vadd.f32 0.0, %v203
        %205 = vdwg.mxu0
        %v206 = vadd.f32 %v177, %v204
        %v207 = vxor.u32 %v206, 2147483648
        %v208 = vmul.f32 %v207, 1.442695
        %v209 = vpow.pop %v208
        %v210 = vadd.f32 %v209, 1.0
        %v211 = vrcp.pop %v210
        %v212 = vmul.f32 %v210, %v211
        %v213 = vsub.f32 1.0, %v212
        %v214 = vmul.f32 %v211, %v213
        %v215 = vadd.f32 %v211, %v214
        %vm216 = vweird.f32 %v210
        %vm217 = vweird.f32 %v211
        %vm218 = vmor %vm216, %vm217
        %v219 = vsel %vm218, %v211, %v215
        %v220 = vand.u32 2147483647, %v210
        %vm221 = vcmp.eq.f32.partialorder %v220, 8.507059e+37
        %v222 = vand.u32 %v210, 2147483648
        %v223 = vor.u32 1.1754944e-38, %v222
        %v224 = vsel %vm221, %v223, %v219
        %v225 = vmul.f32 1.0, %v224
        %v226 = vtanh.pop %v206
        %v227 = vmul.f32 %v225, %v172
        %229 = vrot.lane.b32.xlu0 %v226, 96
        %v230 = vpop.permute.xlu0 %229
        %v232 = vmul.f32 %v225, %v230
        %234 = vrot.lane.b32.xlu0 %v232, 16
        %v235 = vpop.permute.xlu0 %234
        %v237 = vadd.f32 %v227, %v235
        %v238 = vtanh.pop %v237
        %240 = vrot.lane.b32.xlu0 %v238, 32
        %v241 = vpop.permute.xlu0 %240
        %v243 = vmul.f32 %v225, %v241
        %245 = vrot.lane.b32.xlu0 %v243, 80
        %v246 = vpop.permute.xlu0 %245
        %s248 = scalar_lea.vmem %s163, %s175
        %vm249 = vcmask 123904
        %250 = vst.msk [vmem:[%s248] sm:$0x3] %vm249, %v246
      $region33: #{bidaf_forward.15} parent=27 // loop_footer
        %s170 = sadd.s32 1, %s166
      $region34: #{bidaf_forward.15} parent=27 // loop_footer_branch
        %165 = sbr.rel target = $region30
      $region35: #{bidaf_forward.15} parent=27 // loop_exit
        _
      %p251 = scmp.lt.s32.totalorder %s13, 1
      %s252 = scalar_select %p251, %s13, 1
      %s253 = smul.addr %s252, 12
      %s254 = smul.addr %s253, 2
      %s255 = scalar_lea.vmem %s2, %s254
      // Predicated region
      $region36: #{bidaf_forward.15} parent=27 // pred_check
        %p256 = pneg %p83
      $region37: #{bidaf_forward.15} parent=27 // pred_check_branch
        %258 = sbr.rel (%p256) target = $region39
      $region38: #{bidaf_forward.15} parent=27 // pred_region
        _
      $region39: #{bidaf_forward.15} parent=27 // pred_fallthru
        _
    $region28: #{bidaf_forward.15} parent=5 // pred_fallthru
      _
    %p259 = scmp.le.s32.totalorder 2, %s8
    // Predicated region
    $region40: #{bidaf_forward.15} parent=5 // pred_check
      %p260 = pneg %p259
    $region41: #{bidaf_forward.15} parent=5 // pred_check_branch
      %262 = sbr.rel (%p260) target = $region43
    $region42: #{bidaf_forward.15} parent=5 // pred_region
      %s263 = ssub.s32 %s8, 2
      // Predicated region
      $region44: #{bidaf_forward.15} parent=42 // pred_check
        %p264 = pneg %p89
      $region45: #{bidaf_forward.15} parent=42 // pred_check_branch
        %266 = sbr.rel (%p264) target = $region47
      $region46: #{bidaf_forward.15} parent=42 // pred_region
        %p267 = scmp.lt.s32.totalorder %s14, 1
        %s268 = scalar_select %p267, %s14, 1
        %s269 = smul.addr %s268, 12
        %s270 = smul.addr %s269, 2
        %s271 = scalar_lea.vmem %s2, %s270
      $region47: #{bidaf_forward.15} parent=42 // pred_fallthru
        _
    $region43: #{bidaf_forward.15} parent=5 // pred_fallthru
      _
  $region6: #{bidaf_forward.15} parent=0 // loop_footer
    %s12 = sadd.s32 1, %s8
  $region7: #{bidaf_forward.15} parent=0 // loop_footer_branch
    %7 = sbr.rel target = $region3
  $region8: #{bidaf_forward.15} parent=0 // loop_exit
    _

// kernel: bidaf_forward.13
$region0: #{bidaf_forward.13}
  #allocation0 [shape = 'u32[]', space=smem, size = 0x4, offset = 0x4, fixed_abs, tag = 'smem constant byte address 0x4 - core index']
  #allocation1 [shape = 'u32[72,128]{1,0:T(1,128)}', space=vmem, size = 0x9000, scoped, tag = 'internal scratch']
  %s0 = inlined_call_operand.vmem [shape: bf16[40,16], index: 0, kind: input, shape index: {}]
  %s1 = inlined_call_operand.vmem [shape: bf16[16,16], index: 1, kind: input, shape index: {}]
  %s2 = inlined_call_operand.vmem [shape: bf16[16,16], index: 2, kind: input, shape index: {}]
  %s3 = inlined_call_operand.vmem [shape: f32[1,16], index: 3, kind: input, shape index: {}]
  %s4 = inlined_call_operand.vmem [shape: bf16[16,16], index: 4, kind: input, shape index: {}]
  %s5 = inlined_call_operand.vmem [shape: f32[1,16], index: 5, kind: input, shape index: {}]
  %s6 = inlined_call_operand.vmem [shape: bf16[16,16], index: 6, kind: input, shape index: {}]
  %s7 = inlined_call_operand.vmem [shape: f32[1,16], index: 7, kind: input, shape index: {}]
  %s8 = inlined_call_operand.vmem [shape: bf16[16,16], index: 8, kind: input, shape index: {}]
  %s9 = inlined_call_operand.vmem [shape: f32[1,16], index: 9, kind: input, shape index: {}]
  %s10 = inlined_call_operand.vmem [shape: bf16[40,16], index: 10, kind: output, shape index: {}]
  %s11 = sld [smem:[#allocation0]]
  $region50: #{bidaf_forward.13} parent=0
    _
  %s13 = ssub.s32 1, %s11
  %s14 = scalar_select 0, %s13, %s11
  // Predicated region
  $region2: #{bidaf_forward.13} parent=0 // pred_check
    _
  $region3: #{bidaf_forward.13} parent=0 // pred_check_branch
    %16 = sbr.rel (0) target = $region5
  $region4: #{bidaf_forward.13} parent=0 // pred_region
    _
  $region5: #{bidaf_forward.13} parent=0 // pred_fallthru
    _
  // Predicated region
  $region6: #{bidaf_forward.13} parent=0 // pred_check
    _
  $region7: #{bidaf_forward.13} parent=0 // pred_check_branch
    %18 = sbr.rel (0) target = $region9
  $region8: #{bidaf_forward.13} parent=0 // pred_region
    _
  $region9: #{bidaf_forward.13} parent=0 // pred_fallthru
    _
  // Predicated region
  $region10: #{bidaf_forward.13} parent=0 // pred_check
    _
  $region11: #{bidaf_forward.13} parent=0 // pred_check_branch
    %20 = sbr.rel (0) target = $region13
  $region12: #{bidaf_forward.13} parent=0 // pred_region
    _
  $region13: #{bidaf_forward.13} parent=0 // pred_fallthru
    _
  // Predicated region
  $region14: #{bidaf_forward.13} parent=0 // pred_check
    _
  $region15: #{bidaf_forward.13} parent=0 // pred_check_branch
    %22 = sbr.rel (0) target = $region17
  $region16: #{bidaf_forward.13} parent=0 // pred_region
    _
  $region17: #{bidaf_forward.13} parent=0 // pred_fallthru
    _
  // Predicated region
  $region18: #{bidaf_forward.13} parent=0 // pred_check
    _
  $region19: #{bidaf_forward.13} parent=0 // pred_check_branch
    %24 = sbr.rel (0) target = $region21
  $region20: #{bidaf_forward.13} parent=0 // pred_region
    _
  $region21: #{bidaf_forward.13} parent=0 // pred_fallthru
    _
  // Predicated region
  $region22: #{bidaf_forward.13} parent=0 // pred_check
    _
  $region23: #{bidaf_forward.13} parent=0 // pred_check_branch
    %26 = sbr.rel (0) target = $region25
  $region24: #{bidaf_forward.13} parent=0 // pred_region
    _
  $region25: #{bidaf_forward.13} parent=0 // pred_fallthru
    _
  // Predicated region
  $region26: #{bidaf_forward.13} parent=0 // pred_check
    _
  $region27: #{bidaf_forward.13} parent=0 // pred_check_branch
    %28 = sbr.rel (0) target = $region29
  $region28: #{bidaf_forward.13} parent=0 // pred_region
    _
  $region29: #{bidaf_forward.13} parent=0 // pred_fallthru
    _
  // Predicated region
  $region30: #{bidaf_forward.13} parent=0 // pred_check
    _
  $region31: #{bidaf_forward.13} parent=0 // pred_check_branch
    %30 = sbr.rel (0) target = $region33
  $region32: #{bidaf_forward.13} parent=0 // pred_region
    _
  $region33: #{bidaf_forward.13} parent=0 // pred_fallthru
    _
  // Predicated region
  $region34: #{bidaf_forward.13} parent=0 // pred_check
    _
  $region35: #{bidaf_forward.13} parent=0 // pred_check_branch
    %32 = sbr.rel (0) target = $region37
  $region36: #{bidaf_forward.13} parent=0 // pred_region
    _
  $region37: #{bidaf_forward.13} parent=0 // pred_fallthru
    _
  // Predicated region
  $region38: #{bidaf_forward.13} parent=0 // pred_check
    _
  $region39: #{bidaf_forward.13} parent=0 // pred_check_branch
    %34 = sbr.rel (0) target = $region41
  $region40: #{bidaf_forward.13} parent=0 // pred_region
    _
  $region41: #{bidaf_forward.13} parent=0 // pred_fallthru
    _
  %v36 = vld [vmem:[%s0] sm:$0xf]
  %v37 = vld [vmem:[%s0 + $0x4] sm:$0xf]
  %v38 = vld [vmem:[%s0 + $0x8] sm:$0xf]
  %v39 = vld [vmem:[%s0 + $0xc] sm:$0xf]
  %v40 = vld [vmem:[%s0 + $0x10] sm:$0xf]
  %v41 = vld [vmem:[%s1] sm:$0xf]
  %v42 = vld [vmem:[%s1 + $0x4] sm:$0xf]
  %v48 = vunpack.c.l.b16 %v36
  %v49 = vunpack.c.l.b16 %v37
  %v50 = vunpack.c.l.b16 %v38
  %v51 = vunpack.c.l.b16 %v39
  %v52 = vunpack.c.l.b16 %v40
  %v53 = vpack.c.b16 %v49, %v48
  %v54 = vpack.c.b16 %v51, %v50
  %v55 = vpack.c.b16 %v52, %v52
  %v58 = vunpack.c.l.b16 %v41
  %v59 = vunpack.c.l.b16 %v42
  %v60 = vpack.c.b16 %v59, %v58
  %vm62 = vcmask 130048
  %v64 = vsel %vm62, %v53, 0
  %v67 = vsel %vm62, %v54, 0
  %v70 = vsel %vm62, %v55, 0
  %72 = vmatpush.bf16.msra.mxu0 0
  %73 = vmatpush.bf16.msra.mxu0 0
  %74 = vmatpush.bf16.msra.mxu0 0
  %75 = vmatpush.bf16.msra.mxu0 0
  %76 = vmatpush.bf16.msra.mxu0 0
  %77 = vmatpush.bf16.msra.mxu0 0
  %78 = vmatpush.bf16.msra.mxu0 0
  %79 = vmatpush.bf16.msra.mxu0 %v60
  %80 = vmatmul.bf16.gmra.mxu0 %v64
  %v81 = vpop.f32.mrf.mxu0
  %v82 = vadd.f32 0.0, %v81
  %v83 = vpop.f32.mrf.mxu0
  %v84 = vadd.f32 0.0, %v83
  %85 = vmatmul.bf16.gmra.mxu0 %v67
  %v86 = vpop.f32.mrf.mxu0
  %v87 = vadd.f32 0.0, %v86
  %v88 = vpop.f32.mrf.mxu0
  %v89 = vadd.f32 0.0, %v88
  %90 = vmatmul.bf16.gmra.mxu0 %v70
  %v91 = vpop.f32.mrf.mxu0
  %v92 = vadd.f32 0.0, %v91
  %v93 = vpop.f32.mrf.mxu0
  %94 = vdwg.mxu0
  %v95 = vpack.c.bf16 %v84, %v82
  %v96 = vpack.c.bf16 %v89, %v87
  %v97 = vpack.c.bf16 %v92, %v92
  %v98 = vld [vmem:[%s2] sm:$0xf]
  %v99 = vld [vmem:[%s2 + $0x4] sm:$0xf]
  %v100 = vld [vmem:[%s3] sm:$0x1]
  %v102 = vperm.slane %v100, 0
  %v106 = vunpack.c.l.b16 %v98
  %v107 = vunpack.c.l.b16 %v99
  %v108 = vpack.c.b16 %v107, %v106
  %v111 = vsel %vm62, %v95, 0
  %v114 = vsel %vm62, %v96, 0
  %v117 = vsel %vm62, %v97, 0
  %119 = vmatpush.bf16.msra.mxu0 0
  %120 = vmatpush.bf16.msra.mxu0 0
  %121 = vmatpush.bf16.msra.mxu0 0
  %122 = vmatpush.bf16.msra.mxu0 0
  %123 = vmatpush.bf16.msra.mxu0 0
  %124 = vmatpush.bf16.msra.mxu0 0
  %125 = vmatpush.bf16.msra.mxu0 0
  %126 = vmatpush.bf16.msra.mxu0 %v108
  %127 = vmatmul.bf16.gmra.mxu0 %v111
  %v128 = vpop.f32.mrf.mxu0
  %v129 = vadd.f32 %v102, %v128
  %v130 = vpop.f32.mrf.mxu0
  %v131 = vadd.f32 %v102, %v130
  %132 = vmatmul.bf16.gmra.mxu0 %v114
  %v133 = vpop.f32.mrf.mxu0
  %v134 = vadd.f32 %v102, %v133
  %v135 = vpop.f32.mrf.mxu0
  %v136 = vadd.f32 %v102, %v135
  %137 = vmatmul.bf16.gmra.mxu0 %v117
  %v138 = vpop.f32.mrf.mxu0
  %v139 = vadd.f32 %v102, %v138
  %v140 = vpop.f32.mrf.mxu0
  %141 = vdwg.mxu0
  %v142 = vmax.f32 %v129, 0.0
  %v143 = vmax.f32 %v131, 0.0
  %v144 = vmax.f32 %v134, 0.0
  %v145 = vmax.f32 %v136, 0.0
  %v146 = vmax.f32 %v139, 0.0
  %v147 = vld [vmem:[%s4] sm:$0xf]
  %v148 = vld [vmem:[%s4 + $0x4] sm:$0xf]
  %v149 = vld [vmem:[%s5] sm:$0x1]
  %v151 = vperm.slane %v149, 0
  %v155 = vunpack.c.l.b16 %v147
  %v156 = vunpack.c.l.b16 %v148
  %v157 = vpack.c.b16 %v156, %v155
  %159 = vmatpush.bf16.msra.mxu0 0
  %160 = vmatpush.bf16.msra.mxu0 0
  %161 = vmatpush.bf16.msra.mxu0 0
  %162 = vmatpush.bf16.msra.mxu0 0
  %163 = vmatpush.bf16.msra.mxu0 0
  %164 = vmatpush.bf16.msra.mxu0 0
  %165 = vmatpush.bf16.msra.mxu0 0
  %166 = vmatpush.bf16.msra.mxu0 %v157
  %167 = vmatmul.bf16.gmra.mxu0 %v111
  %v168 = vpop.f32.mrf.mxu0
  %v169 = vadd.f32 %v151, %v168
  %v170 = vpop.f32.mrf.mxu0
  %v171 = vadd.f32 %v151, %v170
  %172 = vmatmul.bf16.gmra.mxu0 %v114
  %v173 = vpop.f32.mrf.mxu0
  %v174 = vadd.f32 %v151, %v173
  %v175 = vpop.f32.mrf.mxu0
  %v176 = vadd.f32 %v151, %v175
  %177 = vmatmul.bf16.gmra.mxu0 %v117
  %v178 = vpop.f32.mrf.mxu0
  %v179 = vadd.f32 %v151, %v178
  %v180 = vpop.f32.mrf.mxu0
  %181 = vdwg.mxu0
  %v182 = vxor.u32 %v169, 2147483648
  %v183 = vxor.u32 %v171, 2147483648
  %v184 = vxor.u32 %v174, 2147483648
  %v185 = vxor.u32 %v176, 2147483648
  %v186 = vxor.u32 %v179, 2147483648
  %v187 = vmul.f32 %v182, 1.442695
  %v188 = vpow.pop %v187
  %v189 = vmul.f32 %v183, 1.442695
  %v190 = vpow.pop %v189
  %v191 = vmul.f32 %v184, 1.442695
  %v192 = vpow.pop %v191
  %v193 = vmul.f32 %v185, 1.442695
  %v194 = vpow.pop %v193
  %v195 = vmul.f32 %v186, 1.442695
  %v196 = vpow.pop %v195
  %v197 = vadd.f32 %v188, 1.0
  %v198 = vadd.f32 %v190, 1.0
  %v199 = vadd.f32 %v192, 1.0
  %v200 = vadd.f32 %v194, 1.0
  %v201 = vadd.f32 %v196, 1.0
  %v202 = vrcp.pop %v197
  %v203 = vmul.f32 %v197, %v202
  %v204 = vsub.f32 1.0, %v203
  %v205 = vmul.f32 %v202, %v204
  %v206 = vadd.f32 %v202, %v205
  %vm207 = vweird.f32 %v197
  %vm208 = vweird.f32 %v202
  %vm209 = vmor %vm207, %vm208
  %v210 = vsel %vm209, %v202, %v206
  %v211 = vand.u32 2147483647, %v197
  %vm212 = vcmp.eq.f32.partialorder %v211, 8.507059e+37
  %v213 = vand.u32 %v197, 2147483648
  %v214 = vor.u32 1.1754944e-38, %v213
  %v215 = vsel %vm212, %v214, %v210
  %v216 = vmul.f32 1.0, %v215
  %v217 = vrcp.pop %v198
  %v218 = vmul.f32 %v198, %v217
  %v219 = vsub.f32 1.0, %v218
  %v220 = vmul.f32 %v217, %v219
  %v221 = vadd.f32 %v217, %v220
  %vm222 = vweird.f32 %v198
  %vm223 = vweird.f32 %v217
  %vm224 = vmor %vm222, %vm223
  %v225 = vsel %vm224, %v217, %v221
  %v226 = vand.u32 2147483647, %v198
  %vm227 = vcmp.eq.f32.partialorder %v226, 8.507059e+37
  %v228 = vand.u32 %v198, 2147483648
  %v229 = vor.u32 1.1754944e-38, %v228
  %v230 = vsel %vm227, %v229, %v225
  %v231 = vmul.f32 1.0, %v230
  %v232 = vrcp.pop %v199
  %v233 = vmul.f32 %v199, %v232
  %v234 = vsub.f32 1.0, %v233
  %v235 = vmul.f32 %v232, %v234
  %v236 = vadd.f32 %v232, %v235
  %vm237 = vweird.f32 %v199
  %vm238 = vweird.f32 %v232
  %vm239 = vmor %vm237, %vm238
  %v240 = vsel %vm239, %v232, %v236
  %v241 = vand.u32 2147483647, %v199
  %vm242 = vcmp.eq.f32.partialorder %v241, 8.507059e+37
  %v243 = vand.u32 %v199, 2147483648
  %v244 = vor.u32 1.1754944e-38, %v243
  %v245 = vsel %vm242, %v244, %v240
  %v246 = vmul.f32 1.0, %v245
  %v247 = vrcp.pop %v200
  %v248 = vmul.f32 %v200, %v247
  %v249 = vsub.f32 1.0, %v248
  %v250 = vmul.f32 %v247, %v249
  %v251 = vadd.f32 %v247, %v250
  %vm252 = vweird.f32 %v200
  %vm253 = vweird.f32 %v247
  %vm254 = vmor %vm252, %vm253
  %v255 = vsel %vm254, %v247, %v251
  %v256 = vand.u32 2147483647, %v200
  %vm257 = vcmp.eq.f32.partialorder %v256, 8.507059e+37
  %v258 = vand.u32 %v200, 2147483648
  %v259 = vor.u32 1.1754944e-38, %v258
  %v260 = vsel %vm257, %v259, %v255
  %v261 = vmul.f32 1.0, %v260
  %v262 = vrcp.pop %v201
  %v263 = vmul.f32 %v201, %v262
  %v264 = vsub.f32 1.0, %v263
  %v265 = vmul.f32 %v262, %v264
  %v266 = vadd.f32 %v262, %v265
  %vm267 = vweird.f32 %v201
  %vm268 = vweird.f32 %v262
  %vm269 = vmor %vm267, %vm268
  %v270 = vsel %vm269, %v262, %v266
  %v271 = vand.u32 2147483647, %v201
  %vm272 = vcmp.eq.f32.partialorder %v271, 8.507059e+37
  %v273 = vand.u32 %v201, 2147483648
  %v274 = vor.u32 1.1754944e-38, %v273
  %v275 = vsel %vm272, %v274, %v270
  %v276 = vmul.f32 1.0, %v275
  %v277 = vmul.f32 %v142, %v216
  %v278 = vmul.f32 %v143, %v231
  %v279 = vmul.f32 %v144, %v246
  %v280 = vmul.f32 %v145, %v261
  %v281 = vmul.f32 %v146, %v276
  %v282 = vsub.f32 1.0, %v216
  %v283 = vsub.f32 1.0, %v231
  %v284 = vsub.f32 1.0, %v246
  %v285 = vsub.f32 1.0, %v261
  %v286 = vsub.f32 1.0, %v276
  %v287 = vmul.f32 %v82, %v282
  %v288 = vmul.f32 %v84, %v283
  %v289 = vmul.f32 %v87, %v284
  %v290 = vmul.f32 %v89, %v285
  %v291 = vmul.f32 %v92, %v286
  %v292 = vadd.f32 %v277, %v287
  %v293 = vadd.f32 %v278, %v288
  %v294 = vadd.f32 %v279, %v289
  %v295 = vadd.f32 %v280, %v290
  %v296 = vadd.f32 %v281, %v291
  %v297 = vpack.c.bf16 %v293, %v292
  %v298 = vpack.c.bf16 %v295, %v294
  %v299 = vpack.c.bf16 %v296, %v296
  %v300 = vld [vmem:[%s6] sm:$0xf]
  %v301 = vld [vmem:[%s6 + $0x4] sm:$0xf]
  %v302 = vld [vmem:[%s7] sm:$0x1]
  %v304 = vperm.slane %v302, 0
  %v308 = vunpack.c.l.b16 %v300
  %v309 = vunpack.c.l.b16 %v301
  %v310 = vpack.c.b16 %v309, %v308
  %v313 = vsel %vm62, %v297, 0
  %v316 = vsel %vm62, %v298, 0
  %v319 = vsel %vm62, %v299, 0
  %321 = vmatpush.bf16.msra.mxu0 0
  %322 = vmatpush.bf16.msra.mxu0 0
  %323 = vmatpush.bf16.msra.mxu0 0
  %324 = vmatpush.bf16.msra.mxu0 0
  %325 = vmatpush.bf16.msra.mxu0 0
  %326 = vmatpush.bf16.msra.mxu0 0
  %327 = vmatpush.bf16.msra.mxu0 0
  %328 = vmatpush.bf16.msra.mxu0 %v310
  %329 = vmatmul.bf16.gmra.mxu0 %v313
  %v330 = vpop.f32.mrf.mxu0
  %v331 = vadd.f32 %v304, %v330
  %v332 = vpop.f32.mrf.mxu0
  %v333 = vadd.f32 %v304, %v332
  %334 = vmatmul.bf16.gmra.mxu0 %v316
  %v335 = vpop.f32.mrf.mxu0
  %v336 = vadd.f32 %v304, %v335
  %v337 = vpop.f32.mrf.mxu0
  %v338 = vadd.f32 %v304, %v337
  %339 = vmatmul.bf16.gmra.mxu0 %v319
  %v340 = vpop.f32.mrf.mxu0
  %v341 = vadd.f32 %v304, %v340
  %v342 = vpop.f32.mrf.mxu0
  %343 = vdwg.mxu0
  %v344 = vmax.f32 %v331, 0.0
  %v345 = vmax.f32 %v333, 0.0
  %v346 = vmax.f32 %v336, 0.0
  %v347 = vmax.f32 %v338, 0.0
  %v348 = vmax.f32 %v341, 0.0
  %v349 = vld [vmem:[%s8] sm:$0xf]
  %v350 = vld [vmem:[%s8 + $0x4] sm:$0xf]
  %v351 = vld [vmem:[%s9] sm:$0x1]
  %v353 = vperm.slane %v351, 0
  %v357 = vunpack.c.l.b16 %v349
  %v358 = vunpack.c.l.b16 %v350
  %v359 = vpack.c.b16 %v358, %v357
  %361 = vmatpush.bf16.msra.mxu0 0
  %362 = vmatpush.bf16.msra.mxu0 0
  %363 = vmatpush.bf16.msra.mxu0 0
  %364 = vmatpush.bf16.msra.mxu0 0
  %365 = vmatpush.bf16.msra.mxu0 0
  %366 = vmatpush.bf16.msra.mxu0 0
  %367 = vmatpush.bf16.msra.mxu0 0
  %368 = vmatpush.bf16.msra.mxu0 %v359
  %369 = vmatmul.bf16.gmra.mxu0 %v313
  %v370 = vpop.f32.mrf.mxu0
  %v371 = vadd.f32 %v353, %v370
  %v372 = vpop.f32.mrf.mxu0
  %v373 = vadd.f32 %v353, %v372
  %374 = vmatmul.bf16.gmra.mxu0 %v316
  %v375 = vpop.f32.mrf.mxu0
  %v376 = vadd.f32 %v353, %v375
  %v377 = vpop.f32.mrf.mxu0
  %v378 = vadd.f32 %v353, %v377
  %379 = vmatmul.bf16.gmra.mxu0 %v319
  %v380 = vpop.f32.mrf.mxu0
  %v381 = vadd.f32 %v353, %v380
  %v382 = vpop.f32.mrf.mxu0
  %383 = vdwg.mxu0
  %v384 = vxor.u32 %v371, 2147483648
  %v385 = vxor.u32 %v373, 2147483648
  %v386 = vxor.u32 %v376, 2147483648
  %v387 = vxor.u32 %v378, 2147483648
  %v388 = vxor.u32 %v381, 2147483648
  %v389 = vmul.f32 %v384, 1.442695
  %v390 = vpow.pop %v389
  %v391 = vmul.f32 %v385, 1.442695
  %v392 = vpow.pop %v391
  %v393 = vmul.f32 %v386, 1.442695
  %v394 = vpow.pop %v393
  %v395 = vmul.f32 %v387, 1.442695
  %v396 = vpow.pop %v395
  %v397 = vmul.f32 %v388, 1.442695
  %v398 = vpow.pop %v397
  %v399 = vadd.f32 %v390, 1.0
  %v400 = vadd.f32 %v392, 1.0
  %v401 = vadd.f32 %v394, 1.0
  %v402 = vadd.f32 %v396, 1.0
  %v403 = vadd.f32 %v398, 1.0
  %v404 = vrcp.pop %v399
  %v405 = vmul.f32 %v399, %v404
  %v406 = vsub.f32 1.0, %v405
  %v407 = vmul.f32 %v404, %v406
  %v408 = vadd.f32 %v404, %v407
  %vm409 = vweird.f32 %v399
  %vm410 = vweird.f32 %v404
  %vm411 = vmor %vm409, %vm410
  %v412 = vsel %vm411, %v404, %v408
  %v413 = vand.u32 2147483647, %v399
  %vm414 = vcmp.eq.f32.partialorder %v413, 8.507059e+37
  %v415 = vand.u32 %v399, 2147483648
  %v416 = vor.u32 1.1754944e-38, %v415
  %v417 = vsel %vm414, %v416, %v412
  %v418 = vmul.f32 1.0, %v417
  %v419 = vrcp.pop %v400
  %v420 = vmul.f32 %v400, %v419
  %v421 = vsub.f32 1.0, %v420
  %v422 = vmul.f32 %v419, %v421
  %v423 = vadd.f32 %v419, %v422
  %vm424 = vweird.f32 %v400
  %vm425 = vweird.f32 %v419
  %vm426 = vmor %vm424, %vm425
  %v427 = vsel %vm426, %v419, %v423
  %v428 = vand.u32 2147483647, %v400
  %vm429 = vcmp.eq.f32.partialorder %v428, 8.507059e+37
  %v430 = vand.u32 %v400, 2147483648
  %v431 = vor.u32 1.1754944e-38, %v430
  %v432 = vsel %vm429, %v431, %v427
  %v433 = vmul.f32 1.0, %v432
  %v434 = vrcp.pop %v401
  %v435 = vmul.f32 %v401, %v434
  %v436 = vsub.f32 1.0, %v435
  %v437 = vmul.f32 %v434, %v436
  %v438 = vadd.f32 %v434, %v437
  %vm439 = vweird.f32 %v401
  %vm440 = vweird.f32 %v434
  %vm441 = vmor %vm439, %vm440
  %v442 = vsel %vm441, %v434, %v438
  %v443 = vand.u32 2147483647, %v401
  %vm444 = vcmp.eq.f32.partialorder %v443, 8.507059e+37
  %v445 = vand.u32 %v401, 2147483648
  %v446 = vor.u32 1.1754944e-38, %v445
  %v447 = vsel %vm444, %v446, %v442
  %v448 = vmul.f32 1.0, %v447
  %v449 = vrcp.pop %v402
  %v450 = vmul.f32 %v402, %v449
  %v451 = vsub.f32 1.0, %v450
  %v452 = vmul.f32 %v449, %v451
  %v453 = vadd.f32 %v449, %v452
  %vm454 = vweird.f32 %v402
  %vm455 = vweird.f32 %v449
  %vm456 = vmor %vm454, %vm455
  %v457 = vsel %vm456, %v449, %v453
  %v458 = vand.u32 2147483647, %v402
  %vm459 = vcmp.eq.f32.partialorder %v458, 8.507059e+37
  %v460 = vand.u32 %v402, 2147483648
  %v461 = vor.u32 1.1754944e-38, %v460
  %v462 = vsel %vm459, %v461, %v457
  %v463 = vmul.f32 1.0, %v462
  %v464 = vrcp.pop %v403
  %v465 = vmul.f32 %v403, %v464
  %v466 = vsub.f32 1.0, %v465
  %v467 = vmul.f32 %v464, %v466
  %v468 = vadd.f32 %v464, %v467
  %vm469 = vweird.f32 %v403
  %vm470 = vweird.f32 %v464
  %vm471 = vmor %vm469, %vm470
  %v472 = vsel %vm471, %v464, %v468
  %v473 = vand.u32 2147483647, %v403
  %vm474 = vcmp.eq.f32.partialorder %v473, 8.507059e+37
  %v475 = vand.u32 %v403, 2147483648
  %v476 = vor.u32 1.1754944e-38, %v475
  %v477 = vsel %vm474, %v476, %v472
  %v478 = vmul.f32 1.0, %v477
  %v479 = vmul.f32 %v344, %v418
  %v480 = vmul.f32 %v345, %v433
  %v481 = vmul.f32 %v346, %v448
  %v482 = vmul.f32 %v347, %v463
  %v483 = vmul.f32 %v348, %v478
  %v484 = vsub.f32 1.0, %v418
  %v485 = vsub.f32 1.0, %v433
  %v486 = vsub.f32 1.0, %v448
  %v487 = vsub.f32 1.0, %v463
  %v488 = vsub.f32 1.0, %v478
  %v489 = vmul.f32 %v292, %v484
  %v490 = vmul.f32 %v293, %v485
  %v491 = vmul.f32 %v294, %v486
  %v492 = vmul.f32 %v295, %v487
  %v493 = vmul.f32 %v296, %v488
  %v494 = vadd.f32 %v479, %v489
  %v495 = vadd.f32 %v480, %v490
  %v496 = vadd.f32 %v481, %v491
  %v497 = vadd.f32 %v482, %v492
  %v498 = vadd.f32 %v483, %v493
  %v499 = vpack.c.bf16 %v494, %v494
  %v500 = vpack.c.bf16 %v495, %v495
  %v501 = vpack.c.bf16 %v496, %v496
  %v502 = vpack.c.bf16 %v497, %v497
  %v503 = vpack.c.bf16 %v498, %v498
  %vm504 = vcmask 125952
  %505 = vst.msk [vmem:[%s10] sm:$0xf] %vm504, %v499
  %506 = vst.msk [vmem:[%s10 + $0x4] sm:$0xf] %vm504, %v500
  %507 = vst.msk [vmem:[%s10 + $0x8] sm:$0xf] %vm504, %v501
  %508 = vst.msk [vmem:[%s10 + $0xc] sm:$0xf] %vm504, %v502
  %509 = vst.msk [vmem:[%s10 + $0x10] sm:$0xf] %vm504, %v503
  // Predicated region
  $region42: #{bidaf_forward.13} parent=0 // pred_check
    _
  $region43: #{bidaf_forward.13} parent=0 // pred_check_branch
    %511 = sbr.rel (0) target = $region45
  $region44: #{bidaf_forward.13} parent=0 // pred_region
    _
  $region45: #{bidaf_forward.13} parent=0 // pred_fallthru
    _
  // Predicated region
  $region46: #{bidaf_forward.13} parent=0 // pred_check
    _
  $region47: #{bidaf_forward.13} parent=0 // pred_check_branch
    %513 = sbr.rel (0) target = $region49
  $region48: #{bidaf_forward.13} parent=0 // pred_region
    _
  $region49: #{bidaf_forward.13} parent=0 // pred_fallthru
    _

// kernel: bidaf_forward.16
$region0: #{bidaf_forward.16}
  #allocation0 [shape = 'u32[]', space=smem, size = 0x4, offset = 0x4, fixed_abs, tag = 'smem constant byte address 0x4 - core index']
  #allocation1 [shape = 'u32[72,128]{1,0:T(1,128)}', space=vmem, size = 0x9000, scoped, tag = 'internal scratch']
  %s0 = inlined_call_operand.vmem [shape: bf16[16,16], index: 0, kind: input, shape index: {}]
  %s1 = inlined_call_operand.vmem [shape: bf16[16,128], index: 1, kind: input, shape index: {}]
  %s2 = inlined_call_operand.vmem [shape: f32[1,128], index: 2, kind: input, shape index: {}]
  %s3 = inlined_call_operand.vmem [shape: f32[16,128], index: 3, kind: output, shape index: {}]
  %s4 = sld [smem:[#allocation0]]
  $region22: #{bidaf_forward.16} parent=0
    _
  %s6 = ssub.s32 1, %s4
  %s7 = scalar_select 0, %s6, %s4
  // Predicated region
  $region2: #{bidaf_forward.16} parent=0 // pred_check
    _
  $region3: #{bidaf_forward.16} parent=0 // pred_check_branch
    %9 = sbr.rel (0) target = $region5
  $region4: #{bidaf_forward.16} parent=0 // pred_region
    _
  $region5: #{bidaf_forward.16} parent=0 // pred_fallthru
    _
  // Predicated region
  $region6: #{bidaf_forward.16} parent=0 // pred_check
    _
  $region7: #{bidaf_forward.16} parent=0 // pred_check_branch
    %11 = sbr.rel (0) target = $region9
  $region8: #{bidaf_forward.16} parent=0 // pred_region
    _
  $region9: #{bidaf_forward.16} parent=0 // pred_fallthru
    _
  // Predicated region
  $region10: #{bidaf_forward.16} parent=0 // pred_check
    _
  $region11: #{bidaf_forward.16} parent=0 // pred_check_branch
    %13 = sbr.rel (0) target = $region13
  $region12: #{bidaf_forward.16} parent=0 // pred_region
    _
  $region13: #{bidaf_forward.16} parent=0 // pred_fallthru
    _
  %v15 = vld [vmem:[%s0] sm:$0xf]
  %v16 = vld [vmem:[%s0 + $0x4] sm:$0xf]
  %v17 = vld [vmem:[%s1] sm:$0xf]
  %v18 = vld [vmem:[%s1 + $0x4] sm:$0xf]
  %v19 = vld [vmem:[%s2] sm:$0x1]
  %v21 = vperm.slane %v19, 0
  %v25 = vunpack.c.l.b16 %v15
  %v26 = vunpack.c.l.b16 %v16
  %v27 = vpack.c.b16 %v26, %v25
  %v30 = vunpack.c.l.b16 %v17
  %v31 = vunpack.c.l.b16 %v18
  %v32 = vpack.c.b16 %v31, %v30
  %vm34 = vcmask 130048
  %v36 = vsel %vm34, %v27, 0
  %38 = vmatpush.bf16.msra.mxu0 0
  %39 = vmatpush.bf16.msra.mxu0 0
  %40 = vmatpush.bf16.msra.mxu0 0
  %41 = vmatpush.bf16.msra.mxu0 0
  %42 = vmatpush.bf16.msra.mxu0 0
  %43 = vmatpush.bf16.msra.mxu0 0
  %44 = vmatpush.bf16.msra.mxu0 0
  %45 = vmatpush.bf16.msra.mxu0 %v32
  %46 = vmatmul.bf16.gmra.mxu0 %v36
  %v47 = vpop.f32.mrf.mxu0
  %v48 = vadd.f32 %v21, %v47
  %v49 = vpop.f32.mrf.mxu0
  %v50 = vadd.f32 %v21, %v49
  %51 = vdwg.mxu0
  %52 = vst [vmem:[%s3] sm:$0xff] %v48
  %53 = vst [vmem:[%s3 + $0x8] sm:$0xff] %v50
  // Predicated region
  $region14: #{bidaf_forward.16} parent=0 // pred_check
    _
  $region15: #{bidaf_forward.16} parent=0 // pred_check_branch
    %55 = sbr.rel (0) target = $region17
  $region16: #{bidaf_forward.16} parent=0 // pred_region
    _
  $region17: #{bidaf_forward.16} parent=0 // pred_fallthru
    _
  // Predicated region
  $region18: #{bidaf_forward.16} parent=0 // pred_check
    _
  $region19: #{bidaf_forward.16} parent=0 // pred_check_branch
    %57 = sbr.rel (0) target = $region21
  $region20: #{bidaf_forward.16} parent=0 // pred_region
    _
  $region21: #{bidaf_forward.16} parent=0 // pred_fallthru
    _

// kernel: bidaf_forward.17
$region0: #{bidaf_forward.17}
  #allocation0 [shape = 'u32[]', space=smem, size = 0x4, offset = 0x4, fixed_abs, tag = 'smem constant byte address 0x4 - core index']
  #allocation1 [shape = 'u32[72,128]{1,0:T(1,128)}', space=vmem, size = 0x9000, scoped, tag = 'internal scratch']
  %s0 = inlined_call_operand.vmem [shape: f32[2,8,2,64], index: 0, kind: input, shape index: {}]
  %s1 = inlined_call_operand.vmem [shape: f32[2,16,64], index: 1, kind: input, shape index: {}]
  %s2 = inlined_call_operand.vmem [shape: f32[2,8,2,16], index: 2, kind: output, shape index: {}]
  %s3 = sld [smem:[#allocation0]]
  $region48: #{bidaf_forward.17} parent=0
    _
  %s5 = ssub.s32 1, %s3
  %s6 = scalar_select 0, %s5, %s3
  loop: start=0, step=1, limit=4
  $region2: #{bidaf_forward.17} parent=0 // loop_pre_header
    _
  $region3: #{bidaf_forward.17} parent=0 // loop_header
    %s8 = sphi 0, %s12
    %p9 = scmp.ge.s32.totalorder %s8, 4
    %s18 = sphi 0, %s20
    %s21 = sphi 0, %s18
    %s22 = sphi 0, %s21
    %s38 = sphi 0, %s22
    %s44 = sphi 0, %s46
    %s47 = sphi 0, %s44
    %s48 = sphi 0, %s47
    %s64 = sphi 0, %s48
    %s70 = sphi 0, %s72
    %s73 = sphi 0, %s70
    %s74 = sphi 0, %s73
    %s90 = sphi 0, %s74
  $region4: #{bidaf_forward.17} parent=0 // loop_header_branch
    %11 = sbr.rel (%p9) target = $region8
  $region5: #{bidaf_forward.17} parent=0 // loop_body
    %s13 = ssub.s32 %s8, 1
    %s14 = ssub.s32 %s8, 2
    %s15 = sadd.s32 %s8, 1
    %s16 = ssub.s32 %s8, %s15
    %p17 = scmp.eq.s32.totalorder %s16, 0
    %s19 = sadd.s32 %s18, 1
    %s20 = scalar_select %p17, %s18, %s19
    %p23 = pneg %p17
    %p24 = scmp.eq.s32.totalorder %s8, 1
    %p25 = por %p23, %p24
    %p26 = scmp.ne.s32.totalorder %s18, %s21
    %p27 = scmp.eq.s32.totalorder %s8, 0
    %p28 = por %p26, %p27
    %p29 = scmp.ne.s32.totalorder %s18, %s21
    %p30 = scmp.eq.s32.totalorder %s13, 1
    %p31 = por %p29, %p30
    %p32 = scmp.ne.s32.totalorder %s21, %s22
    %p33 = scmp.eq.s32.totalorder %s13, 0
    %p34 = por %p32, %p33
    %p35 = scmp.ne.s32.totalorder %s21, %s22
    %p36 = scmp.eq.s32.totalorder %s14, 1
    %p37 = por %p35, %p36
    %p39 = scmp.ne.s32.totalorder %s22, %s38
    %p40 = scmp.eq.s32.totalorder %s14, 0
    %p41 = por %p39, %p40
    %s42 = ssub.s32 %s8, %s15
    %p43 = scmp.eq.s32.totalorder %s42, 0
    %s45 = sadd.s32 %s44, 1
    %s46 = scalar_select %p43, %s44, %s45
    %p49 = pneg %p43
    %p50 = scmp.eq.s32.totalorder %s8, 1
    %p51 = por %p49, %p50
    %p52 = scmp.ne.s32.totalorder %s44, %s47
    %p53 = scmp.eq.s32.totalorder %s8, 0
    %p54 = por %p52, %p53
    %p55 = scmp.ne.s32.totalorder %s44, %s47
    %p56 = scmp.eq.s32.totalorder %s13, 1
    %p57 = por %p55, %p56
    %p58 = scmp.ne.s32.totalorder %s47, %s48
    %p59 = scmp.eq.s32.totalorder %s13, 0
    %p60 = por %p58, %p59
    %p61 = scmp.ne.s32.totalorder %s47, %s48
    %p62 = scmp.eq.s32.totalorder %s14, 1
    %p63 = por %p61, %p62
    %p65 = scmp.ne.s32.totalorder %s48, %s64
    %p66 = scmp.eq.s32.totalorder %s14, 0
    %p67 = por %p65, %p66
    %s68 = ssub.s32 %s8, %s15
    %p69 = scmp.eq.s32.totalorder %s68, 0
    %s71 = sadd.s32 %s70, 1
    %s72 = scalar_select %p69, %s70, %s71
    %p75 = pneg %p69
    %p76 = scmp.eq.s32.totalorder %s8, 1
    %p77 = por %p75, %p76
    %p78 = scmp.ne.s32.totalorder %s70, %s73
    %p79 = scmp.eq.s32.totalorder %s8, 0
    %p80 = por %p78, %p79
    %p81 = scmp.ne.s32.totalorder %s70, %s73
    %p82 = scmp.eq.s32.totalorder %s13, 1
    %p83 = por %p81, %p82
    %p84 = scmp.ne.s32.totalorder %s73, %s74
    %p85 = scmp.eq.s32.totalorder %s13, 0
    %p86 = por %p84, %p85
    %p87 = scmp.ne.s32.totalorder %s73, %s74
    %p88 = scmp.eq.s32.totalorder %s14, 1
    %p89 = por %p87, %p88
    %p91 = scmp.ne.s32.totalorder %s74, %s90
    %p92 = scmp.eq.s32.totalorder %s14, 0
    %p93 = por %p91, %p92
    %p94 = scmp.le.s32.totalorder 1, %s8
    %p95 = scmp.lt.s32.totalorder %s8, 3
    %p96 = pnand %p94, %p95
    %p97 = pneg %p96
    // Predicated region
    $region9: #{bidaf_forward.17} parent=5 // pred_check
      _
    $region10: #{bidaf_forward.17} parent=5 // pred_check_branch
      %99 = sbr.rel (%p96) target = $region12
    $region11: #{bidaf_forward.17} parent=5 // pred_region
      %s100 = ssub.s32 %s8, 1
    $region12: #{bidaf_forward.17} parent=5 // pred_fallthru
      _
    %p101 = scmp.lt.s32.totalorder %s8, 2
    // Predicated region
    $region13: #{bidaf_forward.17} parent=5 // pred_check
      %p102 = pneg %p101
    $region14: #{bidaf_forward.17} parent=5 // pred_check_branch
      %104 = sbr.rel (%p102) target = $region16
    $region15: #{bidaf_forward.17} parent=5 // pred_region
      // Predicated region
      $region17: #{bidaf_forward.17} parent=15 // pred_check
        %p105 = pneg %p28
      $region18: #{bidaf_forward.17} parent=15 // pred_check_branch
        %107 = sbr.rel (%p105) target = $region20
      $region19: #{bidaf_forward.17} parent=15 // pred_region
        %p108 = scmp.lt.s32.totalorder %s8, 1
        %s109 = scalar_select %p108, %s8, 1
        %s110 = smul.addr %s109, 8
        %s111 = smul.addr %s110, 2
        %s112 = scalar_lea.vmem %s0, %s111
      $region20: #{bidaf_forward.17} parent=15 // pred_fallthru
        _
      // Predicated region
      $region21: #{bidaf_forward.17} parent=15 // pred_check
        %p113 = pneg %p54
      $region22: #{bidaf_forward.17} parent=15 // pred_check_branch
        %115 = sbr.rel (%p113) target = $region24
      $region23: #{bidaf_forward.17} parent=15 // pred_region
        %p116 = scmp.lt.s32.totalorder %s8, 1
        %s117 = scalar_select %p116, %s8, 1
        %s118 = smul.addr %s117, 2
        %s119 = smul.addr %s118, 8
        %s120 = scalar_lea.vmem %s1, %s119
      $region24: #{bidaf_forward.17} parent=15 // pred_fallthru
        _
    $region16: #{bidaf_forward.17} parent=5 // pred_fallthru
      _
    %p121 = scmp.le.s32.totalorder 1, %s8
    %p122 = scmp.lt.s32.totalorder %s8, 3
    %p123 = pnand %p121, %p122
    %p124 = pneg %p123
    // Predicated region
    $region25: #{bidaf_forward.17} parent=5 // pred_check
      _
    $region26: #{bidaf_forward.17} parent=5 // pred_check_branch
      %126 = sbr.rel (%p123) target = $region28
    $region27: #{bidaf_forward.17} parent=5 // pred_region
      %s127 = ssub.s32 %s8, 1
      %p128 = scmp.lt.s32.totalorder %s13, 1
      %s129 = scalar_select %p128, %s13, 1
      %s130 = smul.addr %s129, 8
      %s131 = smul.addr %s130, 2
      %s132 = scalar_lea.vmem %s0, %s131
      %p133 = pneg %p34
      %p134 = pneg %p31
      %p135 = scmp.lt.s32.totalorder %s13, 1
      %s136 = scalar_select %p135, %s13, 1
      %s137 = smul.addr %s136, 2
      %s138 = smul.addr %s137, 8
      %s139 = scalar_lea.vmem %s1, %s138
      %p140 = pneg %p60
      %p141 = pneg %p57
      %p142 = pneg %p86
      %p143 = pneg %p83
      %p144 = scmp.lt.s32.totalorder %s13, 1
      %s145 = scalar_select %p144, %s13, 1
      %s146 = smul.addr %s145, 8
      %s147 = smul.addr %s146, 2
      %s148 = scalar_lea.vmem %s2, %s147
      %p149 = scmp.lt.s32.totalorder %s13, 1
      %s150 = scalar_select %p149, %s13, 1
      %s151 = smul.addr %s150, 8
      %s152 = smul.addr %s151, 2
      %s153 = scalar_lea.vmem %s0, %s152
      %p154 = scmp.lt.s32.totalorder %s13, 1
      %s155 = scalar_select %p154, %s13, 1
      %s156 = smul.addr %s155, 2
      %s157 = smul.addr %s156, 8
      %s158 = scalar_lea.vmem %s1, %s157
      %p159 = scmp.lt.s32.totalorder %s13, 1
      %s160 = scalar_select %p159, %s13, 1
      %s161 = smul.addr %s160, 8
      %s162 = smul.addr %s161, 2
      %s163 = scalar_lea.vmem %s2, %s162
      %p164 = scmp.eq.s32.totalorder %s13, 1
      loop: start=0, step=1, limit=8
      $region29: #{bidaf_forward.17} parent=27 // loop_pre_header
        _
      $region30: #{bidaf_forward.17} parent=27 // loop_header
        %s166 = sphi 0, %s170
        %p167 = scmp.ge.s32.totalorder %s166, 8
        %v171 = vphi 0.0, %v243
        %v172 = vphi 0.0, %v237
      $region31: #{bidaf_forward.17} parent=27 // loop_header_branch
        %169 = sbr.rel (%p167) target = $region35
      $region32: #{bidaf_forward.17} parent=27 // loop_body
        %s173 = ssub.s32 7, %s166
        %s174 = scalar_select %p164, %s173, %s166
        %s175 = smul.u32 %s174, 2
        %s176 = scalar_lea.vmem %s153, %s175
        %v177 = vld [vmem:[%s176] sm:$0x3]
        %v178 = vld [vmem:[%s158] sm:$0xff]
        %v179 = vld [vmem:[%s158 + $0x8] sm:$0xff]
        %181 = vrot.lane.b32.xlu0 %v171, 80
        %v182 = vpop.permute.xlu0 %181
        %vm183 = vcmask 130048
        %v184 = vsel %vm183, %v182, 0
        %186 = vmatpush.msra.mxu0 0.0
        %187 = vmatpush.msra.mxu0 0.0
        %188 = vmatpush.msra.mxu0 0.0
        %189 = vmatpush.msra.mxu0 0.0
        %190 = vmatpush.msra.mxu0 0.0
        %191 = vmatpush.msra.mxu0 0.0
        %192 = vmatpush.msra.mxu0 0.0
        %193 = vmatpush.msra.mxu0 0.0
        %194 = vmatpush.msra.mxu0 0.0
        %195 = vmatpush.msra.mxu0 0.0
        %196 = vmatpush.msra.mxu0 0.0
        %197 = vmatpush.msra.mxu0 0.0
        %198 = vmatpush.msra.mxu0 0.0
        %199 = vmatpush.msra.mxu0 0.0
        %200 = vmatpush.msra.mxu0 %v179
        %201 = vmatpush.msra.mxu0 %v178
        %202 = vmatmul.f32.gmra.mxu0 %v184
        %v203 = vpop.f32.mrf.mxu0
        %v204 = vadd.f32 0.0, %v203
        %205 = vdwg.mxu0
        %v206 = vadd.f32 %v177, %v204
        %v207 = vxor.u32 %v206, 2147483648
        %v208 = vmul.f32 %v207, 1.442695
        %v209 = vpow.pop %v208
        %v210 = vadd.f32 %v209, 1.0
        %v211 = vrcp.pop %v210
        %v212 = vmul.f32 %v210, %v211
        %v213 = vsub.f32 1.0, %v212
        %v214 = vmul.f32 %v211, %v213
        %v215 = vadd.f32 %v211, %v214
        %vm216 = vweird.f32 %v210
        %vm217 = vweird.f32 %v211
        %vm218 = vmor %vm216, %vm217
        %v219 = vsel %vm218, %v211, %v215
        %v220 = vand.u32 2147483647, %v210
        %vm221 = vcmp.eq.f32.partialorder %v220, 8.507059e+37
        %v222 = vand.u32 %v210, 2147483648
        %v223 = vor.u32 1.1754944e-38, %v222
        %v224 = vsel %vm221, %v223, %v219
        %v225 = vmul.f32 1.0, %v224
        %v226 = vtanh.pop %v206
        %v227 = vmul.f32 %v225, %v172
        %229 = vrot.lane.b32.xlu0 %v226, 96
        %v230 = vpop.permute.xlu0 %229
        %v232 = vmul.f32 %v225, %v230
        %234 = vrot.lane.b32.xlu0 %v232, 16
        %v235 = vpop.permute.xlu0 %234
        %v237 = vadd.f32 %v227, %v235
        %v238 = vtanh.pop %v237
        %240 = vrot.lane.b32.xlu0 %v238, 32
        %v241 = vpop.permute.xlu0 %240
        %v243 = vmul.f32 %v225, %v241
        %245 = vrot.lane.b32.xlu0 %v243, 80
        %v246 = vpop.permute.xlu0 %245
        %s248 = scalar_lea.vmem %s163, %s175
        %vm249 = vcmask 123904
        %250 = vst.msk [vmem:[%s248] sm:$0x3] %vm249, %v246
      $region33: #{bidaf_forward.17} parent=27 // loop_footer
        %s170 = sadd.s32 1, %s166
      $region34: #{bidaf_forward.17} parent=27 // loop_footer_branch
        %165 = sbr.rel target = $region30
      $region35: #{bidaf_forward.17} parent=27 // loop_exit
        _
      %p251 = scmp.lt.s32.totalorder %s13, 1
      %s252 = scalar_select %p251, %s13, 1
      %s253 = smul.addr %s252, 8
      %s254 = smul.addr %s253, 2
      %s255 = scalar_lea.vmem %s2, %s254
      // Predicated region
      $region36: #{bidaf_forward.17} parent=27 // pred_check
        %p256 = pneg %p83
      $region37: #{bidaf_forward.17} parent=27 // pred_check_branch
        %258 = sbr.rel (%p256) target = $region39
      $region38: #{bidaf_forward.17} parent=27 // pred_region
        _
      $region39: #{bidaf_forward.17} parent=27 // pred_fallthru
        _
    $region28: #{bidaf_forward.17} parent=5 // pred_fallthru
      _
    %p259 = scmp.le.s32.totalorder 2, %s8
    // Predicated region
    $region40: #{bidaf_forward.17} parent=5 // pred_check
      %p260 = pneg %p259
    $region41: #{bidaf_forward.17} parent=5 // pred_check_branch
      %262 = sbr.rel (%p260) target = $region43
    $region42: #{bidaf_forward.17} parent=5 // pred_region
      %s263 = ssub.s32 %s8, 2
      // Predicated region
      $region44: #{bidaf_forward.17} parent=42 // pred_check
        %p264 = pneg %p89
      $region45: #{bidaf_forward.17} parent=42 // pred_check_branch
        %266 = sbr.rel (%p264) target = $region47
      $region46: #{bidaf_forward.17} parent=42 // pred_region
        %p267 = scmp.lt.s32.totalorder %s14, 1
        %s268 = scalar_select %p267, %s14, 1
        %s269 = smul.addr %s268, 8
        %s270 = smul.addr %s269, 2
        %s271 = scalar_lea.vmem %s2, %s270
      $region47: #{bidaf_forward.17} parent=42 // pred_fallthru
        _
    $region43: #{bidaf_forward.17} parent=5 // pred_fallthru
      _
  $region6: #{bidaf_forward.17} parent=0 // loop_footer
    %s12 = sadd.s32 1, %s8
  $region7: #{bidaf_forward.17} parent=0 // loop_footer_branch
    %7 = sbr.rel target = $region3
  $region8: #{bidaf_forward.17} parent=0 // loop_exit
    _

// kernel: bidaf_forward.18
$region0: #{bidaf_forward.18}
  #allocation0 [shape = 'u32[]', space=smem, size = 0x4, offset = 0x4, fixed_abs, tag = 'smem constant byte address 0x4 - core index']
  #allocation1 [shape = 'u32[72,128]{1,0:T(1,128)}', space=vmem, size = 0x9000, scoped, tag = 'internal scratch']
  #allocation2 [shape = 'f32[1,1]{1,0:T(1,128)S(1)}', space=vmem, size = 0x200, scoped, tag = 'scoped memory for bidaf_forward.18']
  %s0 = inlined_call_operand.vmem [shape: bf16[2,12,32], index: 0, kind: input, shape index: {}]
  %s1 = inlined_call_operand.vmem [shape: bf16[2,8,32], index: 1, kind: input, shape index: {}]
  %s2 = inlined_call_operand.vmem [shape: f32[2,12,1], index: 2, kind: input, shape index: {}]
  %s3 = inlined_call_operand.vmem [shape: f32[2,1,8], index: 3, kind: input, shape index: {}]
  %s4 = inlined_call_operand.vmem [shape: f32[1,32], index: 4, kind: input, shape index: {}]
  %s5 = inlined_call_operand.vmem [shape: f32[1,32], index: 5, kind: input, shape index: {}]
  %s6 = inlined_call_operand.vmem [shape: f32[1,32], index: 6, kind: input, shape index: {}]
  %s7 = inlined_call_operand.<no memory space> [shape: f32[1,1], index: 7, kind: input, shape index: {}]
  %s8 = inlined_call_operand.vmem [shape: bf16[2,12,128], index: 8, kind: output, shape index: {}]
  %s9 = sld [smem:[#allocation0]]
  $region65: #{bidaf_forward.18} parent=0
    _
  %s11 = ssub.s32 1, %s9
  %s12 = scalar_select 0, %s11, %s9
  %v13 = vstv %s7
  %14 = vst [vmem:[#allocation2] sm:$0x1] %v13
  loop: start=0, step=1, limit=4
  $region2: #{bidaf_forward.18} parent=0 // loop_pre_header
    _
  $region3: #{bidaf_forward.18} parent=0 // loop_header
    %s16 = sphi 0, %s20
    %p17 = scmp.ge.s32.totalorder %s16, 4
    %s26 = sphi 0, %s28
    %s29 = sphi 0, %s26
    %s30 = sphi 0, %s29
    %s46 = sphi 0, %s30
    %s52 = sphi 0, %s54
    %s55 = sphi 0, %s52
    %s56 = sphi 0, %s55
    %s72 = sphi 0, %s56
    %s78 = sphi 0, %s80
    %s81 = sphi 0, %s78
    %s82 = sphi 0, %s81
    %s98 = sphi 0, %s82
    %s104 = sphi 0, %s106
    %s107 = sphi 0, %s104
    %s108 = sphi 0, %s107
    %s124 = sphi 0, %s108
    %s128 = sphi 0, %s128
    %s130 = sphi 0, %s128
    %s131 = sphi 0, %s130
    %s145 = sphi 0, %s131
    %s149 = sphi 0, %s149
    %s151 = sphi 0, %s149
    %s152 = sphi 0, %s151
    %s166 = sphi 0, %s152
    %s170 = sphi 0, %s170
    %s172 = sphi 0, %s170
    %s173 = sphi 0, %s172
    %s187 = sphi 0, %s173
    %s191 = sphi 0, %s191
    %s193 = sphi 0, %s191
    %s194 = sphi 0, %s193
    %s208 = sphi 0, %s194
    %s214 = sphi 0, %s216
    %s217 = sphi 0, %s214
    %s218 = sphi 0, %s217
    %s234 = sphi 0, %s218
  $region4: #{bidaf_forward.18} parent=0 // loop_header_branch
    %19 = sbr.rel (%p17) target = $region8
  $region5: #{bidaf_forward.18} parent=0 // loop_body
    %s21 = ssub.s32 %s16, 1
    %s22 = ssub.s32 %s16, 2
    %s23 = sadd.s32 %s16, 1
    %s24 = ssub.s32 %s16, %s23
    %p25 = scmp.eq.s32.totalorder %s24, 0
    %s27 = sadd.s32 %s26, 1
    %s28 = scalar_select %p25, %s26, %s27
    %p31 = pneg %p25
    %p32 = scmp.eq.s32.totalorder %s16, 1
    %p33 = por %p31, %p32
    %p34 = scmp.ne.s32.totalorder %s26, %s29
    %p35 = scmp.eq.s32.totalorder %s16, 0
    %p36 = por %p34, %p35
    %p37 = scmp.ne.s32.totalorder %s26, %s29
    %p38 = scmp.eq.s32.totalorder %s21, 1
    %p39 = por %p37, %p38
    %p40 = scmp.ne.s32.totalorder %s29, %s30
    %p41 = scmp.eq.s32.totalorder %s21, 0
    %p42 = por %p40, %p41
    %p43 = scmp.ne.s32.totalorder %s29, %s30
    %p44 = scmp.eq.s32.totalorder %s22, 1
    %p45 = por %p43, %p44
    %p47 = scmp.ne.s32.totalorder %s30, %s46
    %p48 = scmp.eq.s32.totalorder %s22, 0
    %p49 = por %p47, %p48
    %s50 = ssub.s32 %s16, %s23
    %p51 = scmp.eq.s32.totalorder %s50, 0
    %s53 = sadd.s32 %s52, 1
    %s54 = scalar_select %p51, %s52, %s53
    %p57 = pneg %p51
    %p58 = scmp.eq.s32.totalorder %s16, 1
    %p59 = por %p57, %p58
    %p60 = scmp.ne.s32.totalorder %s52, %s55
    %p61 = scmp.eq.s32.totalorder %s16, 0
    %p62 = por %p60, %p61
    %p63 = scmp.ne.s32.totalorder %s52, %s55
    %p64 = scmp.eq.s32.totalorder %s21, 1
    %p65 = por %p63, %p64
    %p66 = scmp.ne.s32.totalorder %s55, %s56
    %p67 = scmp.eq.s32.totalorder %s21, 0
    %p68 = por %p66, %p67
    %p69 = scmp.ne.s32.totalorder %s55, %s56
    %p70 = scmp.eq.s32.totalorder %s22, 1
    %p71 = por %p69, %p70
    %p73 = scmp.ne.s32.totalorder %s56, %s72
    %p74 = scmp.eq.s32.totalorder %s22, 0
    %p75 = por %p73, %p74
    %s76 = ssub.s32 %s16, %s23
    %p77 = scmp.eq.s32.totalorder %s76, 0
    %s79 = sadd.s32 %s78, 1
    %s80 = scalar_select %p77, %s78, %s79
    %p83 = pneg %p77
    %p84 = scmp.eq.s32.totalorder %s16, 1
    %p85 = por %p83, %p84
    %p86 = scmp.ne.s32.totalorder %s78, %s81
    %p87 = scmp.eq.s32.totalorder %s16, 0
    %p88 = por %p86, %p87
    %p89 = scmp.ne.s32.totalorder %s78, %s81
    %p90 = scmp.eq.s32.totalorder %s21, 1
    %p91 = por %p89, %p90
    %p92 = scmp.ne.s32.totalorder %s81, %s82
    %p93 = scmp.eq.s32.totalorder %s21, 0
    %p94 = por %p92, %p93
    %p95 = scmp.ne.s32.totalorder %s81, %s82
    %p96 = scmp.eq.s32.totalorder %s22, 1
    %p97 = por %p95, %p96
    %p99 = scmp.ne.s32.totalorder %s82, %s98
    %p100 = scmp.eq.s32.totalorder %s22, 0
    %p101 = por %p99, %p100
    %s102 = ssub.s32 %s16, %s23
    %p103 = scmp.eq.s32.totalorder %s102, 0
    %s105 = sadd.s32 %s104, 1
    %s106 = scalar_select %p103, %s104, %s105
    %p109 = pneg %p103
    %p110 = scmp.eq.s32.totalorder %s16, 1
    %p111 = por %p109, %p110
    %p112 = scmp.ne.s32.totalorder %s104, %s107
    %p113 = scmp.eq.s32.totalorder %s16, 0
    %p114 = por %p112, %p113
    %p115 = scmp.ne.s32.totalorder %s104, %s107
    %p116 = scmp.eq.s32.totalorder %s21, 1
    %p117 = por %p115, %p116
    %p118 = scmp.ne.s32.totalorder %s107, %s108
    %p119 = scmp.eq.s32.totalorder %s21, 0
    %p120 = por %p118, %p119
    %p121 = scmp.ne.s32.totalorder %s107, %s108
    %p122 = scmp.eq.s32.totalorder %s22, 1
    %p123 = por %p121, %p122
    %p125 = scmp.ne.s32.totalorder %s108, %s124
    %p126 = scmp.eq.s32.totalorder %s22, 0
    %p127 = por %p125, %p126
    %s129 = sadd.s32 %s128, 1
    %p132 = scmp.eq.s32.totalorder %s16, 1
    %p133 = scmp.ne.s32.totalorder %s128, %s130
    %p134 = scmp.eq.s32.totalorder %s16, 0
    %p135 = por %p133, %p134
    %p136 = scmp.ne.s32.totalorder %s128, %s130
    %p137 = scmp.eq.s32.totalorder %s21, 1
    %p138 = por %p136, %p137
    %p139 = scmp.ne.s32.totalorder %s130, %s131
    %p140 = scmp.eq.s32.totalorder %s21, 0
    %p141 = por %p139, %p140
    %p142 = scmp.ne.s32.totalorder %s130, %s131
    %p143 = scmp.eq.s32.totalorder %s22, 1
    %p144 = por %p142, %p143
    %p146 = scmp.ne.s32.totalorder %s131, %s145
    %p147 = scmp.eq.s32.totalorder %s22, 0
    %p148 = por %p146, %p147
    %s150 = sadd.s32 %s149, 1
    %p153 = scmp.eq.s32.totalorder %s16, 1
    %p154 = scmp.ne.s32.totalorder %s149, %s151
    %p155 = scmp.eq.s32.totalorder %s16, 0
    %p156 = por %p154, %p155
    %p157 = scmp.ne.s32.totalorder %s149, %s151
    %p158 = scmp.eq.s32.totalorder %s21, 1
    %p159 = por %p157, %p158
    %p160 = scmp.ne.s32.totalorder %s151, %s152
    %p161 = scmp.eq.s32.totalorder %s21, 0
    %p162 = por %p160, %p161
    %p163 = scmp.ne.s32.totalorder %s151, %s152
    %p164 = scmp.eq.s32.totalorder %s22, 1
    %p165 = por %p163, %p164
    %p167 = scmp.ne.s32.totalorder %s152, %s166
    %p168 = scmp.eq.s32.totalorder %s22, 0
    %p169 = por %p167, %p168
    %s171 = sadd.s32 %s170, 1
    %p174 = scmp.eq.s32.totalorder %s16, 1
    %p175 = scmp.ne.s32.totalorder %s170, %s172
    %p176 = scmp.eq.s32.totalorder %s16, 0
    %p177 = por %p175, %p176
    %p178 = scmp.ne.s32.totalorder %s170, %s172
    %p179 = scmp.eq.s32.totalorder %s21, 1
    %p180 = por %p178, %p179
    %p181 = scmp.ne.s32.totalorder %s172, %s173
    %p182 = scmp.eq.s32.totalorder %s21, 0
    %p183 = por %p181, %p182
    %p184 = scmp.ne.s32.totalorder %s172, %s173
    %p185 = scmp.eq.s32.totalorder %s22, 1
    %p186 = por %p184, %p185
    %p188 = scmp.ne.s32.totalorder %s173, %s187
    %p189 = scmp.eq.s32.totalorder %s22, 0
    %p190 = por %p188, %p189
    %s192 = sadd.s32 %s191, 1
    %p195 = scmp.eq.s32.totalorder %s16, 1
    %p196 = scmp.ne.s32.totalorder %s191, %s193
    %p197 = scmp.eq.s32.totalorder %s16, 0
    %p198 = por %p196, %p197
    %p199 = scmp.ne.s32.totalorder %s191, %s193
    %p200 = scmp.eq.s32.totalorder %s21, 1
    %p201 = por %p199, %p200
    %p202 = scmp.ne.s32.totalorder %s193, %s194
    %p203 = scmp.eq.s32.totalorder %s21, 0
    %p204 = por %p202, %p203
    %p205 = scmp.ne.s32.totalorder %s193, %s194
    %p206 = scmp.eq.s32.totalorder %s22, 1
    %p207 = por %p205, %p206
    %p209 = scmp.ne.s32.totalorder %s194, %s208
    %p210 = scmp.eq.s32.totalorder %s22, 0
    %p211 = por %p209, %p210
    %s212 = ssub.s32 %s16, %s23
    %p213 = scmp.eq.s32.totalorder %s212, 0
    %s215 = sadd.s32 %s214, 1
    %s216 = scalar_select %p213, %s214, %s215
    %p219 = pneg %p213
    %p220 = scmp.eq.s32.totalorder %s16, 1
    %p221 = por %p219, %p220
    %p222 = scmp.ne.s32.totalorder %s214, %s217
    %p223 = scmp.eq.s32.totalorder %s16, 0
    %p224 = por %p222, %p223
    %p225 = scmp.ne.s32.totalorder %s214, %s217
    %p226 = scmp.eq.s32.totalorder %s21, 1
    %p227 = por %p225, %p226
    %p228 = scmp.ne.s32.totalorder %s217, %s218
    %p229 = scmp.eq.s32.totalorder %s21, 0
    %p230 = por %p228, %p229
    %p231 = scmp.ne.s32.totalorder %s217, %s218
    %p232 = scmp.eq.s32.totalorder %s22, 1
    %p233 = por %p231, %p232
    %p235 = scmp.ne.s32.totalorder %s218, %s234
    %p236 = scmp.eq.s32.totalorder %s22, 0
    %p237 = por %p235, %p236
    %p238 = scmp.le.s32.totalorder 1, %s16
    %p239 = scmp.lt.s32.totalorder %s16, 3
    %p240 = pnand %p238, %p239
    %p241 = pneg %p240
    // Predicated region
    $region9: #{bidaf_forward.18} parent=5 // pred_check
      _
    $region10: #{bidaf_forward.18} parent=5 // pred_check_branch
      %243 = sbr.rel (%p240) target = $region12
    $region11: #{bidaf_forward.18} parent=5 // pred_region
      %s244 = ssub.s32 %s16, 1
      // Predicated region
      $region13: #{bidaf_forward.18} parent=11 // pred_check
        %p245 = pneg %p141
      $region14: #{bidaf_forward.18} parent=11 // pred_check_branch
        %247 = sbr.rel (%p245) target = $region16
      $region15: #{bidaf_forward.18} parent=11 // pred_region
        _
      $region16: #{bidaf_forward.18} parent=11 // pred_fallthru
        _
      // Predicated region
      $region17: #{bidaf_forward.18} parent=11 // pred_check
        %p248 = pneg %p162
      $region18: #{bidaf_forward.18} parent=11 // pred_check_branch
        %250 = sbr.rel (%p248) target = $region20
      $region19: #{bidaf_forward.18} parent=11 // pred_region
        _
      $region20: #{bidaf_forward.18} parent=11 // pred_fallthru
        _
      // Predicated region
      $region21: #{bidaf_forward.18} parent=11 // pred_check
        %p251 = pneg %p183
      $region22: #{bidaf_forward.18} parent=11 // pred_check_branch
        %253 = sbr.rel (%p251) target = $region24
      $region23: #{bidaf_forward.18} parent=11 // pred_region
        _
      $region24: #{bidaf_forward.18} parent=11 // pred_fallthru
        _
      // Predicated region
      $region25: #{bidaf_forward.18} parent=11 // pred_check
        %p254 = pneg %p204
      $region26: #{bidaf_forward.18} parent=11 // pred_check_branch
        %256 = sbr.rel (%p254) target = $region28
      $region27: #{bidaf_forward.18} parent=11 // pred_region
        _
      $region28: #{bidaf_forward.18} parent=11 // pred_fallthru
        _
    $region12: #{bidaf_forward.18} parent=5 // pred_fallthru
      _
    %p257 = scmp.lt.s32.totalorder %s16, 2
    // Predicated region
    $region29: #{bidaf_forward.18} parent=5 // pred_check
      %p258 = pneg %p257
    $region30: #{bidaf_forward.18} parent=5 // pred_check_branch
      %260 = sbr.rel (%p258) target = $region32
    $region31: #{bidaf_forward.18} parent=5 // pred_region
      // Predicated region
      $region33: #{bidaf_forward.18} parent=31 // pred_check
        %p261 = pneg %p36
      $region34: #{bidaf_forward.18} parent=31 // pred_check_branch
        %263 = sbr.rel (%p261) target = $region36
      $region35: #{bidaf_forward.18} parent=31 // pred_region
        %p264 = scmp.lt.s32.totalorder %s16, 1
        %s265 = scalar_select %p264, %s16, 1
        %s266 = smul.addr %s265, 2
        %s267 = smul.addr %s266, 4
        %s268 = scalar_lea.vmem %s0, %s267
      $region36: #{bidaf_forward.18} parent=31 // pred_fallthru
        _
      // Predicated region
      $region37: #{bidaf_forward.18} parent=31 // pred_check
        %p269 = pneg %p62
      $region38: #{bidaf_forward.18} parent=31 // pred_check_branch
        %271 = sbr.rel (%p269) target = $region40
      $region39: #{bidaf_forward.18} parent=31 // pred_region
        %p272 = scmp.lt.s32.totalorder %s16, 1
        %s273 = scalar_select %p272, %s16, 1
        %s274 = smul.addr %s273, 4
        %s275 = scalar_lea.vmem %s1, %s274
      $region40: #{bidaf_forward.18} parent=31 // pred_fallthru
        _
      // Predicated region
      $region41: #{bidaf_forward.18} parent=31 // pred_check
        %p276 = pneg %p88
      $region42: #{bidaf_forward.18} parent=31 // pred_check_branch
        %278 = sbr.rel (%p276) target = $region44
      $region43: #{bidaf_forward.18} parent=31 // pred_region
        %p279 = scmp.lt.s32.totalorder %s16, 1
        %s280 = scalar_select %p279, %s16, 1
        %s281 = smul.addr %s280, 2
        %s282 = smul.addr %s281, 8
        %s283 = scalar_lea.vmem %s2, %s282
      $region44: #{bidaf_forward.18} parent=31 // pred_fallthru
        _
      // Predicated region
      $region45: #{bidaf_forward.18} parent=31 // pred_check
        %p284 = pneg %p114
      $region46: #{bidaf_forward.18} parent=31 // pred_check_branch
        %286 = sbr.rel (%p284) target = $region48
      $region47: #{bidaf_forward.18} parent=31 // pred_region
        %p287 = scmp.lt.s32.totalorder %s16, 1
        %s288 = scalar_select %p287, %s16, 1
        %s289 = scalar_lea.vmem %s3, %s288
      $region48: #{bidaf_forward.18} parent=31 // pred_fallthru
        _
    $region32: #{bidaf_forward.18} parent=5 // pred_fallthru
      _
    %p290 = scmp.le.s32.totalorder 1, %s16
    %p291 = scmp.lt.s32.totalorder %s16, 3
    %p292 = pnand %p290, %p291
    %p293 = pneg %p292
    // Predicated region
    $region49: #{bidaf_forward.18} parent=5 // pred_check
      _
    $region50: #{bidaf_forward.18} parent=5 // pred_check_branch
      %295 = sbr.rel (%p292) target = $region52
    $region51: #{bidaf_forward.18} parent=5 // pred_region
      %s296 = ssub.s32 %s16, 1
      %p297 = scmp.lt.s32.totalorder %s21, 1
      %s298 = scalar_select %p297, %s21, 1
      %s299 = smul.addr %s298, 2
      %s300 = smul.addr %s299, 4
      %s301 = scalar_lea.vmem %s0, %s300
      %p302 = pneg %p42
      %p303 = pneg %p39
      %p304 = scmp.lt.s32.totalorder %s21, 1
      %s305 = scalar_select %p304, %s21, 1
      %s306 = smul.addr %s305, 4
      %s307 = scalar_lea.vmem %s1, %s306
      %p308 = pneg %p68
      %p309 = pneg %p65
      %p310 = scmp.lt.s32.totalorder %s21, 1
      %s311 = scalar_select %p310, %s21, 1
      %s312 = smul.addr %s311, 2
      %s313 = smul.addr %s312, 8
      %s314 = scalar_lea.vmem %s2, %s313
      %p315 = pneg %p94
      %p316 = pneg %p91
      %p317 = scmp.lt.s32.totalorder %s21, 1
      %s318 = scalar_select %p317, %s21, 1
      %s319 = scalar_lea.vmem %s3, %s318
      %p320 = pneg %p120
      %p321 = pneg %p117
      %p322 = pneg %p141
      %p323 = pneg %p138
      %p324 = pneg %p162
      %p325 = pneg %p159
      %p326 = pneg %p183
      %p327 = pneg %p180
      %p328 = pneg %p204
      %p329 = pneg %p201
      %p330 = pneg %p230
      %p331 = pneg %p227
      %p332 = scmp.lt.s32.totalorder %s21, 1
      %s333 = scalar_select %p332, %s21, 1
      %s334 = smul.addr %s333, 2
      %s335 = smul.addr %s334, 4
      %s336 = scalar_lea.vmem %s8, %s335
      %p337 = scmp.lt.s32.totalorder %s21, 1
      %s338 = scalar_select %p337, %s21, 1
      %s339 = smul.addr %s338, 2
      %s340 = smul.addr %s339, 4
      %s341 = scalar_lea.vmem %s0, %s340
      %p342 = scmp.lt.s32.totalorder %s21, 1
      %s343 = scalar_select %p342, %s21, 1
      %s344 = smul.addr %s343, 4
      %s345 = scalar_lea.vmem %s1, %s344
      %p346 = scmp.lt.s32.totalorder %s21, 1
      %s347 = scalar_select %p346, %s21, 1
      %s348 = smul.addr %s347, 2
      %s349 = smul.addr %s348, 8
      %s350 = scalar_lea.vmem %s2, %s349
      %p351 = scmp.lt.s32.totalorder %s21, 1
      %s352 = scalar_select %p351, %s21, 1
      %s353 = scalar_lea.vmem %s3, %s352
      %p354 = scmp.lt.s32.totalorder %s21, 1
      %s355 = scalar_select %p354, %s21, 1
      %s356 = smul.addr %s355, 2
      %s357 = smul.addr %s356, 4
      %s358 = scalar_lea.vmem %s8, %s357
      %v360 = vld [vmem:[%s341] sm:$0xf]
      %v361 = vld [vmem:[%s341 + $0x4] sm:$0x3]
      %v362 = vunpack.c.l.bf16 %v360
      %v363 = vunpack.c.l.bf16 %v361
      %v364 = vld [vmem:[%s345] sm:$0xf]
      %v365 = vld [vmem:[%s350] sm:$0xff]
      %v366 = vld [vmem:[%s350 + $0x8] sm:$0xf]
      %v367 = vld [vmem:[%s353] sm:$0x1]
      %v368 = vld [vmem:[%s4] sm:$0x1]
      %v370 = vperm.slane %v368, 0
      %v372 = vmul.f32 %v362, %v370
      %v373 = vmul.f32 %v363, %v370
      %vm374 = vcmask 261120
      %v375 = vsel %vm374, %v372, 0.0
      %376 = vadd.xlane.f32.xlu0 %v375
      %v377 = vpop.xlane.xlu0 %376
      %vm378 = vcmask 257024
      %v379 = vsel %vm378, %v373, 0.0
      %380 = vadd.xlane.f32.xlu0 %v379
      %v381 = vpop.xlane.xlu0 %380
      %v382 = vld [vmem:[%s6] sm:$0x1]
      %v384 = vperm.slane %v382, 0
      %v386 = vmul.f32 %v362, %v384
      %v387 = vmul.f32 %v363, %v384
      %v388 = vld [vmem:[%s5] sm:$0x1]
      %v390 = vperm.slane %v388, 0
      %v392 = vadd.f32 %v386, %v390
      %v393 = vadd.f32 %v387, %v390
      %v394 = vpack.c.bf16 %v393, %v392
      %v396 = vsel %vm374, %v394, 0
      %v399 = vsel %vm374, %v364, 0
      %401 = vmatpush.bf16.xpose.msra.mxu0 0
      %402 = vmatpush.bf16.xpose.msra.mxu0 0
      %403 = vmatpush.bf16.xpose.msra.mxu0 0
      %404 = vmatpush.bf16.xpose.msra.mxu0 0
      %405 = vmatpush.bf16.xpose.msra.mxu0 0
      %406 = vmatpush.bf16.xpose.msra.mxu0 0
      %407 = vmatpush.bf16.xpose.msra.mxu0 0
      %408 = vmatpush.bf16.xpose.msra.mxu0 %v399
      %409 = vmatmul.bf16.gmra.mxu0 %v396
      %v410 = vpop.f32.mrf.mxu0
      %v411 = vadd.f32 %v377, %v410
      %v412 = vpop.f32.mrf.mxu0
      %v413 = vadd.f32 %v381, %v412
      %414 = vdwg.mxu0
      %v415 = vld [vmem:[#allocation2] sm:$0x1]
      %v417 = vperm.slane %v415, 0
      %418 = vset.pattern.permute.xlu0 0
      %419 = vperm.xlu0 %418, %v417
      %v420 = vpop.permute.xlu0 %419
      %v422 = vadd.f32 %v411, %v420
      %v423 = vadd.f32 %v413, %v420
      %v425 = vperm.slane %v367, 0
      %v427 = vmul.f32 %v425, %v422
      %v428 = vmul.f32 %v425, %v423
      %v429 = vsub.f32 1.0, %v367
      %v430 = vmul.f32 %v429, -1e+30
      %v432 = vperm.slane %v430, 0
      %v434 = vadd.f32 %v427, %v432
      %v435 = vadd.f32 %v428, %v432
      %vm436 = vcmask 64512
      %v437 = vsel %vm436, %v434, -inf
      %438 = vmax.xlane.f32.xlu0 %v437
      %v439 = vpop.xlane.xlu0 %438
      %vm440 = vcmask 60416
      %v441 = vsel %vm440, %v435, -inf
      %442 = vmax.xlane.f32.xlu0 %v441
      %v443 = vpop.xlane.xlu0 %442
      %v444 = vsub.f32 %v434, %v439
      %v445 = vsub.f32 %v435, %v443
      %v446 = vmul.f32 %v444, 1.442695
      %v447 = vpow.pop %v446
      %v448 = vmul.f32 %v445, 1.442695
      %v449 = vpow.pop %v448
      %v450 = vsel %vm436, %v447, 0.0
      %451 = vadd.xlane.f32.xlu0 %v450
      %v452 = vpop.xlane.xlu0 %451
      %v453 = vsel %vm440, %v449, 0.0
      %454 = vadd.xlane.f32.xlu0 %v453
      %v455 = vpop.xlane.xlu0 %454
      %v456 = vrcp.pop %v452
      %v457 = vrcp.pop %v455
      %v458 = vmul.f32 %v447, %v456
      %v459 = vmul.f32 %v449, %v457
      %461 = vset.pattern.permute.xlu0 0
      %462 = vperm.xlu0 %461, %v365
      %v463 = vpop.permute.xlu0 %462
      %466 = vset.pattern.permute.xlu0 0
      %467 = vperm.xlu0 %466, %v366
      %v468 = vpop.permute.xlu0 %467
      %v470 = vmul.f32 %v463, %v422
      %v471 = vmul.f32 %v468, %v423
      %v472 = vsub.f32 1.0, %v365
      %v473 = vsub.f32 1.0, %v366
      %v474 = vmul.f32 %v472, -1e+30
      %v475 = vmul.f32 %v473, -1e+30
      %477 = vset.pattern.permute.xlu0 0
      %478 = vperm.xlu0 %477, %v474
      %v479 = vpop.permute.xlu0 %478
      %482 = vset.pattern.permute.xlu0 0
      %483 = vperm.xlu0 %482, %v475
      %v484 = vpop.permute.xlu0 %483
      %v486 = vadd.f32 %v470, %v479
      %v487 = vadd.f32 %v471, %v484
      %v488 = vsel %vm436, %v486, -inf
      %v489 = vsel %vm440, %v487, -inf
      %v490 = vmax.f32 %v488, %v489
      %v491 = vrot.slane %v490, 4
      %v492 = vmax.f32 %v490, %v491
      %v493 = vrot.slane %v492, 2
      %v494 = vmax.f32 %v492, %v493
      %v495 = vrot.slane %v494, 1
      %v496 = vmax.f32 %v494, %v495
      %v497 = vsub.f32 %v486, %v496
      %v498 = vsub.f32 %v487, %v496
      %v499 = vmul.f32 %v497, 1.442695
      %v500 = vpow.pop %v499
      %v501 = vmul.f32 %v498, 1.442695
      %v502 = vpow.pop %v501
      %v503 = vsel %vm436, %v500, 0.0
      %v504 = vsel %vm440, %v502, 0.0
      %v505 = vadd.f32 %v503, %v504
      %v506 = vrot.slane %v505, 4
      %v507 = vadd.f32 %v505, %v506
      %v508 = vrot.slane %v507, 2
      %v509 = vadd.f32 %v507, %v508
      %v510 = vrot.slane %v509, 1
      %v511 = vadd.f32 %v509, %v510
      %v512 = vrcp.pop %v511
      %v513 = vmul.f32 %v500, %v512
      %v514 = vmul.f32 %v502, %v512
      %v515 = vpack.c.bf16 %v459, %v458
      %v517 = vsel %vm436, %v515, 0
      %vm519 = vcmask 1043456
      %v520 = vsel %vm519, %v364, 0
      %522 = vmatpush.bf16.msra.mxu0 0
      %523 = vmatpush.bf16.msra.mxu0 0
      %524 = vmatpush.bf16.msra.mxu0 0
      %525 = vmatpush.bf16.msra.mxu0 0
      %526 = vmatpush.bf16.msra.mxu0 0
      %527 = vmatpush.bf16.msra.mxu0 0
      %528 = vmatpush.bf16.msra.mxu0 0
      %529 = vmatpush.bf16.msra.mxu0 %v520
      %530 = vmatmul.bf16.gmra.mxu0 %v517
      %v531 = vpop.f32.mrf.mxu0
      %v532 = vadd.f32 0.0, %v531
      %v533 = vpop.f32.mrf.mxu0
      %v534 = vadd.f32 0.0, %v533
      %535 = vdwg.mxu0
      %v536 = vpack.c.bf16 %v514, %v513
      %537 = vxpose.xlu0.c.b16.start [1/8] %v536, 128
      %538 = vxpose.xlu0.c.b16.cont [2/8] 0, 128
      %539 = vxpose.xlu0.c.b16.cont [3/8] 0, 128
      %540 = vxpose.xlu0.c.b16.cont [4/8] 0, 128
      %541 = vxpose.xlu0.c.b16.cont [5/8] 0, 128
      %542 = vxpose.xlu0.c.b16.cont [6/8] 0, 128
      %543 = vxpose.xlu0.c.b16.cont [7/8] 0, 128
      %544 = vxpose.xlu0.c.b16.end [8/8] 0, 128
      %v545 = vpop.trf.xlu0
      %v546 = vpop.trf.xlu0
      %v547 = vpop.trf.xlu0
      %v548 = vpop.trf.xlu0
      %v549 = vpop.trf.xlu0
      %v550 = vpop.trf.xlu0
      %v551 = vpop.trf.xlu0
      %v552 = vpop.trf.xlu0
      %v555 = vunpack.c.l.b16 %v360
      %v556 = vunpack.c.l.b16 %v361
      %v557 = vpack.c.b16 %v556, %v555
      %vm558 = vcmask 97280
      %v560 = vsel %vm558, %v545, 0
      %vm562 = vcmask 1045504
      %v564 = vsel %vm562, %v557, 0
      %566 = vmatpush.bf16.msra.mxu0 0
      %567 = vmatpush.bf16.msra.mxu0 0
      %568 = vmatpush.bf16.msra.mxu0 0
      %569 = vmatpush.bf16.msra.mxu0 0
      %570 = vmatpush.bf16.msra.mxu0 0
      %571 = vmatpush.bf16.msra.mxu0 0
      %572 = vmatpush.bf16.msra.mxu0 0
      %573 = vmatpush.bf16.msra.mxu0 %v564
      %574 = vmatmul.bf16.gmra.mxu0 %v560
      %v575 = vpop.f32.mrf.mxu0
      %v576 = vadd.f32 0.0, %v575
      %v577 = vpop.f32.mrf.mxu0
      %578 = vdwg.mxu0
      %v579 = vpack.c.bf16 %v576, %v576
      %v581 = vsel %vm519, %v579, 0
      %583 = vmatpush.bf16.msra.mxu0 0
      %584 = vmatpush.bf16.msra.mxu0 0
      %585 = vmatpush.bf16.msra.mxu0 0
      %586 = vmatpush.bf16.msra.mxu0 0
      %587 = vmatpush.bf16.msra.mxu0 0
      %588 = vmatpush.bf16.msra.mxu0 0
      %589 = vmatpush.bf16.msra.mxu0 0
      %590 = vmatpush.bf16.msra.mxu0 %v581
      %591 = vmatmul.bf16.gmra.mxu0 %v517
      %v592 = vpop.f32.mrf.mxu0
      %v593 = vadd.f32 0.0, %v592
      %v594 = vpop.f32.mrf.mxu0
      %v595 = vadd.f32 0.0, %v594
      %596 = vdwg.mxu0
      %597 = vst.msk [vmem:[%s358] sm:$0xf] %vm378, %v360
      %vm598 = vcmask 254976
      %599 = vst.msk [vmem:[%s358 + $0x4] sm:$0x3] %vm598, %v361
      %v600 = vpack.c.bf16 %v532, %v532
      %v601 = vpack.c.bf16 %v534, %v534
      %604 = vrot.lane.b32.xlu0 %v600, 32
      %v605 = vpop.permute.xlu0 %604
      %606 = vrot.lane.b32.xlu0 %v601, 32
      %v607 = vpop.permute.xlu0 %606
      %vm610 = vcmask 519424
      %611 = vst.msk [vmem:[%s358] sm:$0xf] %vm610, %v605
      %vm612 = vcmask 517376
      %613 = vst.msk [vmem:[%s358 + $0x4] sm:$0x3] %vm612, %v607
      %v614 = vmul.f32 %v362, %v532
      %v615 = vmul.f32 %v363, %v534
      %v616 = vpack.c.bf16 %v614, %v614
      %v617 = vpack.c.bf16 %v615, %v615
      %620 = vrot.lane.b32.xlu0 %v616, 64
      %v621 = vpop.permute.xlu0 %620
      %622 = vrot.lane.b32.xlu0 %v617, 64
      %v623 = vpop.permute.xlu0 %622
      %vm626 = vcmask 781824
      %627 = vst.msk [vmem:[%s358] sm:$0xf] %vm626, %v621
      %vm628 = vcmask 779776
      %629 = vst.msk [vmem:[%s358 + $0x4] sm:$0x3] %vm628, %v623
      %v630 = vmul.f32 %v362, %v593
      %v631 = vmul.f32 %v363, %v595
      %v632 = vpack.c.bf16 %v630, %v630
      %v633 = vpack.c.bf16 %v631, %v631
      %636 = vrot.lane.b32.xlu0 %v632, 96
      %v637 = vpop.permute.xlu0 %636
      %638 = vrot.lane.b32.xlu0 %v633, 96
      %v639 = vpop.permute.xlu0 %638
      %vm642 = vcmask 1044224
      %643 = vst.msk [vmem:[%s358] sm:$0xf] %vm642, %v637
      %vm644 = vcmask 1042176
      %645 = vst.msk [vmem:[%s358 + $0x4] sm:$0x3] %vm644, %v639
      %p646 = scmp.lt.s32.totalorder %s21, 1
      %s647 = scalar_select %p646, %s21, 1
      %s648 = smul.addr %s647, 2
      %s649 = smul.addr %s648, 4
      %s650 = scalar_lea.vmem %s8, %s649
      // Predicated region
      $region53: #{bidaf_forward.18} parent=51 // pred_check
        %p651 = pneg %p227
      $region54: #{bidaf_forward.18} parent=51 // pred_check_branch
        %653 = sbr.rel (%p651) target = $region56
      $region55: #{bidaf_forward.18} parent=51 // pred_region
        _
      $region56: #{bidaf_forward.18} parent=51 // pred_fallthru
        _
    $region52: #{bidaf_forward.18} parent=5 // pred_fallthru
      _
    %p654 = scmp.le.s32.totalorder 2, %s16
    // Predicated region
    $region57: #{bidaf_forward.18} parent=5 // pred_check
      %p655 = pneg %p654
    $region58: #{bidaf_forward.18} parent=5 // pred_check_branch
      %657 = sbr.rel (%p655) target = $region60
    $region59: #{bidaf_forward.18} parent=5 // pred_region
      %s658 = ssub.s32 %s16, 2
      // Predicated region
      $region61: #{bidaf_forward.18} parent=59 // pred_check
        %p659 = pneg %p233
      $region62: #{bidaf_forward.18} parent=59 // pred_check_branch
        %661 = sbr.rel (%p659) target = $region64
      $region63: #{bidaf_forward.18} parent=59 // pred_region
        %p662 = scmp.lt.s32.totalorder %s22, 1
        %s663 = scalar_select %p662, %s22, 1
        %s664 = smul.addr %s663, 2
        %s665 = smul.addr %s664, 4
        %s666 = scalar_lea.vmem %s8, %s665
      $region64: #{bidaf_forward.18} parent=59 // pred_fallthru
        _
    $region60: #{bidaf_forward.18} parent=5 // pred_fallthru
      _
  $region6: #{bidaf_forward.18} parent=0 // loop_footer
    %s20 = sadd.s32 1, %s16
  $region7: #{bidaf_forward.18} parent=0 // loop_footer_branch
    %15 = sbr.rel target = $region3
  $region8: #{bidaf_forward.18} parent=0 // loop_exit
    _

// kernel: bidaf_forward.19
$region0: #{bidaf_forward.19}
  #allocation0 [shape = 'u32[]', space=smem, size = 0x4, offset = 0x4, fixed_abs, tag = 'smem constant byte address 0x4 - core index']
  #allocation1 [shape = 'u32[72,128]{1,0:T(1,128)}', space=vmem, size = 0x9000, scoped, tag = 'internal scratch']
  %s0 = inlined_call_operand.vmem [shape: bf16[24,128], index: 0, kind: input, shape index: {}]
  %s1 = inlined_call_operand.vmem [shape: bf16[128,128], index: 1, kind: input, shape index: {}]
  %s2 = inlined_call_operand.vmem [shape: f32[1,128], index: 2, kind: input, shape index: {}]
  %s3 = inlined_call_operand.vmem [shape: f32[24,128], index: 3, kind: output, shape index: {}]
  %s4 = sld [smem:[#allocation0]]
  $region22: #{bidaf_forward.19} parent=0
    _
  %s6 = ssub.s32 1, %s4
  %s7 = scalar_select 0, %s6, %s4
  // Predicated region
  $region2: #{bidaf_forward.19} parent=0 // pred_check
    _
  $region3: #{bidaf_forward.19} parent=0 // pred_check_branch
    %9 = sbr.rel (0) target = $region5
  $region4: #{bidaf_forward.19} parent=0 // pred_region
    _
  $region5: #{bidaf_forward.19} parent=0 // pred_fallthru
    _
  // Predicated region
  $region6: #{bidaf_forward.19} parent=0 // pred_check
    _
  $region7: #{bidaf_forward.19} parent=0 // pred_check_branch
    %11 = sbr.rel (0) target = $region9
  $region8: #{bidaf_forward.19} parent=0 // pred_region
    _
  $region9: #{bidaf_forward.19} parent=0 // pred_fallthru
    _
  // Predicated region
  $region10: #{bidaf_forward.19} parent=0 // pred_check
    _
  $region11: #{bidaf_forward.19} parent=0 // pred_check_branch
    %13 = sbr.rel (0) target = $region13
  $region12: #{bidaf_forward.19} parent=0 // pred_region
    _
  $region13: #{bidaf_forward.19} parent=0 // pred_fallthru
    _
  %v14 = vld [vmem:[%s0] sm:$0xf]
  %v15 = vld [vmem:[%s0 + $0x4] sm:$0xf]
  %v16 = vld [vmem:[%s0 + $0x8] sm:$0xf]
  %v17 = vld [vmem:[%s1] sm:$0xf]
  %v18 = vld [vmem:[%s1 + $0x4] sm:$0xf]
  %v19 = vld [vmem:[%s1 + $0x8] sm:$0xf]
  %v20 = vld [vmem:[%s1 + $0xc] sm:$0xf]
  %v21 = vld [vmem:[%s1 + $0x10] sm:$0xf]
  %v22 = vld [vmem:[%s1 + $0x14] sm:$0xf]
  %v23 = vld [vmem:[%s1 + $0x18] sm:$0xf]
  %v24 = vld [vmem:[%s1 + $0x1c] sm:$0xf]
  %v25 = vld [vmem:[%s1 + $0x20] sm:$0xf]
  %v26 = vld [vmem:[%s1 + $0x24] sm:$0xf]
  %v27 = vld [vmem:[%s1 + $0x28] sm:$0xf]
  %v28 = vld [vmem:[%s1 + $0x2c] sm:$0xf]
  %v29 = vld [vmem:[%s1 + $0x30] sm:$0xf]
  %v30 = vld [vmem:[%s1 + $0x34] sm:$0xf]
  %v31 = vld [vmem:[%s1 + $0x38] sm:$0xf]
  %v32 = vld [vmem:[%s1 + $0x3c] sm:$0xf]
  %v33 = vld [vmem:[%s2] sm:$0x1]
  %v35 = vperm.slane %v33, 0
  %v40 = vunpack.c.l.b16 %v14
  %v41 = vunpack.c.l.b16 %v15
  %v42 = vunpack.c.l.b16 %v16
  %v43 = vpack.c.b16 %v41, %v40
  %v44 = vpack.c.b16 %v42, %v42
  %v63 = vunpack.c.l.b16 %v17
  %v64 = vunpack.c.l.b16 %v18
  %v65 = vunpack.c.l.b16 %v19
  %v66 = vunpack.c.l.b16 %v20
  %v67 = vunpack.c.l.b16 %v21
  %v68 = vunpack.c.l.b16 %v22
  %v69 = vunpack.c.l.b16 %v23
  %v70 = vunpack.c.l.b16 %v24
  %v71 = vunpack.c.l.b16 %v25
  %v72 = vunpack.c.l.b16 %v26
  %v73 = vunpack.c.l.b16 %v27
  %v74 = vunpack.c.l.b16 %v28
  %v75 = vunpack.c.l.b16 %v29
  %v76 = vunpack.c.l.b16 %v30
  %v77 = vunpack.c.l.b16 %v31
  %v78 = vunpack.c.l.b16 %v32
  %v79 = vpack.c.b16 %v64, %v63
  %v80 = vpack.c.b16 %v66, %v65
  %v81 = vpack.c.b16 %v68, %v67
  %v82 = vpack.c.b16 %v70, %v69
  %v83 = vpack.c.b16 %v72, %v71
  %v84 = vpack.c.b16 %v74, %v73
  %v85 = vpack.c.b16 %v76, %v75
  %v86 = vpack.c.b16 %v78, %v77
  %95 = vmatpush.bf16.msra.mxu0 %v86
  %96 = vmatpush.bf16.msra.mxu0 %v85
  %97 = vmatpush.bf16.msra.mxu0 %v84
  %98 = vmatpush.bf16.msra.mxu0 %v83
  %99 = vmatpush.bf16.msra.mxu0 %v82
  %100 = vmatpush.bf16.msra.mxu0 %v81
  %101 = vmatpush.bf16.msra.mxu0 %v80
  %102 = vmatpush.bf16.msra.mxu0 %v79
  %103 = vmatmul.bf16.gmra.mxu0 %v43
  %v104 = vpop.f32.mrf.mxu0
  %v105 = vadd.f32 %v35, %v104
  %v106 = vpop.f32.mrf.mxu0
  %v107 = vadd.f32 %v35, %v106
  %108 = vmatmul.bf16.gmra.mxu0 %v44
  %v109 = vpop.f32.mrf.mxu0
  %v110 = vadd.f32 %v35, %v109
  %v111 = vpop.f32.mrf.mxu0
  %112 = vdwg.mxu0
  %113 = vst [vmem:[%s3] sm:$0xff] %v105
  %114 = vst [vmem:[%s3 + $0x8] sm:$0xff] %v107
  %115 = vst [vmem:[%s3 + $0x10] sm:$0xff] %v110
  // Predicated region
  $region14: #{bidaf_forward.19} parent=0 // pred_check
    _
  $region15: #{bidaf_forward.19} parent=0 // pred_check_branch
    %117 = sbr.rel (0) target = $region17
  $region16: #{bidaf_forward.19} parent=0 // pred_region
    _
  $region17: #{bidaf_forward.19} parent=0 // pred_fallthru
    _
  // Predicated region
  $region18: #{bidaf_forward.19} parent=0 // pred_check
    _
  $region19: #{bidaf_forward.19} parent=0 // pred_check_branch
    %119 = sbr.rel (0) target = $region21
  $region20: #{bidaf_forward.19} parent=0 // pred_region
    _
  $region21: #{bidaf_forward.19} parent=0 // pred_fallthru
    _

// kernel: bidaf_forward.21
$region0: #{bidaf_forward.21}
  #allocation0 [shape = 'u32[]', space=smem, size = 0x4, offset = 0x4, fixed_abs, tag = 'smem constant byte address 0x4 - core index']
  #allocation1 [shape = 'u32[72,128]{1,0:T(1,128)}', space=vmem, size = 0x9000, scoped, tag = 'internal scratch']
  %s0 = inlined_call_operand.vmem [shape: bf16[24,32], index: 0, kind: input, shape index: {}]
  %s1 = inlined_call_operand.vmem [shape: bf16[32,128], index: 1, kind: input, shape index: {}]
  %s2 = inlined_call_operand.vmem [shape: f32[1,128], index: 2, kind: input, shape index: {}]
  %s3 = inlined_call_operand.vmem [shape: f32[24,128], index: 3, kind: output, shape index: {}]
  %s4 = sld [smem:[#allocation0]]
  $region22: #{bidaf_forward.21} parent=0
    _
  %s6 = ssub.s32 1, %s4
  %s7 = scalar_select 0, %s6, %s4
  // Predicated region
  $region2: #{bidaf_forward.21} parent=0 // pred_check
    _
  $region3: #{bidaf_forward.21} parent=0 // pred_check_branch
    %9 = sbr.rel (0) target = $region5
  $region4: #{bidaf_forward.21} parent=0 // pred_region
    _
  $region5: #{bidaf_forward.21} parent=0 // pred_fallthru
    _
  // Predicated region
  $region6: #{bidaf_forward.21} parent=0 // pred_check
    _
  $region7: #{bidaf_forward.21} parent=0 // pred_check_branch
    %11 = sbr.rel (0) target = $region9
  $region8: #{bidaf_forward.21} parent=0 // pred_region
    _
  $region9: #{bidaf_forward.21} parent=0 // pred_fallthru
    _
  // Predicated region
  $region10: #{bidaf_forward.21} parent=0 // pred_check
    _
  $region11: #{bidaf_forward.21} parent=0 // pred_check_branch
    %13 = sbr.rel (0) target = $region13
  $region12: #{bidaf_forward.21} parent=0 // pred_region
    _
  $region13: #{bidaf_forward.21} parent=0 // pred_fallthru
    _
  %v15 = vld [vmem:[%s0] sm:$0xf]
  %v16 = vld [vmem:[%s0 + $0x4] sm:$0xf]
  %v17 = vld [vmem:[%s0 + $0x8] sm:$0xf]
  %v18 = vld [vmem:[%s1] sm:$0xf]
  %v19 = vld [vmem:[%s1 + $0x4] sm:$0xf]
  %v20 = vld [vmem:[%s1 + $0x8] sm:$0xf]
  %v21 = vld [vmem:[%s1 + $0xc] sm:$0xf]
  %v22 = vld [vmem:[%s2] sm:$0x1]
  %v24 = vperm.slane %v22, 0
  %v29 = vunpack.c.l.b16 %v15
  %v30 = vunpack.c.l.b16 %v16
  %v31 = vunpack.c.l.b16 %v17
  %v32 = vpack.c.b16 %v30, %v29
  %v33 = vpack.c.b16 %v31, %v31
  %v38 = vunpack.c.l.b16 %v18
  %v39 = vunpack.c.l.b16 %v19
  %v40 = vunpack.c.l.b16 %v20
  %v41 = vunpack.c.l.b16 %v21
  %v42 = vpack.c.b16 %v39, %v38
  %v43 = vpack.c.b16 %v41, %v40
  %vm46 = vcmask 261120
  %v48 = vsel %vm46, %v32, 0
  %v51 = vsel %vm46, %v33, 0
  %53 = vmatpush.bf16.msra.mxu0 0
  %54 = vmatpush.bf16.msra.mxu0 0
  %55 = vmatpush.bf16.msra.mxu0 0
  %56 = vmatpush.bf16.msra.mxu0 0
  %57 = vmatpush.bf16.msra.mxu0 0
  %58 = vmatpush.bf16.msra.mxu0 0
  %59 = vmatpush.bf16.msra.mxu0 %v43
  %60 = vmatpush.bf16.msra.mxu0 %v42
  %61 = vmatmul.bf16.gmra.mxu0 %v48
  %v62 = vpop.f32.mrf.mxu0
  %v63 = vadd.f32 %v24, %v62
  %v64 = vpop.f32.mrf.mxu0
  %v65 = vadd.f32 %v24, %v64
  %66 = vmatmul.bf16.gmra.mxu0 %v51
  %v67 = vpop.f32.mrf.mxu0
  %v68 = vadd.f32 %v24, %v67
  %v69 = vpop.f32.mrf.mxu0
  %70 = vdwg.mxu0
  %71 = vst [vmem:[%s3] sm:$0xff] %v63
  %72 = vst [vmem:[%s3 + $0x8] sm:$0xff] %v65
  %73 = vst [vmem:[%s3 + $0x10] sm:$0xff] %v68
  // Predicated region
  $region14: #{bidaf_forward.21} parent=0 // pred_check
    _
  $region15: #{bidaf_forward.21} parent=0 // pred_check_branch
    %75 = sbr.rel (0) target = $region17
  $region16: #{bidaf_forward.21} parent=0 // pred_region
    _
  $region17: #{bidaf_forward.21} parent=0 // pred_fallthru
    _
  // Predicated region
  $region18: #{bidaf_forward.21} parent=0 // pred_check
    _
  $region19: #{bidaf_forward.21} parent=0 // pred_check_branch
    %77 = sbr.rel (0) target = $region21
  $region20: #{bidaf_forward.21} parent=0 // pred_region
    _
  $region21: #{bidaf_forward.21} parent=0 // pred_fallthru
    _

// kernel: bidaf_forward.25
$region0: #{bidaf_forward.25}
  #allocation0 [shape = 'u32[]', space=smem, size = 0x4, offset = 0x4, fixed_abs, tag = 'smem constant byte address 0x4 - core index']
  #allocation1 [shape = 'u32[72,128]{1,0:T(1,128)}', space=vmem, size = 0x9000, scoped, tag = 'internal scratch']
  %s0 = inlined_call_operand.vmem [shape: bf16[24,128], index: 0, kind: input, shape index: {}]
  %s1 = inlined_call_operand.vmem [shape: bf16[24,32], index: 1, kind: input, shape index: {}]
  %s2 = inlined_call_operand.vmem [shape: bf16[24,32], index: 2, kind: input, shape index: {}]
  %s3 = inlined_call_operand.vmem [shape: f32[1,128], index: 3, kind: input, shape index: {}]
  %s4 = inlined_call_operand.vmem [shape: f32[1,32], index: 4, kind: input, shape index: {}]
  %s5 = inlined_call_operand.vmem [shape: f32[1,128], index: 5, kind: input, shape index: {}]
  %s6 = inlined_call_operand.vmem [shape: f32[1,32], index: 6, kind: input, shape index: {}]
  %s7 = inlined_call_operand.vmem [shape: f32[1,2], index: 7, kind: input, shape index: {}]
  %s8 = inlined_call_operand.vmem [shape: f32[24,2], index: 8, kind: output, shape index: {}]
  %s9 = sld [smem:[#allocation0]]
  $region42: #{bidaf_forward.25} parent=0
    _
  %s11 = ssub.s32 1, %s9
  %s12 = scalar_select 0, %s11, %s9
  // Predicated region
  $region2: #{bidaf_forward.25} parent=0 // pred_check
    _
  $region3: #{bidaf_forward.25} parent=0 // pred_check_branch
    %14 = sbr.rel (0) target = $region5
  $region4: #{bidaf_forward.25} parent=0 // pred_region
    _
  $region5: #{bidaf_forward.25} parent=0 // pred_fallthru
    _
  // Predicated region
  $region6: #{bidaf_forward.25} parent=0 // pred_check
    _
  $region7: #{bidaf_forward.25} parent=0 // pred_check_branch
    %16 = sbr.rel (0) target = $region9
  $region8: #{bidaf_forward.25} parent=0 // pred_region
    _
  $region9: #{bidaf_forward.25} parent=0 // pred_fallthru
    _
  // Predicated region
  $region10: #{bidaf_forward.25} parent=0 // pred_check
    _
  $region11: #{bidaf_forward.25} parent=0 // pred_check_branch
    %18 = sbr.rel (0) target = $region13
  $region12: #{bidaf_forward.25} parent=0 // pred_region
    _
  $region13: #{bidaf_forward.25} parent=0 // pred_fallthru
    _
  // Predicated region
  $region14: #{bidaf_forward.25} parent=0 // pred_check
    _
  $region15: #{bidaf_forward.25} parent=0 // pred_check_branch
    %20 = sbr.rel (0) target = $region17
  $region16: #{bidaf_forward.25} parent=0 // pred_region
    _
  $region17: #{bidaf_forward.25} parent=0 // pred_fallthru
    _
  // Predicated region
  $region18: #{bidaf_forward.25} parent=0 // pred_check
    _
  $region19: #{bidaf_forward.25} parent=0 // pred_check_branch
    %22 = sbr.rel (0) target = $region21
  $region20: #{bidaf_forward.25} parent=0 // pred_region
    _
  $region21: #{bidaf_forward.25} parent=0 // pred_fallthru
    _
  // Predicated region
  $region22: #{bidaf_forward.25} parent=0 // pred_check
    _
  $region23: #{bidaf_forward.25} parent=0 // pred_check_branch
    %24 = sbr.rel (0) target = $region25
  $region24: #{bidaf_forward.25} parent=0 // pred_region
    _
  $region25: #{bidaf_forward.25} parent=0 // pred_fallthru
    _
  // Predicated region
  $region26: #{bidaf_forward.25} parent=0 // pred_check
    _
  $region27: #{bidaf_forward.25} parent=0 // pred_check_branch
    %26 = sbr.rel (0) target = $region29
  $region28: #{bidaf_forward.25} parent=0 // pred_region
    _
  $region29: #{bidaf_forward.25} parent=0 // pred_fallthru
    _
  // Predicated region
  $region30: #{bidaf_forward.25} parent=0 // pred_check
    _
  $region31: #{bidaf_forward.25} parent=0 // pred_check_branch
    %28 = sbr.rel (0) target = $region33
  $region32: #{bidaf_forward.25} parent=0 // pred_region
    _
  $region33: #{bidaf_forward.25} parent=0 // pred_fallthru
    _
  %v29 = vld [vmem:[%s0] sm:$0xf]
  %v30 = vld [vmem:[%s0 + $0x4] sm:$0xf]
  %v31 = vld [vmem:[%s0 + $0x8] sm:$0xf]
  %v32 = vunpack.c.l.bf16 %v29
  %v33 = vunpack.c.l.bf16 %v30
  %v34 = vunpack.c.l.bf16 %v31
  %v35 = vld [vmem:[%s1] sm:$0xf]
  %v36 = vld [vmem:[%s1 + $0x4] sm:$0xf]
  %v37 = vld [vmem:[%s1 + $0x8] sm:$0xf]
  %v38 = vunpack.c.l.bf16 %v35
  %v39 = vunpack.c.l.bf16 %v36
  %v40 = vunpack.c.l.bf16 %v37
  %v41 = vld [vmem:[%s2] sm:$0xf]
  %v42 = vld [vmem:[%s2 + $0x4] sm:$0xf]
  %v43 = vld [vmem:[%s2 + $0x8] sm:$0xf]
  %v44 = vunpack.c.l.bf16 %v41
  %v45 = vunpack.c.l.bf16 %v42
  %v46 = vunpack.c.l.bf16 %v43
  %v47 = vld [vmem:[%s3] sm:$0x1]
  %v49 = vperm.slane %v47, 0
  %v51 = vmul.f32 %v32, %v49
  %v52 = vmul.f32 %v33, %v49
  %v53 = vmul.f32 %v34, %v49
  %54 = vadd.xlane.f32.xlu0 %v51
  %v55 = vpop.xlane.xlu0 %54
  %56 = vadd.xlane.f32.xlu0 %v52
  %v57 = vpop.xlane.xlu0 %56
  %58 = vadd.xlane.f32.xlu0 %v53
  %v59 = vpop.xlane.xlu0 %58
  %v60 = vld [vmem:[%s4] sm:$0x1]
  %v62 = vperm.slane %v60, 0
  %v64 = vmul.f32 %v38, %v62
  %v65 = vmul.f32 %v39, %v62
  %v66 = vmul.f32 %v40, %v62
  %vm67 = vcmask 261120
  %v68 = vsel %vm67, %v64, 0.0
  %69 = vadd.xlane.f32.xlu0 %v68
  %v70 = vpop.xlane.xlu0 %69
  %v71 = vsel %vm67, %v65, 0.0
  %72 = vadd.xlane.f32.xlu0 %v71
  %v73 = vpop.xlane.xlu0 %72
  %v74 = vsel %vm67, %v66, 0.0
  %75 = vadd.xlane.f32.xlu0 %v74
  %v76 = vpop.xlane.xlu0 %75
  %v77 = vadd.f32 %v55, %v70
  %v78 = vadd.f32 %v57, %v73
  %v79 = vadd.f32 %v59, %v76
  %v80 = vld [vmem:[%s5] sm:$0x1]
  %v82 = vperm.slane %v80, 0
  %v84 = vmul.f32 %v32, %v82
  %v85 = vmul.f32 %v33, %v82
  %v86 = vmul.f32 %v34, %v82
  %87 = vadd.xlane.f32.xlu0 %v84
  %v88 = vpop.xlane.xlu0 %87
  %89 = vadd.xlane.f32.xlu0 %v85
  %v90 = vpop.xlane.xlu0 %89
  %91 = vadd.xlane.f32.xlu0 %v86
  %v92 = vpop.xlane.xlu0 %91
  %v93 = vld [vmem:[%s6] sm:$0x1]
  %v95 = vperm.slane %v93, 0
  %v97 = vmul.f32 %v44, %v95
  %v98 = vmul.f32 %v45, %v95
  %v99 = vmul.f32 %v46, %v95
  %v100 = vsel %vm67, %v97, 0.0
  %101 = vadd.xlane.f32.xlu0 %v100
  %v102 = vpop.xlane.xlu0 %101
  %v103 = vsel %vm67, %v98, 0.0
  %104 = vadd.xlane.f32.xlu0 %v103
  %v105 = vpop.xlane.xlu0 %104
  %v106 = vsel %vm67, %v99, 0.0
  %107 = vadd.xlane.f32.xlu0 %v106
  %v108 = vpop.xlane.xlu0 %107
  %v109 = vadd.f32 %v88, %v102
  %v110 = vadd.f32 %v90, %v105
  %v111 = vadd.f32 %v92, %v108
  %vm112 = vcmask 7168
  %v113 = vsel %vm112, %v77, %v109
  %v114 = vsel %vm112, %v78, %v110
  %v115 = vsel %vm112, %v79, %v111
  %v116 = vld [vmem:[%s7] sm:$0x1]
  %v118 = vperm.slane %v116, 0
  %v120 = vadd.f32 %v113, %v118
  %v121 = vadd.f32 %v114, %v118
  %v122 = vadd.f32 %v115, %v118
  %vm123 = vcmask 15360
  %124 = vst.msk [vmem:[%s8] sm:$0xff] %vm123, %v120
  %125 = vst.msk [vmem:[%s8 + $0x8] sm:$0xff] %vm123, %v121
  %126 = vst.msk [vmem:[%s8 + $0x10] sm:$0xff] %vm123, %v122
  // Predicated region
  $region34: #{bidaf_forward.25} parent=0 // pred_check
    _
  $region35: #{bidaf_forward.25} parent=0 // pred_check_branch
    %128 = sbr.rel (0) target = $region37
  $region36: #{bidaf_forward.25} parent=0 // pred_region
    _
  $region37: #{bidaf_forward.25} parent=0 // pred_fallthru
    _
  // Predicated region
  $region38: #{bidaf_forward.25} parent=0 // pred_check
    _
  $region39: #{bidaf_forward.25} parent=0 // pred_check_branch
    %130 = sbr.rel (0) target = $region41
  $region40: #{bidaf_forward.25} parent=0 // pred_region
    _
  $region41: #{bidaf_forward.25} parent=0 // pred_fallthru
    _

</llo_original>
